<compile_context>
chip_gen: v7x
topology: tpu7x:2x2x1
jax: 0.10.0
libtpu: 0.0.40
codegen_flags: <defaults>
</compile_context>

<pallas_src>
import functools

import jax
import jax.numpy as jnp
from jax.experimental import pallas as pl
from jax.experimental.pallas import tpu as pltpu

# ---------------- model config (small, consistent with the module) ----------------
NOISE_SIZE = 16
GEN_BASE = 32          # generator base_channels
GEN_OUT_CH = 3
OUTPUT_SCALE = 16      # generator output / discriminator input spatial size
INPUT_SCALE = 4
DISC_BASE = 8          # discriminator base_channels
DISC_OUT_CH = 1
LEAKY_SLOPE = 0.01     # nn.LeakyReLU default
BN_EPS = 1e-5


# ---------------- Pallas kernels ----------------
def _fused_matmul_bn_act_kernel(*refs, bn, act, slope, eps):
    """matmul (bf16 in, f32 acc) + bias + optional per-block BatchNorm + activation."""
    if bn:
        a_ref, w_ref, bias_ref, gamma_ref, beta_ref, o_ref = refs
    else:
        a_ref, w_ref, bias_ref, o_ref = refs

    acc = jnp.dot(a_ref[...], w_ref[...], preferred_element_type=jnp.float32)
    acc = acc + bias_ref[...]

    if bn:
        # training-mode batch statistics over the rows of this block (= one
        # logical forward's (N, H, W) samples), biased variance like PyTorch.
        mean = jnp.mean(acc, axis=0, keepdims=True)
        cen = acc - mean
        var = jnp.mean(cen * cen, axis=0, keepdims=True)
        acc = cen * jax.lax.rsqrt(var + eps) * gamma_ref[...] + beta_ref[...]

    if act == "relu":
        acc = jnp.maximum(acc, 0.0)
    elif act == "leaky_relu":
        acc = jnp.where(acc >= 0.0, acc, acc * slope)
    elif act == "tanh":
        acc = jnp.tanh(acc)
    o_ref[...] = acc


def _bn_act_kernel(x_ref, gamma_ref, beta_ref, o_ref, *, eps, act, slope):
    """Standalone training-mode BatchNorm + activation on an (M, C) block."""
    x = x_ref[...]
    mean = jnp.mean(x, axis=0, keepdims=True)
    cen = x - mean
    var = jnp.mean(cen * cen, axis=0, keepdims=True)
    y = cen * jax.lax.rsqrt(var + eps) * gamma_ref[...] + beta_ref[...]
    if act == "relu":
        y = jnp.maximum(y, 0.0)
    elif act == "leaky_relu":
        y = jnp.where(y >= 0.0, y, y * slope)
    o_ref[...] = y


# ---------------- Pallas wrappers ----------------
def fused_conv_matmul(a, wm, bias, gamma=None, beta=None, *, bn=False,
                      act="none", groups=1):
    """a:(M,K) patches/rows, wm:(K,C) weights. Returns f32 (M, C).

    Output lane dim is padded to a multiple of 128 inside the kernel and
    sliced back here. With bn=True the grid tiles rows into `groups` blocks,
    one per logical forward, so BN stats are per sub-batch.
    """
    M, K = a.shape
    K2, C = wm.shape
    assert K == K2
    Cp = ((C + 127) // 128) * 128
    pad = Cp - C

    wmp = jnp.pad(wm, ((0, 0), (0, pad))).astype(jnp.bfloat16)
    biasp = jnp.pad(bias.reshape(1, C).astype(jnp.float32), ((0, 0), (0, pad)))

    if bn:
        assert M % groups == 0 and (M // groups) % 8 == 0
        blocks = groups
    else:
        blocks = groups if (groups > 1 and M % groups == 0
                            and (M // groups) % 8 == 0) else 1
    bm = M // blocks

    args = [a.astype(jnp.bfloat16), wmp, biasp]
    in_specs = [pl.BlockSpec((bm, K), lambda i: (i, 0)),
                pl.BlockSpec((K, Cp), lambda i: (0, 0)),
                pl.BlockSpec((1, Cp), lambda i: (0, 0))]
    if bn:
        gp = jnp.pad(gamma.reshape(1, C).astype(jnp.float32), ((0, 0), (0, pad)),
                     constant_values=1.0)
        bp = jnp.pad(beta.reshape(1, C).astype(jnp.float32), ((0, 0), (0, pad)))
        args += [gp, bp]
        in_specs += [pl.BlockSpec((1, Cp), lambda i: (0, 0)),
                     pl.BlockSpec((1, Cp), lambda i: (0, 0))]

    kernel = functools.partial(_fused_matmul_bn_act_kernel, bn=bn, act=act,
                               slope=LEAKY_SLOPE, eps=BN_EPS)
    out = pl.pallas_call(
        kernel,
        grid=(blocks,),
        in_specs=in_specs,
        out_specs=pl.BlockSpec((bm, Cp), lambda i: (i, 0)),
        out_shape=jax.ShapeDtypeStruct((M, Cp), jnp.float32),
        compiler_params=pltpu.CompilerParams(dimension_semantics=("parallel",)),
    )(*args)
    return out[:, :C] if pad else out


def batchnorm_act_rows(x, gamma, beta, *, act, groups):
    """BatchNorm + activation on (M, C) rows; one grid block per sub-batch."""
    M, C = x.shape
    assert M % groups == 0 and (M // groups) % 8 == 0
    bm = M // groups
    kernel = functools.partial(_bn_act_kernel, eps=BN_EPS, act=act, slope=LEAKY_SLOPE)
    return pl.pallas_call(
        kernel,
        grid=(groups,),
        in_specs=[pl.BlockSpec((bm, C), lambda i: (i, 0)),
                  pl.BlockSpec((1, C), lambda i: (0, 0)),
                  pl.BlockSpec((1, C), lambda i: (0, 0))],
        out_specs=pl.BlockSpec((bm, C), lambda i: (i, 0)),
        out_shape=jax.ShapeDtypeStruct((M, C), jnp.float32),
        compiler_params=pltpu.CompilerParams(dimension_semantics=("parallel",)),
    )(x.astype(jnp.float32),
      gamma.reshape(1, C).astype(jnp.float32),
      beta.reshape(1, C).astype(jnp.float32))


# ---------------- conv glue (NHWC im2col in XLA, matmul+BN+act in Pallas) ----------------
def _im2col_nhwc(x, kh, kw, stride):
    # x: (N, H, W, C), already padded. Columns ordered (kh, kw, C).
    N, H, W, C = x.shape
    oh = (H - kh) // stride + 1
    ow = (W - kw) // stride + 1
    cols = []
    for i in range(kh):
        for j in range(kw):
            cols.append(x[:, i:i + stride * oh:stride, j:j + stride * ow:stride, :])
    p = jnp.stack(cols, axis=3)                      # (N, oh, ow, kh*kw, C)
    return p.reshape(N * oh * ow, kh * kw * C), oh, ow


def conv2d_nhwc(x, w, b, *, stride, padding, gamma=None, beta=None, bn=False,
                act="none", groups=1):
    # x: (N, H, W, Cin), w: (Cout, Cin, kh, kw)  (PyTorch Conv2d layout)
    N = x.shape[0]
    Cout, Cin, kh, kw = w.shape
    xp = jnp.pad(x, ((0, 0), (padding, padding), (padding, padding), (0, 0)))
    patches, oh, ow = _im2col_nhwc(xp, kh, kw, stride)
    wm = jnp.transpose(w, (2, 3, 1, 0)).reshape(kh * kw * Cin, Cout)  # (kh,kw,Cin)xCout
    y = fused_conv_matmul(patches, wm, b, gamma, beta, bn=bn, act=act, groups=groups)
    return y.reshape(N, oh, ow, Cout)


def conv_transpose2d_nhwc(x, w, b, *, stride, padding, gamma=None, beta=None,
                          bn=False, act="none", groups=1):
    # x: (N, H, W, Cin), w: (Cin, Cout, kh, kw)  (PyTorch ConvTranspose2d layout)
    N, H, W, C = x.shape
    Cin, Cout, kh, kw = w.shape
    Hd, Wd = (H - 1) * stride + 1, (W - 1) * stride + 1
    xd = jnp.zeros((N, Hd, Wd, C), x.dtype).at[:, ::stride, ::stride, :].set(x)
    w_conv = jnp.transpose(jnp.flip(w, axis=(2, 3)), (1, 0, 2, 3))  # (Cout,Cin,kh,kw)
    return conv2d_nhwc(xd, w_conv, b, stride=1, padding=kh - 1 - padding,
                       gamma=gamma, beta=beta, bn=bn, act=act, groups=groups)


# ---------------- DCGAN generator / discriminator forward (NHWC) ----------------
def noise2feat(p, noise, groups):
    # ConvTranspose2d(k4, s1, p0) on a 1x1 input == plain matmul:
    # out[n, h, w, cout] = sum_cin noise[n, cin] * w[cin, cout, h, w] + b[cout]
    N = noise.shape[0]
    Cin, Cout, kh, kw = p["g0_w"].shape
    wm = jnp.transpose(p["g0_w"], (0, 2, 3, 1)).reshape(Cin, kh * kw * Cout)
    bias_cols = jnp.tile(p["g0_b"], kh * kw)
    y = fused_conv_matmul(noise, wm, bias_cols, bn=False, act="none", groups=1)
    y = y.reshape(N * kh * kw, Cout)                       # rows ordered (n, h, w)
    y = batchnorm_act_rows(y, p["g0_gamma"], p["g0_beta"], act="relu", groups=groups)
    return y.reshape(N, kh, kw, Cout)                      # (N, 4, 4, base)


def generator_forward(p, noise, groups):
    x = noise2feat(p, noise, groups)                                        # 1x1 -> 4x4
    x = conv_transpose2d_nhwc(x, p["g1_w"], p["g1_b"], stride=2, padding=1,
                              gamma=p["g1_gamma"], beta=p["g1_beta"], bn=True,
                              act="relu", groups=groups)                    # 4 -> 8
    x = conv_transpose2d_nhwc(x, p["g2_w"], p["g2_b"], stride=2, padding=1,
                              act="tanh", groups=groups)                    # 8 -> 16
    return x                                                                # (N,16,16,3)


def discriminator_forward(p, x, groups):
    n = x.shape[0]
    x = conv2d_nhwc(x, p["d0_w"], p["d0_b"], stride=2, padding=1,
                    act="leaky_relu", groups=groups)                        # 16 -> 8
    x = conv2d_nhwc(x, p["d1_w"], p["d1_b"], stride=2, padding=1,
                    gamma=p["d1_gamma"], beta=p["d1_beta"], bn=True,
                    act="leaky_relu", groups=groups)                        # 8 -> 4
    x = conv2d_nhwc(x, p["d2_w"], p["d2_b"], stride=1, padding=0, groups=1) # 4 -> 1
    return x.reshape(n, -1)


# ---------------- losses (plain jnp: reductions over a handful of scalars) ----------------
def bce_with_logits_mean(x, target):
    x = x.astype(jnp.float32)
    return jnp.mean(jnp.maximum(x, 0.0) - x * target + jnp.log1p(jnp.exp(-jnp.abs(x))))


# ---------------- StaticUnconditionalGAN forward (forward-only semantics) ----------------
def static_unconditional_gan_forward(params, real_imgs, key):
    batch = real_imgs.shape[0]
    k1, k2 = jax.random.split(key)

    # both generator passes batched (same params; BN stats per sub-batch group)
    noise = jnp.concatenate(
        [jax.random.normal(k1, (batch, NOISE_SIZE), jnp.float32),
         jax.random.normal(k2, (batch, NOISE_SIZE), jnp.float32)], axis=0)
    fakes = generator_forward(params, noise, groups=2)        # (2*batch, 16, 16, 3)
    fake_imgs, fake_imgs2 = fakes[:batch], fakes[batch:]

    # all three discriminator passes batched (BN stats per sub-batch group)
    real_nhwc = jnp.transpose(real_imgs, (0, 2, 3, 1))
    disc_in = jnp.concatenate([fake_imgs, real_nhwc, fake_imgs2], axis=0)
    logits = discriminator_forward(params, disc_in, groups=3)  # (3*batch, 1)
    pred_fake = logits[:batch]
    pred_real = logits[batch:2 * batch]
    pred_fake_g = logits[2 * batch:]

    loss_disc = (bce_with_logits_mean(pred_fake, 0.0)
                 + bce_with_logits_mean(pred_real, 1.0))
    loss_gen = bce_with_logits_mean(pred_fake_g, 1.0) * 1.0    # loss_weight = 1.0

    # TODO(synk): backward passes + Adam optimizer steps (and BN running-stat
    # updates) are training-state mutation with no clean Pallas forward
    # equivalent; all passes above use the same (pre-update) parameters.
    fake_out = jnp.transpose(fake_imgs2[:2], (0, 3, 1, 2))     # NCHW, like the module
    return fake_out, loss_gen, loss_disc


# ---------------- deterministic parameter init ----------------
def init_params(key):
    keys = jax.random.split(key, 8)
    n = lambda k, s: (jax.random.normal(k, s, jnp.float32) * 0.02)
    return {
        # generator (ConvTranspose2d weight layout: (Cin, Cout, kh, kw))
        "g0_w": n(keys[0], (NOISE_SIZE, GEN_BASE, 4, 4)),
        "g0_b": jnp.zeros((GEN_BASE,), jnp.float32),
        "g0_gamma": jnp.ones((GEN_BASE,), jnp.float32),
        "g0_beta": jnp.zeros((GEN_BASE,), jnp.float32),
        "g1_w": n(keys[1], (GEN_BASE, GEN_BASE // 2, 4, 4)),
        "g1_b": jnp.zeros((GEN_BASE // 2,), jnp.float32),
        "g1_gamma": jnp.ones((GEN_BASE // 2,), jnp.float32),
        "g1_beta": jnp.zeros((GEN_BASE // 2,), jnp.float32),
        "g2_w": n(keys[2], (GEN_BASE // 2, GEN_OUT_CH, 4, 4)),
        "g2_b": jnp.zeros((GEN_OUT_CH,), jnp.float32),
        # discriminator (Conv2d weight layout: (Cout, Cin, kh, kw))
        "d0_w": n(keys[3], (DISC_BASE, GEN_OUT_CH, 4, 4)),
        "d0_b": jnp.zeros((DISC_BASE,), jnp.float32),
        "d1_w": n(keys[4], (DISC_BASE * 2, DISC_BASE, 4, 4)),
        "d1_b": jnp.zeros((DISC_BASE * 2,), jnp.float32),
        "d1_gamma": jnp.ones((DISC_BASE * 2,), jnp.float32),
        "d1_beta": jnp.zeros((DISC_BASE * 2,), jnp.float32),
        "d2_w": n(keys[5], (DISC_OUT_CH, DISC_BASE * 2, 4, 4)),
        "d2_b": jnp.zeros((DISC_OUT_CH,), jnp.float32),
    }


if __name__ == "__main__":
    key = jax.random.PRNGKey(0)
    pkey, dkey, nkey = jax.random.split(key, 3)

    params = init_params(pkey)
    real_imgs = jax.random.normal(
        dkey, (2, GEN_OUT_CH, OUTPUT_SCALE, OUTPUT_SCALE), jnp.float32)

    fwd = jax.jit(static_unconditional_gan_forward)
    fake, loss_gen, loss_disc = fwd(params, real_imgs, nkey)
    jax.block_until_ready((fake, loss_gen, loss_disc))

    assert fake.shape == (2, GEN_OUT_CH, OUTPUT_SCALE, OUTPUT_SCALE)
    assert loss_gen.shape == () and loss_disc.shape == ()
    assert bool(jnp.isfinite(loss_gen)) and bool(jnp.isfinite(loss_disc))
    print("KERNEL_OK")
</pallas_src>

<mosaic_0001>
module attributes {stable_mosaic.version = 11 : i64} {
  func.func @_bn_act_kernel(%arg0: i32, %arg1: memref<32x32xf32, #tpu.memory_space<vmem>>, %arg2: memref<1x32xf32, #tpu.memory_space<vmem>>, %arg3: memref<1x32xf32, #tpu.memory_space<vmem>>, %arg4: memref<32x32xf32, #tpu.memory_space<vmem>>) attributes {dimension_semantics = [#tpu.dimension_semantics<parallel>], iteration_bounds = array<i64: 2>, scalar_prefetch = 0 : i64, scratch_operands = 0 : i64, tpu.core_type = #tpu.core_type<tc>, window_params = [{transform_indices = @transform_0, window_bounds = array<i64: 32, 32>}, {pipeline_mode = #tpu.pipeline_mode<synchronous>, transform_indices = @transform_1, window_bounds = array<i64: 1, 32>}, {pipeline_mode = #tpu.pipeline_mode<synchronous>, transform_indices = @transform_2, window_bounds = array<i64: 1, 32>}, {transform_indices = @transform_3, window_bounds = array<i64: 32, 32>}]} {
    %c0 = arith.constant 0 : index
    %c0_0 = arith.constant 0 : index
    %0 = vector.load %arg1[%c0, %c0_0] : memref<32x32xf32, #tpu.memory_space<vmem>>, vector<32x32xf32>
    %cst = arith.constant dense<0.000000e+00> : vector<32xf32>
    %1 = vector.multi_reduction <add>, %0, %cst [0] : vector<32x32xf32> to vector<32xf32>
    %2 = vector.shape_cast %1 : vector<32xf32> to vector<1x32xf32>
    %cst_1 = arith.constant 3.200000e+01 : f32
    %3 = vector.broadcast %cst_1 : f32 to vector<1x32xf32>
    %4 = arith.divf %2, %3 : vector<1x32xf32>
    %5 = vector.broadcast %4 : vector<1x32xf32> to vector<32x32xf32>
    %6 = arith.subf %0, %5 : vector<32x32xf32>
    %7 = arith.mulf %6, %6 : vector<32x32xf32>
    %cst_2 = arith.constant dense<0.000000e+00> : vector<32xf32>
    %8 = vector.multi_reduction <add>, %7, %cst_2 [0] : vector<32x32xf32> to vector<32xf32>
    %9 = vector.shape_cast %8 : vector<32xf32> to vector<1x32xf32>
    %cst_3 = arith.constant 3.200000e+01 : f32
    %10 = vector.broadcast %cst_3 : f32 to vector<1x32xf32>
    %11 = arith.divf %9, %10 : vector<1x32xf32>
    %cst_4 = arith.constant 9.99999974E-6 : f32
    %12 = vector.broadcast %cst_4 : f32 to vector<1x32xf32>
    %13 = arith.addf %11, %12 : vector<1x32xf32>
    %14 = math.rsqrt %13 : vector<1x32xf32>
    %15 = vector.broadcast %14 : vector<1x32xf32> to vector<32x32xf32>
    %16 = arith.mulf %6, %15 : vector<32x32xf32>
    %c0_5 = arith.constant 0 : index
    %c0_6 = arith.constant 0 : index
    %17 = vector.load %arg2[%c0_5, %c0_6] : memref<1x32xf32, #tpu.memory_space<vmem>>, vector<1x32xf32>
    %18 = vector.broadcast %17 : vector<1x32xf32> to vector<32x32xf32>
    %19 = arith.mulf %16, %18 : vector<32x32xf32>
    %c0_7 = arith.constant 0 : index
    %c0_8 = arith.constant 0 : index
    %20 = vector.load %arg3[%c0_7, %c0_8] : memref<1x32xf32, #tpu.memory_space<vmem>>, vector<1x32xf32>
    %21 = vector.broadcast %20 : vector<1x32xf32> to vector<32x32xf32>
    %22 = arith.addf %19, %21 : vector<32x32xf32>
    %cst_9 = arith.constant 0.000000e+00 : f32
    %23 = vector.broadcast %cst_9 : f32 to vector<32x32xf32>
    %24 = arith.maximumf %22, %23 : vector<32x32xf32>
    %c0_10 = arith.constant 0 : index
    %c0_11 = arith.constant 0 : index
    %25 = vector.load %arg4[%c0_10, %c0_11] : memref<32x32xf32, #tpu.memory_space<vmem>>, vector<32x32xf32>
    tpu.vector_store %arg4[%c0_10, %c0_11], %24 {strides = array<i32>} : memref<32x32xf32, #tpu.memory_space<vmem>>, vector<32x32xf32>,
    return
  }
  func.func @transform_0(%arg0: i32) -> (i32, i32) {
    %c0_i32 = arith.constant 0 : i32
    %c0_i32_0 = arith.constant 0 : i32
    return %arg0, %c0_i32 : i32, i32
  }
  func.func @transform_1(%arg0: i32) -> (i32, i32) {
    %c0_i32 = arith.constant 0 : i32
    %c0_i32_0 = arith.constant 0 : i32
    %c0_i32_1 = arith.constant 0 : i32
    return %c0_i32, %c0_i32_0 : i32, i32
  }
  func.func @transform_2(%arg0: i32) -> (i32, i32) {
    %c0_i32 = arith.constant 0 : i32
    %c0_i32_0 = arith.constant 0 : i32
    %c0_i32_1 = arith.constant 0 : i32
    return %c0_i32, %c0_i32_0 : i32, i32
  }
  func.func @transform_3(%arg0: i32) -> (i32, i32) {
    %c0_i32 = arith.constant 0 : i32
    %c0_i32_0 = arith.constant 0 : i32
    return %arg0, %c0_i32 : i32, i32
  }
}

module attributes {stable_mosaic.version = 11 : i64} {
  func.func @_fused_matmul_bn_act_kernel(%arg0: i32, %arg1: memref<4x16xbf16, #tpu.memory_space<vmem>>, %arg2: memref<16x512xbf16, #tpu.memory_space<vmem>>, %arg3: memref<1x512xf32, #tpu.memory_space<vmem>>, %arg4: memref<4x512xf32, #tpu.memory_space<vmem>>) attributes {dimension_semantics = [#tpu.dimension_semantics<parallel>], iteration_bounds = array<i64: 1>, scalar_prefetch = 0 : i64, scratch_operands = 0 : i64, tpu.core_type = #tpu.core_type<tc>, window_params = [{transform_indices = @transform_0, window_bounds = array<i64: 4, 16>}, {pipeline_mode = #tpu.pipeline_mode<synchronous>, transform_indices = @transform_1, window_bounds = array<i64: 16, 512>}, {pipeline_mode = #tpu.pipeline_mode<synchronous>, transform_indices = @transform_2, window_bounds = array<i64: 1, 512>}, {transform_indices = @transform_3, window_bounds = array<i64: 4, 512>}]} {
    %c0 = arith.constant 0 : index
    %c0_0 = arith.constant 0 : index
    %0 = vector.load %arg1[%c0, %c0_0] : memref<4x16xbf16, #tpu.memory_space<vmem>>, vector<4x16xbf16>
    %c0_1 = arith.constant 0 : index
    %c0_2 = arith.constant 0 : index
    %1 = vector.load %arg2[%c0_1, %c0_2] : memref<16x512xbf16, #tpu.memory_space<vmem>>, vector<16x512xbf16>
    %cst = arith.constant dense<0.000000e+00> : vector<4x512xf32>
    %2 = tpu.matmul %0, %1, %cst {dimension_numbers = #tpu.dot_dimension_numbers<[1], [0], [0], [1], [0, 0, 1, 1], [], []>} : vector<4x16xbf16>, vector<16x512xbf16>, vector<4x512xf32> -> vector<4x512xf32>
    %c0_3 = arith.constant 0 : index
    %c0_4 = arith.constant 0 : index
    %3 = vector.load %arg3[%c0_3, %c0_4] : memref<1x512xf32, #tpu.memory_space<vmem>>, vector<1x512xf32>
    %4 = vector.broadcast %3 : vector<1x512xf32> to vector<4x512xf32>
    %5 = arith.addf %2, %4 : vector<4x512xf32>
    %c0_5 = arith.constant 0 : index
    %c0_6 = arith.constant 0 : index
    %6 = vector.load %arg4[%c0_5, %c0_6] : memref<4x512xf32, #tpu.memory_space<vmem>>, vector<4x512xf32>
    tpu.vector_store %arg4[%c0_5, %c0_6], %5 {strides = array<i32>} : memref<4x512xf32, #tpu.memory_space<vmem>>, vector<4x512xf32>,
    return
  }
  func.func @transform_0(%arg0: i32) -> (i32, i32) {
    %c0_i32 = arith.constant 0 : i32
    %c0_i32_0 = arith.constant 0 : i32
    return %arg0, %c0_i32 : i32, i32
  }
  func.func @transform_1(%arg0: i32) -> (i32, i32) {
    %c0_i32 = arith.constant 0 : i32
    %c0_i32_0 = arith.constant 0 : i32
    %c0_i32_1 = arith.constant 0 : i32
    return %c0_i32, %c0_i32_0 : i32, i32
  }
  func.func @transform_2(%arg0: i32) -> (i32, i32) {
    %c0_i32 = arith.constant 0 : i32
    %c0_i32_0 = arith.constant 0 : i32
    %c0_i32_1 = arith.constant 0 : i32
    return %c0_i32, %c0_i32_0 : i32, i32
  }
  func.func @transform_3(%arg0: i32) -> (i32, i32) {
    %c0_i32 = arith.constant 0 : i32
    %c0_i32_0 = arith.constant 0 : i32
    return %arg0, %c0_i32 : i32, i32
  }
}

module attributes {stable_mosaic.version = 11 : i64} {
  func.func @_fused_matmul_bn_act_kernel(%arg0: i32, %arg1: memref<128x512xbf16, #tpu.memory_space<vmem>>, %arg2: memref<512x128xbf16, #tpu.memory_space<vmem>>, %arg3: memref<1x128xf32, #tpu.memory_space<vmem>>, %arg4: memref<1x128xf32, #tpu.memory_space<vmem>>, %arg5: memref<1x128xf32, #tpu.memory_space<vmem>>, %arg6: memref<128x128xf32, #tpu.memory_space<vmem>>) attributes {dimension_semantics = [#tpu.dimension_semantics<parallel>], iteration_bounds = array<i64: 2>, scalar_prefetch = 0 : i64, scratch_operands = 0 : i64, tpu.core_type = #tpu.core_type<tc>, window_params = [{transform_indices = @transform_0, window_bounds = array<i64: 128, 512>}, {pipeline_mode = #tpu.pipeline_mode<synchronous>, transform_indices = @transform_1, window_bounds = array<i64: 512, 128>}, {pipeline_mode = #tpu.pipeline_mode<synchronous>, transform_indices = @transform_2, window_bounds = array<i64: 1, 128>}, {pipeline_mode = #tpu.pipeline_mode<synchronous>, transform_indices = @transform_3, window_bounds = array<i64: 1, 128>}, {pipeline_mode = #tpu.pipeline_mode<synchronous>, transform_indices = @transform_4, window_bounds = array<i64: 1, 128>}, {transform_indices = @transform_5, window_bounds = array<i64: 128, 128>}]} {
    %c0 = arith.constant 0 : index
    %c0_0 = arith.constant 0 : index
    %0 = vector.load %arg1[%c0, %c0_0] : memref<128x512xbf16, #tpu.memory_space<vmem>>, vector<128x512xbf16>
    %c0_1 = arith.constant 0 : index
    %c0_2 = arith.constant 0 : index
    %1 = vector.load %arg2[%c0_1, %c0_2] : memref<512x128xbf16, #tpu.memory_space<vmem>>, vector<512x128xbf16>
    %cst = arith.constant dense<0.000000e+00> : vector<128x128xf32>
    %2 = tpu.matmul %0, %1, %cst {dimension_numbers = #tpu.dot_dimension_numbers<[1], [0], [0], [1], [0, 0, 1, 1], [], []>} : vector<128x512xbf16>, vector<512x128xbf16>, vector<128x128xf32> -> vector<128x128xf32>
    %c0_3 = arith.constant 0 : index
    %c0_4 = arith.constant 0 : index
    %3 = vector.load %arg3[%c0_3, %c0_4] : memref<1x128xf32, #tpu.memory_space<vmem>>, vector<1x128xf32>
    %4 = vector.broadcast %3 : vector<1x128xf32> to vector<128x128xf32>
    %5 = arith.addf %2, %4 : vector<128x128xf32>
    %cst_5 = arith.constant dense<0.000000e+00> : vector<128xf32>
    %6 = vector.multi_reduction <add>, %5, %cst_5 [0] : vector<128x128xf32> to vector<128xf32>
    %7 = vector.shape_cast %6 : vector<128xf32> to vector<1x128xf32>
    %cst_6 = arith.constant 1.280000e+02 : f32
    %8 = vector.broadcast %cst_6 : f32 to vector<1x128xf32>
    %9 = arith.divf %7, %8 : vector<1x128xf32>
    %10 = vector.broadcast %9 : vector<1x128xf32> to vector<128x128xf32>
    %11 = arith.subf %5, %10 : vector<128x128xf32>
    %12 = arith.mulf %11, %11 : vector<128x128xf32>
    %cst_7 = arith.constant dense<0.000000e+00> : vector<128xf32>
    %13 = vector.multi_reduction <add>, %12, %cst_7 [0] : vector<128x128xf32> to vector<128xf32>
    %14 = vector.shape_cast %13 : vector<128xf32> to vector<1x128xf32>
    %cst_8 = arith.constant 1.280000e+02 : f32
    %15 = vector.broadcast %cst_8 : f32 to vector<1x128xf32>
    %16 = arith.divf %14, %15 : vector<1x128xf32>
    %cst_9 = arith.constant 9.99999974E-6 : f32
    %17 = vector.broadcast %cst_9 : f32 to vector<1x128xf32>
    %18 = arith.addf %16, %17 : vector<1x128xf32>
    %19 = math.rsqrt %18 : vector<1x128xf32>
    %20 = vector.broadcast %19 : vector<1x128xf32> to vector<128x128xf32>
    %21 = arith.mulf %11, %20 : vector<128x128xf32>
    %c0_10 = arith.constant 0 : index
    %c0_11 = arith.constant 0 : index
    %22 = vector.load %arg4[%c0_10, %c0_11] : memref<1x128xf32, #tpu.memory_space<vmem>>, vector<1x128xf32>
    %23 = vector.broadcast %22 : vector<1x128xf32> to vector<128x128xf32>
    %24 = arith.mulf %21, %23 : vector<128x128xf32>
    %c0_12 = arith.constant 0 : index
    %c0_13 = arith.constant 0 : index
    %25 = vector.load %arg5[%c0_12, %c0_13] : memref<1x128xf32, #tpu.memory_space<vmem>>, vector<1x128xf32>
    %26 = vector.broadcast %25 : vector<1x128xf32> to vector<128x128xf32>
    %27 = arith.addf %24, %26 : vector<128x128xf32>
    %cst_14 = arith.constant 0.000000e+00 : f32
    %28 = vector.broadcast %cst_14 : f32 to vector<128x128xf32>
    %29 = arith.maximumf %27, %28 : vector<128x128xf32>
    %c0_15 = arith.constant 0 : index
    %c0_16 = arith.constant 0 : index
    %30 = vector.load %arg6[%c0_15, %c0_16] : memref<128x128xf32, #tpu.memory_space<vmem>>, vector<128x128xf32>
    tpu.vector_store %arg6[%c0_15, %c0_16], %29 {strides = array<i32>} : memref<128x128xf32, #tpu.memory_space<vmem>>, vector<128x128xf32>,
    return
  }
  func.func @transform_0(%arg0: i32) -> (i32, i32) {
    %c0_i32 = arith.constant 0 : i32
    %c0_i32_0 = arith.constant 0 : i32
    return %arg0, %c0_i32 : i32, i32
  }
  func.func @transform_1(%arg0: i32) -> (i32, i32) {
    %c0_i32 = arith.constant 0 : i32
    %c0_i32_0 = arith.constant 0 : i32
    %c0_i32_1 = arith.constant 0 : i32
    return %c0_i32, %c0_i32_0 : i32, i32
  }
  func.func @transform_2(%arg0: i32) -> (i32, i32) {
    %c0_i32 = arith.constant 0 : i32
    %c0_i32_0 = arith.constant 0 : i32
    %c0_i32_1 = arith.constant 0 : i32
    return %c0_i32, %c0_i32_0 : i32, i32
  }
  func.func @transform_3(%arg0: i32) -> (i32, i32) {
    %c0_i32 = arith.constant 0 : i32
    %c0_i32_0 = arith.constant 0 : i32
    %c0_i32_1 = arith.constant 0 : i32
    return %c0_i32, %c0_i32_0 : i32, i32
  }
  func.func @transform_4(%arg0: i32) -> (i32, i32) {
    %c0_i32 = arith.constant 0 : i32
    %c0_i32_0 = arith.constant 0 : i32
    %c0_i32_1 = arith.constant 0 : i32
    return %c0_i32, %c0_i32_0 : i32, i32
  }
  func.func @transform_5(%arg0: i32) -> (i32, i32) {
    %c0_i32 = arith.constant 0 : i32
    %c0_i32_0 = arith.constant 0 : i32
    return %arg0, %c0_i32 : i32, i32
  }
}

module attributes {stable_mosaic.version = 11 : i64} {
  func.func @_fused_matmul_bn_act_kernel(%arg0: i32, %arg1: memref<512x256xbf16, #tpu.memory_space<vmem>>, %arg2: memref<256x128xbf16, #tpu.memory_space<vmem>>, %arg3: memref<1x128xf32, #tpu.memory_space<vmem>>, %arg4: memref<512x128xf32, #tpu.memory_space<vmem>>) attributes {dimension_semantics = [#tpu.dimension_semantics<parallel>], iteration_bounds = array<i64: 2>, scalar_prefetch = 0 : i64, scratch_operands = 0 : i64, tpu.core_type = #tpu.core_type<tc>, window_params = [{transform_indices = @transform_0, window_bounds = array<i64: 512, 256>}, {pipeline_mode = #tpu.pipeline_mode<synchronous>, transform_indices = @transform_1, window_bounds = array<i64: 256, 128>}, {pipeline_mode = #tpu.pipeline_mode<synchronous>, transform_indices = @transform_2, window_bounds = array<i64: 1, 128>}, {transform_indices = @transform_3, window_bounds = array<i64: 512, 128>}]} {
    %c0 = arith.constant 0 : index
    %c0_0 = arith.constant 0 : index
    %0 = vector.load %arg1[%c0, %c0_0] : memref<512x256xbf16, #tpu.memory_space<vmem>>, vector<512x256xbf16>
    %c0_1 = arith.constant 0 : index
    %c0_2 = arith.constant 0 : index
    %1 = vector.load %arg2[%c0_1, %c0_2] : memref<256x128xbf16, #tpu.memory_space<vmem>>, vector<256x128xbf16>
    %cst = arith.constant dense<0.000000e+00> : vector<512x128xf32>
    %2 = tpu.matmul %0, %1, %cst {dimension_numbers = #tpu.dot_dimension_numbers<[1], [0], [0], [1], [0, 0, 1, 1], [], []>} : vector<512x256xbf16>, vector<256x128xbf16>, vector<512x128xf32> -> vector<512x128xf32>
    %c0_3 = arith.constant 0 : index
    %c0_4 = arith.constant 0 : index
    %3 = vector.load %arg3[%c0_3, %c0_4] : memref<1x128xf32, #tpu.memory_space<vmem>>, vector<1x128xf32>
    %4 = vector.broadcast %3 : vector<1x128xf32> to vector<512x128xf32>
    %5 = arith.addf %2, %4 : vector<512x128xf32>
    %6 = math.tanh %5 : vector<512x128xf32>
    %c0_5 = arith.constant 0 : index
    %c0_6 = arith.constant 0 : index
    %7 = vector.load %arg4[%c0_5, %c0_6] : memref<512x128xf32, #tpu.memory_space<vmem>>, vector<512x128xf32>
    tpu.vector_store %arg4[%c0_5, %c0_6], %6 {strides = array<i32>} : memref<512x128xf32, #tpu.memory_space<vmem>>, vector<512x128xf32>,
    return
  }
  func.func @transform_0(%arg0: i32) -> (i32, i32) {
    %c0_i32 = arith.constant 0 : i32
    %c0_i32_0 = arith.constant 0 : i32
    return %arg0, %c0_i32 : i32, i32
  }
  func.func @transform_1(%arg0: i32) -> (i32, i32) {
    %c0_i32 = arith.constant 0 : i32
    %c0_i32_0 = arith.constant 0 : i32
    %c0_i32_1 = arith.constant 0 : i32
    return %c0_i32, %c0_i32_0 : i32, i32
  }
  func.func @transform_2(%arg0: i32) -> (i32, i32) {
    %c0_i32 = arith.constant 0 : i32
    %c0_i32_0 = arith.constant 0 : i32
    %c0_i32_1 = arith.constant 0 : i32
    return %c0_i32, %c0_i32_0 : i32, i32
  }
  func.func @transform_3(%arg0: i32) -> (i32, i32) {
    %c0_i32 = arith.constant 0 : i32
    %c0_i32_0 = arith.constant 0 : i32
    return %arg0, %c0_i32 : i32, i32
  }
}

module attributes {stable_mosaic.version = 11 : i64} {
  func.func @_fused_matmul_bn_act_kernel(%arg0: i32, %arg1: memref<128x48xbf16, #tpu.memory_space<vmem>>, %arg2: memref<48x128xbf16, #tpu.memory_space<vmem>>, %arg3: memref<1x128xf32, #tpu.memory_space<vmem>>, %arg4: memref<128x128xf32, #tpu.memory_space<vmem>>) attributes {dimension_semantics = [#tpu.dimension_semantics<parallel>], iteration_bounds = array<i64: 3>, scalar_prefetch = 0 : i64, scratch_operands = 0 : i64, tpu.core_type = #tpu.core_type<tc>, window_params = [{transform_indices = @transform_0, window_bounds = array<i64: 128, 48>}, {pipeline_mode = #tpu.pipeline_mode<synchronous>, transform_indices = @transform_1, window_bounds = array<i64: 48, 128>}, {pipeline_mode = #tpu.pipeline_mode<synchronous>, transform_indices = @transform_2, window_bounds = array<i64: 1, 128>}, {transform_indices = @transform_3, window_bounds = array<i64: 128, 128>}]} {
    %c0 = arith.constant 0 : index
    %c0_0 = arith.constant 0 : index
    %0 = vector.load %arg1[%c0, %c0_0] : memref<128x48xbf16, #tpu.memory_space<vmem>>, vector<128x48xbf16>
    %c0_1 = arith.constant 0 : index
    %c0_2 = arith.constant 0 : index
    %1 = vector.load %arg2[%c0_1, %c0_2] : memref<48x128xbf16, #tpu.memory_space<vmem>>, vector<48x128xbf16>
    %cst = arith.constant dense<0.000000e+00> : vector<128x128xf32>
    %2 = tpu.matmul %0, %1, %cst {dimension_numbers = #tpu.dot_dimension_numbers<[1], [0], [0], [1], [0, 0, 1, 1], [], []>} : vector<128x48xbf16>, vector<48x128xbf16>, vector<128x128xf32> -> vector<128x128xf32>
    %c0_3 = arith.constant 0 : index
    %c0_4 = arith.constant 0 : index
    %3 = vector.load %arg3[%c0_3, %c0_4] : memref<1x128xf32, #tpu.memory_space<vmem>>, vector<1x128xf32>
    %4 = vector.broadcast %3 : vector<1x128xf32> to vector<128x128xf32>
    %5 = arith.addf %2, %4 : vector<128x128xf32>
    %cst_5 = arith.constant 0.000000e+00 : f32
    %6 = vector.broadcast %cst_5 : f32 to vector<128x128xf32>
    %7 = arith.cmpf oge, %5, %6 : vector<128x128xf32>
    %cst_6 = arith.constant 0.00999999977 : f32
    %8 = vector.broadcast %cst_6 : f32 to vector<128x128xf32>
    %9 = arith.mulf %5, %8 : vector<128x128xf32>
    %10 = arith.select %7, %5, %9 : vector<128x128xi1>, vector<128x128xf32>
    %c0_7 = arith.constant 0 : index
    %c0_8 = arith.constant 0 : index
    %11 = vector.load %arg4[%c0_7, %c0_8] : memref<128x128xf32, #tpu.memory_space<vmem>>, vector<128x128xf32>
    tpu.vector_store %arg4[%c0_7, %c0_8], %10 {strides = array<i32>} : memref<128x128xf32, #tpu.memory_space<vmem>>, vector<128x128xf32>,
    return
  }
  func.func @transform_0(%arg0: i32) -> (i32, i32) {
    %c0_i32 = arith.constant 0 : i32
    %c0_i32_0 = arith.constant 0 : i32
    return %arg0, %c0_i32 : i32, i32
  }
  func.func @transform_1(%arg0: i32) -> (i32, i32) {
    %c0_i32 = arith.constant 0 : i32
    %c0_i32_0 = arith.constant 0 : i32
    %c0_i32_1 = arith.constant 0 : i32
    return %c0_i32, %c0_i32_0 : i32, i32
  }
  func.func @transform_2(%arg0: i32) -> (i32, i32) {
    %c0_i32 = arith.constant 0 : i32
    %c0_i32_0 = arith.constant 0 : i32
    %c0_i32_1 = arith.constant 0 : i32
    return %c0_i32, %c0_i32_0 : i32, i32
  }
  func.func @transform_3(%arg0: i32) -> (i32, i32) {
    %c0_i32 = arith.constant 0 : i32
    %c0_i32_0 = arith.constant 0 : i32
    return %arg0, %c0_i32 : i32, i32
  }
}

module attributes {stable_mosaic.version = 11 : i64} {
  func.func @_fused_matmul_bn_act_kernel(%arg0: i32, %arg1: memref<32x128xbf16, #tpu.memory_space<vmem>>, %arg2: memref<128x128xbf16, #tpu.memory_space<vmem>>, %arg3: memref<1x128xf32, #tpu.memory_space<vmem>>, %arg4: memref<1x128xf32, #tpu.memory_space<vmem>>, %arg5: memref<1x128xf32, #tpu.memory_space<vmem>>, %arg6: memref<32x128xf32, #tpu.memory_space<vmem>>) attributes {dimension_semantics = [#tpu.dimension_semantics<parallel>], iteration_bounds = array<i64: 3>, scalar_prefetch = 0 : i64, scratch_operands = 0 : i64, tpu.core_type = #tpu.core_type<tc>, window_params = [{transform_indices = @transform_0, window_bounds = array<i64: 32, 128>}, {pipeline_mode = #tpu.pipeline_mode<synchronous>, transform_indices = @transform_1, window_bounds = array<i64: 128, 128>}, {pipeline_mode = #tpu.pipeline_mode<synchronous>, transform_indices = @transform_2, window_bounds = array<i64: 1, 128>}, {pipeline_mode = #tpu.pipeline_mode<synchronous>, transform_indices = @transform_3, window_bounds = array<i64: 1, 128>}, {pipeline_mode = #tpu.pipeline_mode<synchronous>, transform_indices = @transform_4, window_bounds = array<i64: 1, 128>}, {transform_indices = @transform_5, window_bounds = array<i64: 32, 128>}]} {
    %c0 = arith.constant 0 : index
    %c0_0 = arith.constant 0 : index
    %0 = vector.load %arg1[%c0, %c0_0] : memref<32x128xbf16, #tpu.memory_space<vmem>>, vector<32x128xbf16>
    %c0_1 = arith.constant 0 : index
    %c0_2 = arith.constant 0 : index
    %1 = vector.load %arg2[%c0_1, %c0_2] : memref<128x128xbf16, #tpu.memory_space<vmem>>, vector<128x128xbf16>
    %cst = arith.constant dense<0.000000e+00> : vector<32x128xf32>
    %2 = tpu.matmul %0, %1, %cst {dimension_numbers = #tpu.dot_dimension_numbers<[1], [0], [0], [1], [0, 0, 1, 1], [], []>} : vector<32x128xbf16>, vector<128x128xbf16>, vector<32x128xf32> -> vector<32x128xf32>
    %c0_3 = arith.constant 0 : index
    %c0_4 = arith.constant 0 : index
    %3 = vector.load %arg3[%c0_3, %c0_4] : memref<1x128xf32, #tpu.memory_space<vmem>>, vector<1x128xf32>
    %4 = vector.broadcast %3 : vector<1x128xf32> to vector<32x128xf32>
    %5 = arith.addf %2, %4 : vector<32x128xf32>
    %cst_5 = arith.constant dense<0.000000e+00> : vector<128xf32>
    %6 = vector.multi_reduction <add>, %5, %cst_5 [0] : vector<32x128xf32> to vector<128xf32>
    %7 = vector.shape_cast %6 : vector<128xf32> to vector<1x128xf32>
    %cst_6 = arith.constant 3.200000e+01 : f32
    %8 = vector.broadcast %cst_6 : f32 to vector<1x128xf32>
    %9 = arith.divf %7, %8 : vector<1x128xf32>
    %10 = vector.broadcast %9 : vector<1x128xf32> to vector<32x128xf32>
    %11 = arith.subf %5, %10 : vector<32x128xf32>
    %12 = arith.mulf %11, %11 : vector<32x128xf32>
    %cst_7 = arith.constant dense<0.000000e+00> : vector<128xf32>
    %13 = vector.multi_reduction <add>, %12, %cst_7 [0] : vector<32x128xf32> to vector<128xf32>
    %14 = vector.shape_cast %13 : vector<128xf32> to vector<1x128xf32>
    %cst_8 = arith.constant 3.200000e+01 : f32
    %15 = vector.broadcast %cst_8 : f32 to vector<1x128xf32>
    %16 = arith.divf %14, %15 : vector<1x128xf32>
    %cst_9 = arith.constant 9.99999974E-6 : f32
    %17 = vector.broadcast %cst_9 : f32 to vector<1x128xf32>
    %18 = arith.addf %16, %17 : vector<1x128xf32>
    %19 = math.rsqrt %18 : vector<1x128xf32>
    %20 = vector.broadcast %19 : vector<1x128xf32> to vector<32x128xf32>
    %21 = arith.mulf %11, %20 : vector<32x128xf32>
    %c0_10 = arith.constant 0 : index
    %c0_11 = arith.constant 0 : index
    %22 = vector.load %arg4[%c0_10, %c0_11] : memref<1x128xf32, #tpu.memory_space<vmem>>, vector<1x128xf32>
    %23 = vector.broadcast %22 : vector<1x128xf32> to vector<32x128xf32>
    %24 = arith.mulf %21, %23 : vector<32x128xf32>
    %c0_12 = arith.constant 0 : index
    %c0_13 = arith.constant 0 : index
    %25 = vector.load %arg5[%c0_12, %c0_13] : memref<1x128xf32, #tpu.memory_space<vmem>>, vector<1x128xf32>
    %26 = vector.broadcast %25 : vector<1x128xf32> to vector<32x128xf32>
    %27 = arith.addf %24, %26 : vector<32x128xf32>
    %cst_14 = arith.constant 0.000000e+00 : f32
    %28 = vector.broadcast %cst_14 : f32 to vector<32x128xf32>
    %29 = arith.cmpf oge, %27, %28 : vector<32x128xf32>
    %cst_15 = arith.constant 0.00999999977 : f32
    %30 = vector.broadcast %cst_15 : f32 to vector<32x128xf32>
    %31 = arith.mulf %27, %30 : vector<32x128xf32>
    %32 = arith.select %29, %27, %31 : vector<32x128xi1>, vector<32x128xf32>
    %c0_16 = arith.constant 0 : index
    %c0_17 = arith.constant 0 : index
    %33 = vector.load %arg6[%c0_16, %c0_17] : memref<32x128xf32, #tpu.memory_space<vmem>>, vector<32x128xf32>
    tpu.vector_store %arg6[%c0_16, %c0_17], %32 {strides = array<i32>} : memref<32x128xf32, #tpu.memory_space<vmem>>, vector<32x128xf32>,
    return
  }
  func.func @transform_0(%arg0: i32) -> (i32, i32) {
    %c0_i32 = arith.constant 0 : i32
    %c0_i32_0 = arith.constant 0 : i32
    return %arg0, %c0_i32 : i32, i32
  }
  func.func @transform_1(%arg0: i32) -> (i32, i32) {
    %c0_i32 = arith.constant 0 : i32
    %c0_i32_0 = arith.constant 0 : i32
    %c0_i32_1 = arith.constant 0 : i32
    return %c0_i32, %c0_i32_0 : i32, i32
  }
  func.func @transform_2(%arg0: i32) -> (i32, i32) {
    %c0_i32 = arith.constant 0 : i32
    %c0_i32_0 = arith.constant 0 : i32
    %c0_i32_1 = arith.constant 0 : i32
    return %c0_i32, %c0_i32_0 : i32, i32
  }
  func.func @transform_3(%arg0: i32) -> (i32, i32) {
    %c0_i32 = arith.constant 0 : i32
    %c0_i32_0 = arith.constant 0 : i32
    %c0_i32_1 = arith.constant 0 : i32
    return %c0_i32, %c0_i32_0 : i32, i32
  }
  func.func @transform_4(%arg0: i32) -> (i32, i32) {
    %c0_i32 = arith.constant 0 : i32
    %c0_i32_0 = arith.constant 0 : i32
    %c0_i32_1 = arith.constant 0 : i32
    return %c0_i32, %c0_i32_0 : i32, i32
  }
  func.func @transform_5(%arg0: i32) -> (i32, i32) {
    %c0_i32 = arith.constant 0 : i32
    %c0_i32_0 = arith.constant 0 : i32
    return %arg0, %c0_i32 : i32, i32
  }
}

module attributes {stable_mosaic.version = 11 : i64} {
  func.func @_fused_matmul_bn_act_kernel(%arg0: i32, %arg1: memref<6x256xbf16, #tpu.memory_space<vmem>>, %arg2: memref<256x128xbf16, #tpu.memory_space<vmem>>, %arg3: memref<1x128xf32, #tpu.memory_space<vmem>>, %arg4: memref<6x128xf32, #tpu.memory_space<vmem>>) attributes {dimension_semantics = [#tpu.dimension_semantics<parallel>], iteration_bounds = array<i64: 1>, scalar_prefetch = 0 : i64, scratch_operands = 0 : i64, tpu.core_type = #tpu.core_type<tc>, window_params = [{transform_indices = @transform_0, window_bounds = array<i64: 6, 256>}, {pipeline_mode = #tpu.pipeline_mode<synchronous>, transform_indices = @transform_1, window_bounds = array<i64: 256, 128>}, {pipeline_mode = #tpu.pipeline_mode<synchronous>, transform_indices = @transform_2, window_bounds = array<i64: 1, 128>}, {transform_indices = @transform_3, window_bounds = array<i64: 6, 128>}]} {
    %c0 = arith.constant 0 : index
    %c0_0 = arith.constant 0 : index
    %0 = vector.load %arg1[%c0, %c0_0] : memref<6x256xbf16, #tpu.memory_space<vmem>>, vector<6x256xbf16>
    %c0_1 = arith.constant 0 : index
    %c0_2 = arith.constant 0 : index
    %1 = vector.load %arg2[%c0_1, %c0_2] : memref<256x128xbf16, #tpu.memory_space<vmem>>, vector<256x128xbf16>
    %cst = arith.constant dense<0.000000e+00> : vector<6x128xf32>
    %2 = tpu.matmul %0, %1, %cst {dimension_numbers = #tpu.dot_dimension_numbers<[1], [0], [0], [1], [0, 0, 1, 1], [], []>} : vector<6x256xbf16>, vector<256x128xbf16>, vector<6x128xf32> -> vector<6x128xf32>
    %c0_3 = arith.constant 0 : index
    %c0_4 = arith.constant 0 : index
    %3 = vector.load %arg3[%c0_3, %c0_4] : memref<1x128xf32, #tpu.memory_space<vmem>>, vector<1x128xf32>
    %4 = vector.broadcast %3 : vector<1x128xf32> to vector<6x128xf32>
    %5 = arith.addf %2, %4 : vector<6x128xf32>
    %c0_5 = arith.constant 0 : index
    %c0_6 = arith.constant 0 : index
    %6 = vector.load %arg4[%c0_5, %c0_6] : memref<6x128xf32, #tpu.memory_space<vmem>>, vector<6x128xf32>
    tpu.vector_store %arg4[%c0_5, %c0_6], %5 {strides = array<i32>} : memref<6x128xf32, #tpu.memory_space<vmem>>, vector<6x128xf32>,
    return
  }
  func.func @transform_0(%arg0: i32) -> (i32, i32) {
    %c0_i32 = arith.constant 0 : i32
    %c0_i32_0 = arith.constant 0 : i32
    return %arg0, %c0_i32 : i32, i32
  }
  func.func @transform_1(%arg0: i32) -> (i32, i32) {
    %c0_i32 = arith.constant 0 : i32
    %c0_i32_0 = arith.constant 0 : i32
    %c0_i32_1 = arith.constant 0 : i32
    return %c0_i32, %c0_i32_0 : i32, i32
  }
  func.func @transform_2(%arg0: i32) -> (i32, i32) {
    %c0_i32 = arith.constant 0 : i32
    %c0_i32_0 = arith.constant 0 : i32
    %c0_i32_1 = arith.constant 0 : i32
    return %c0_i32, %c0_i32_0 : i32, i32
  }
  func.func @transform_3(%arg0: i32) -> (i32, i32) {
    %c0_i32 = arith.constant 0 : i32
    %c0_i32_0 = arith.constant 0 : i32
    return %arg0, %c0_i32 : i32, i32
  }
}

</mosaic_0001>

<llo_original>
// kernel: tile.8
$region0: #{tile.8}
  #allocation2 [shape = 's32[1]{0}', space=sflag, size = 0x4, scoped, tag = 'scoped memory for tile.8']
  %s0 = inlined_call_operand.hbm [shape: f32[32], index: 0, kind: input, shape index: {}]
  %s1 = inlined_call_operand.vmem [shape: f32[16,32], index: 1, kind: output, shape index: {}]
  $region1: #{tile.8} parent=0
    #allocation0 [shape = 'u8[512]{0}', space=vmem, size = 0x400, scoped, tag = 'operand span for operand 0']
    #allocation1 [shape = 's32[1]{0}', space=sflag, size = 0x4, scoped, tag = 'scoped memory for tile.8']
    %2 = vsyncpa [#allocation1], 0
    // Predicated region
    $region2: #{tile.8} parent=1 // pred_check
      _
    $region3: #{tile.8} parent=1 // pred_check_branch
      %4 = sbr.rel (0) target = $region5
    $region4: #{tile.8} parent=1 // pred_region
      %s6 = ssub.s32 16, 16
      %7 = vsyncadd [#allocation1], %s6
      %s9 = sshll.u32 [#allocation0], 4
      %s10 = int_to_ptr.vmem [resolvable:$true] %s9
      %12 = dma.hbm_to_vmem [thread:$0]  %s0, 16, %s10, [#allocation1]
    $region5: #{tile.8} parent=1 // pred_fallthru
      _
    // Predicated region
    $region6: #{tile.8} parent=1 // pred_check
      _
    $region7: #{tile.8} parent=1 // pred_check_branch
      %14 = sbr.rel (0) target = $region9
    $region8: #{tile.8} parent=1 // pred_region
      %15 = dma.done [#allocation1], 16
    $region9: #{tile.8} parent=1 // pred_fallthru
      _
    %v16 = vld [vmem:[#allocation0] ss:$0 sm:$0xff]
    %17 = vst [vmem:[%s1] sm:$0xff] %v16
    %s18 = scalar_lea.vmem %s1, 8
    %19 = vst [vmem:[%s18] sm:$0xff] %v16
    %20 = vsyncpa [#allocation1], 1

// kernel: tile.9
$region0: #{tile.9}
  %s0 = inlined_call_operand.vmem [shape: f32[16,32], index: 0, kind: input, shape index: {}]
  %s1 = inlined_call_operand.vmem [shape: f32[1,512], index: 1, kind: output, shape index: {}]
  $region1: #{tile.9} parent=0
    #allocation0 [shape = 'u8[16384]{0}', space=vmem, size = 0x4000, scoped, tag = 'scoped mem for output reshape']
    %v2 = vld [vmem:[%s0] ss:$4 sm:$0xf]
    %vm3 = vcmask 261120
    %4 = vst.msk [vmem:[#allocation0] ss:$8 sm:$0xf] %vm3, %v2
    %s5 = scalar_lea.vmem %s0, 3
    %v6 = vld [vmem:[%s5] ss:$4 sm:$0xf]
    %7 = vrot.lane.b32.xlu0 %v6, 96
    %v8 = vpop.permute.xlu0 %7
    %vm9 = vcmask 1048320
    %10 = vst.msk [vmem:[#allocation0] ss:$8 sm:$0xf] %vm9, %v8
    %s11 = scalar_lea.vmem %s0, 2
    %v12 = vld [vmem:[%s11] ss:$4 sm:$0xf]
    %13 = vrot.lane.b32.xlu0 %v12, 64
    %v14 = vpop.permute.xlu0 %13
    %vm15 = vcmask 785920
    %16 = vst.msk [vmem:[#allocation0] ss:$8 sm:$0xf] %vm15, %v14
    %s17 = scalar_lea.vmem %s0, 1
    %v18 = vld [vmem:[%s17] ss:$4 sm:$0xf]
    %19 = vrot.lane.b32.xlu0 %v18, 32
    %v20 = vpop.permute.xlu0 %19
    %vm21 = vcmask 523520
    %22 = vst.msk [vmem:[#allocation0] ss:$8 sm:$0xf] %vm21, %v20
    %s24 = sshllo.u32 0, 1
    %v26 = vld [vmem:[#allocation0] sm:%s24]
    %s27 = sshllo.u32 0, 1
    %28 = vst [vmem:[%s1] sm:%s27] %v26
    %s29 = scalar_lea.vmem [#allocation0], 8
    %v30 = vld [vmem:[%s29] sm:%s24]
    %s31 = sshllo.u32 0, 1
    %s32 = scalar_lea.vmem %s1, 1
    %33 = vst [vmem:[%s32] sm:%s31] %v30
    %s34 = scalar_lea.vmem [#allocation0], 16
    %v35 = vld [vmem:[%s34] sm:%s24]
    %s36 = sshllo.u32 0, 1
    %s37 = smul.addr 1, 2
    %s38 = scalar_lea.vmem %s1, %s37
    %39 = vst [vmem:[%s38] sm:%s36] %v35
    %s40 = scalar_lea.vmem [#allocation0], 24
    %v41 = vld [vmem:[%s40] sm:%s24]
    %s42 = sshllo.u32 0, 1
    %s43 = smul.addr 1, 3
    %s44 = scalar_lea.vmem %s1, %s43
    %45 = vst [vmem:[%s44] sm:%s42] %v41

// kernel: static_unconditional_gan_forward.9
$region0: #{static_unconditional_gan_forward.9}
  #allocation0 [shape = 'u32[]', space=smem, size = 0x4, offset = 0x4, fixed_abs, tag = 'smem constant byte address 0x4 - core index']
  #allocation1 [shape = 'u32[144,128]{1,0:T(1,128)}', space=vmem, size = 0x12000, scoped, tag = 'internal scratch']
  %s0 = inlined_call_operand.vmem [shape: bf16[4,16], index: 0, kind: input, shape index: {}]
  %s1 = inlined_call_operand.vmem [shape: bf16[16,512], index: 1, kind: input, shape index: {}]
  %s2 = inlined_call_operand.vmem [shape: f32[1,512], index: 2, kind: input, shape index: {}]
  %s3 = inlined_call_operand.vmem [shape: f32[4,512], index: 3, kind: output, shape index: {}]
  %s4 = sld [smem:[#allocation0]]
  $region22: #{static_unconditional_gan_forward.9} parent=0
    _
  %s6 = ssub.s32 1, %s4
  %s7 = scalar_select 0, %s6, %s4
  // Predicated region
  $region2: #{static_unconditional_gan_forward.9} parent=0 // pred_check
    _
  $region3: #{static_unconditional_gan_forward.9} parent=0 // pred_check_branch
    %9 = sbr.rel (0) target = $region5
  $region4: #{static_unconditional_gan_forward.9} parent=0 // pred_region
    _
  $region5: #{static_unconditional_gan_forward.9} parent=0 // pred_fallthru
    _
  // Predicated region
  $region6: #{static_unconditional_gan_forward.9} parent=0 // pred_check
    _
  $region7: #{static_unconditional_gan_forward.9} parent=0 // pred_check_branch
    %11 = sbr.rel (0) target = $region9
  $region8: #{static_unconditional_gan_forward.9} parent=0 // pred_region
    _
  $region9: #{static_unconditional_gan_forward.9} parent=0 // pred_fallthru
    _
  // Predicated region
  $region10: #{static_unconditional_gan_forward.9} parent=0 // pred_check
    _
  $region11: #{static_unconditional_gan_forward.9} parent=0 // pred_check_branch
    %13 = sbr.rel (0) target = $region13
  $region12: #{static_unconditional_gan_forward.9} parent=0 // pred_region
    _
  $region13: #{static_unconditional_gan_forward.9} parent=0 // pred_fallthru
    _
  %v15 = vld [vmem:[%s0] sm:$0x3]
  %v16 = vld [vmem:[%s1] sm:$0xff]
  %v17 = vld [vmem:[%s1 + $0x8] sm:$0xff]
  %v18 = vld [vmem:[%s1 + $0x10] sm:$0xff]
  %v19 = vld [vmem:[%s1 + $0x18] sm:$0xff]
  %v20 = vld [vmem:[%s2] sm:$0xf]
  %v22 = vlaneseq
  %v23 = vshrl.u32 %v22, 7
  %v24 = vsub.s32 0, %v23
  %v25 = vrot.slane %v20, %v24
  %v26 = vlaneseq
  %v27 = vshrl.u32 %v26, 7
  %v28 = vsub.s32 1, %v27
  %v29 = vrot.slane %v20, %v28
  %v30 = vlaneseq
  %v31 = vshrl.u32 %v30, 7
  %v32 = vsub.s32 2, %v31
  %v33 = vrot.slane %v20, %v32
  %v34 = vlaneseq
  %v35 = vshrl.u32 %v34, 7
  %v36 = vsub.s32 3, %v35
  %v37 = vrot.slane %v20, %v36
  %v46 = vunpack.c.l.b16 %v16
  %v47 = vunpack.c.h.b16 %v16
  %v48 = vunpack.c.l.b16 %v17
  %v49 = vunpack.c.h.b16 %v17
  %v50 = vunpack.c.l.b16 %v18
  %v51 = vunpack.c.h.b16 %v18
  %v52 = vunpack.c.l.b16 %v19
  %v53 = vunpack.c.h.b16 %v19
  %v54 = vpack.c.b16 %v50, %v46
  %v55 = vpack.c.b16 %v51, %v47
  %v56 = vpack.c.b16 %v52, %v48
  %v57 = vpack.c.b16 %v53, %v49
  %vm62 = vcmask 130048
  %v64 = vsel %vm62, %v15, 0
  %66 = vmatprep.subr.bf16.mxu0 %v55
  %67 = vmatpush1.bf16.msra.mxu0 %v54
  %68 = vmatprep.subr.bf16.mxu0 0
  %69 = vmatpush1.bf16.msra.mxu0 0
  %70 = vmatprep.subr.bf16.mxu0 0
  %71 = vmatpush1.bf16.msra.mxu0 0
  %72 = vmatprep.subr.bf16.mxu0 0
  %73 = vmatpush1.bf16.msra.mxu0 0
  %74 = vmatprep.subr.bf16.mxu0 0
  %75 = vmatpush1.bf16.msra.mxu0 0
  %76 = vmatprep.subr.bf16.mxu0 0
  %77 = vmatpush1.bf16.msra.mxu0 0
  %78 = vmatprep.subr.bf16.mxu0 0
  %79 = vmatpush1.bf16.msra.mxu0 0
  %80 = vmatprep.subr.bf16.mxu0 0
  %81 = vmatpush1.bf16.msra.mxu0 0
  %82 = vmatprep.subr.bf16.mxu0 0
  %83 = vmatpush1.bf16.msra.mxu0 0
  %84 = vmatprep.subr.bf16.mxu0 0
  %85 = vmatpush1.bf16.msra.mxu0 0
  %86 = vmatprep.subr.bf16.mxu0 0
  %87 = vmatpush1.bf16.msra.mxu0 0
  %88 = vmatprep.subr.bf16.mxu0 0
  %89 = vmatpush1.bf16.msra.mxu0 0
  %90 = vmatprep.subr.bf16.mxu0 0
  %91 = vmatpush1.bf16.msra.mxu0 0
  %92 = vmatprep.subr.bf16.mxu0 0
  %93 = vmatpush1.bf16.msra.mxu0 0
  %94 = vmatprep.subr.bf16.mxu0 0
  %95 = vmatpush1.bf16.msra.mxu0 0
  %96 = vmatprep.subr.bf16.mxu0 0
  %97 = vmatpush1.bf16.msra.mxu0 0
  %98 = vmatprep.mubr.bf16.mxu0 0
  %99 = vmatmul.mubr.bf16.gmra.mrb[0].mxu0 %v64
  %v100 = vpop.f32.mrb[0].mxu0
  %v101 = vadd.f32 %v25, %v100
  %v102 = vpop.f32.mrb[0].mxu0
  %v103 = vadd.f32 %v29, %v102
  %v104 = vpop.f32.mrb[0].mxu0
  %v105 = vpop.f32.mrb[0].mxu0
  %106 = vdwg.mxu0
  %107 = vmatprep.subr.bf16.mxu0 %v57
  %108 = vmatpush1.bf16.msra.mxu0 %v56
  %109 = vmatprep.subr.bf16.mxu0 0
  %110 = vmatpush1.bf16.msra.mxu0 0
  %111 = vmatprep.subr.bf16.mxu0 0
  %112 = vmatpush1.bf16.msra.mxu0 0
  %113 = vmatprep.subr.bf16.mxu0 0
  %114 = vmatpush1.bf16.msra.mxu0 0
  %115 = vmatprep.subr.bf16.mxu0 0
  %116 = vmatpush1.bf16.msra.mxu0 0
  %117 = vmatprep.subr.bf16.mxu0 0
  %118 = vmatpush1.bf16.msra.mxu0 0
  %119 = vmatprep.subr.bf16.mxu0 0
  %120 = vmatpush1.bf16.msra.mxu0 0
  %121 = vmatprep.subr.bf16.mxu0 0
  %122 = vmatpush1.bf16.msra.mxu0 0
  %123 = vmatprep.subr.bf16.mxu0 0
  %124 = vmatpush1.bf16.msra.mxu0 0
  %125 = vmatprep.subr.bf16.mxu0 0
  %126 = vmatpush1.bf16.msra.mxu0 0
  %127 = vmatprep.subr.bf16.mxu0 0
  %128 = vmatpush1.bf16.msra.mxu0 0
  %129 = vmatprep.subr.bf16.mxu0 0
  %130 = vmatpush1.bf16.msra.mxu0 0
  %131 = vmatprep.subr.bf16.mxu0 0
  %132 = vmatpush1.bf16.msra.mxu0 0
  %133 = vmatprep.subr.bf16.mxu0 0
  %134 = vmatpush1.bf16.msra.mxu0 0
  %135 = vmatprep.subr.bf16.mxu0 0
  %136 = vmatpush1.bf16.msra.mxu0 0
  %137 = vmatprep.subr.bf16.mxu0 0
  %138 = vmatpush1.bf16.msra.mxu0 0
  %139 = vmatprep.mubr.bf16.mxu0 0
  %140 = vmatmul.mubr.bf16.gmra.mrb[0].mxu0 %v64
  %v141 = vpop.f32.mrb[0].mxu0
  %v142 = vadd.f32 %v33, %v141
  %v143 = vpop.f32.mrb[0].mxu0
  %v144 = vadd.f32 %v37, %v143
  %v145 = vpop.f32.mrb[0].mxu0
  %v146 = vpop.f32.mrb[0].mxu0
  %147 = vdwg.mxu0
  %v152 = vcombine.low %v101, %v103
  %v153 = vcombine.low %v142, %v144
  %156 = vst [vmem:[%s3] sm:$0xff] %v152
  %157 = vst [vmem:[%s3 + $0x8] sm:$0xff] %v153
  // Predicated region
  $region14: #{static_unconditional_gan_forward.9} parent=0 // pred_check
    _
  $region15: #{static_unconditional_gan_forward.9} parent=0 // pred_check_branch
    %159 = sbr.rel (0) target = $region17
  $region16: #{static_unconditional_gan_forward.9} parent=0 // pred_region
    _
  $region17: #{static_unconditional_gan_forward.9} parent=0 // pred_fallthru
    _
  // Predicated region
  $region18: #{static_unconditional_gan_forward.9} parent=0 // pred_check
    _
  $region19: #{static_unconditional_gan_forward.9} parent=0 // pred_check_branch
    %161 = sbr.rel (0) target = $region21
  $region20: #{static_unconditional_gan_forward.9} parent=0 // pred_region
    _
  $region21: #{static_unconditional_gan_forward.9} parent=0 // pred_fallthru
    _

// kernel: static_unconditional_gan_forward.10
$region0: #{static_unconditional_gan_forward.10}
  #allocation0 [shape = 'u32[]', space=smem, size = 0x4, offset = 0x4, fixed_abs, tag = 'smem constant byte address 0x4 - core index']
  #allocation1 [shape = 'u32[144,128]{1,0:T(1,128)}', space=vmem, size = 0x12000, scoped, tag = 'internal scratch']
  %s0 = inlined_call_operand.vmem [shape: f32[64,32], index: 0, kind: input, shape index: {}]
  %s1 = inlined_call_operand.hbm [shape: f32[1,32], index: 1, kind: input, shape index: {}]
  %s2 = inlined_call_operand.hbm [shape: f32[1,32], index: 2, kind: input, shape index: {}]
  %s3 = inlined_call_operand.vmem [shape: f32[64,32], index: 3, kind: output, shape index: {}]
  %s4 = sld [smem:[#allocation0]]
  $region53: #{static_unconditional_gan_forward.10} parent=0
    _
  %s6 = ssub.s32 1, %s4
  %s7 = scalar_select 0, %s6, %s4
  $region1: #{static_unconditional_gan_forward.10} parent=0
    #allocation2 [shape = 'u8[512]{0}', space=vmem, size = 0x400, scoped, tag = 'input window, operand 1, single buffered']
    #allocation3 [shape = 's32[2]{0}', space=sflag, size = 0x8, scoped, tag = 'scoped memory for static_unconditional_gan_forward.10']
    #allocation4 [shape = 'u8[512]{0}', space=vmem, size = 0x400, scoped, tag = 'input window, operand 2, single buffered']
    #allocation5 [shape = 's32[1]{0}', space=sflag, size = 0x4, scoped, tag = 'scoped memory for static_unconditional_gan_forward.10']
    %8 = vsyncpa [#allocation3], 0
    %9 = vsyncpa [#allocation5], 0
    loop: start=0, step=1, limit=4
    $region2: #{static_unconditional_gan_forward.10} parent=1 // loop_pre_header
      _
    $region3: #{static_unconditional_gan_forward.10} parent=1 // loop_header
      %s11 = sphi 0, %s15
      %p12 = scmp.ge.s32.totalorder %s11, 4
      %s21 = sphi 0, %s23
      %s24 = sphi 0, %s21
      %s25 = sphi 0, %s24
      %s41 = sphi 0, %s25
      %s45 = sphi 0, %s45
      %s47 = sphi 0, %s45
      %s48 = sphi 0, %s47
      %s62 = sphi 0, %s48
      %s66 = sphi 0, %s66
      %s68 = sphi 0, %s66
      %s69 = sphi 0, %s68
      %s83 = sphi 0, %s69
      %s89 = sphi 0, %s91
      %s92 = sphi 0, %s89
      %s93 = sphi 0, %s92
      %s109 = sphi 0, %s93
    $region4: #{static_unconditional_gan_forward.10} parent=1 // loop_header_branch
      %14 = sbr.rel (%p12) target = $region8
    $region5: #{static_unconditional_gan_forward.10} parent=1 // loop_body
      %s16 = ssub.s32 %s11, 1
      %s17 = ssub.s32 %s11, 2
      %s18 = sadd.s32 %s11, 1
      %s19 = ssub.s32 %s11, %s18
      %p20 = scmp.eq.s32.totalorder %s19, 0
      %s22 = sadd.s32 %s21, 1
      %s23 = scalar_select %p20, %s21, %s22
      %p26 = pneg %p20
      %p27 = scmp.eq.s32.totalorder %s11, 1
      %p28 = por %p26, %p27
      %p29 = scmp.ne.s32.totalorder %s21, %s24
      %p30 = scmp.eq.s32.totalorder %s11, 0
      %p31 = por %p29, %p30
      %p32 = scmp.ne.s32.totalorder %s21, %s24
      %p33 = scmp.eq.s32.totalorder %s16, 1
      %p34 = por %p32, %p33
      %p35 = scmp.ne.s32.totalorder %s24, %s25
      %p36 = scmp.eq.s32.totalorder %s16, 0
      %p37 = por %p35, %p36
      %p38 = scmp.ne.s32.totalorder %s24, %s25
      %p39 = scmp.eq.s32.totalorder %s17, 1
      %p40 = por %p38, %p39
      %p42 = scmp.ne.s32.totalorder %s25, %s41
      %p43 = scmp.eq.s32.totalorder %s17, 0
      %p44 = por %p42, %p43
      %s46 = sadd.s32 %s45, 1
      %p49 = scmp.eq.s32.totalorder %s11, 1
      %p50 = scmp.ne.s32.totalorder %s45, %s47
      %p51 = scmp.eq.s32.totalorder %s11, 0
      %p52 = por %p50, %p51
      %p53 = scmp.ne.s32.totalorder %s45, %s47
      %p54 = scmp.eq.s32.totalorder %s16, 1
      %p55 = por %p53, %p54
      %p56 = scmp.ne.s32.totalorder %s47, %s48
      %p57 = scmp.eq.s32.totalorder %s16, 0
      %p58 = por %p56, %p57
      %p59 = scmp.ne.s32.totalorder %s47, %s48
      %p60 = scmp.eq.s32.totalorder %s17, 1
      %p61 = por %p59, %p60
      %p63 = scmp.ne.s32.totalorder %s48, %s62
      %p64 = scmp.eq.s32.totalorder %s17, 0
      %p65 = por %p63, %p64
      %s67 = sadd.s32 %s66, 1
      %p70 = scmp.eq.s32.totalorder %s11, 1
      %p71 = scmp.ne.s32.totalorder %s66, %s68
      %p72 = scmp.eq.s32.totalorder %s11, 0
      %p73 = por %p71, %p72
      %p74 = scmp.ne.s32.totalorder %s66, %s68
      %p75 = scmp.eq.s32.totalorder %s16, 1
      %p76 = por %p74, %p75
      %p77 = scmp.ne.s32.totalorder %s68, %s69
      %p78 = scmp.eq.s32.totalorder %s16, 0
      %p79 = por %p77, %p78
      %p80 = scmp.ne.s32.totalorder %s68, %s69
      %p81 = scmp.eq.s32.totalorder %s17, 1
      %p82 = por %p80, %p81
      %p84 = scmp.ne.s32.totalorder %s69, %s83
      %p85 = scmp.eq.s32.totalorder %s17, 0
      %p86 = por %p84, %p85
      %s87 = ssub.s32 %s11, %s18
      %p88 = scmp.eq.s32.totalorder %s87, 0
      %s90 = sadd.s32 %s89, 1
      %s91 = scalar_select %p88, %s89, %s90
      %p94 = pneg %p88
      %p95 = scmp.eq.s32.totalorder %s11, 1
      %p96 = por %p94, %p95
      %p97 = scmp.ne.s32.totalorder %s89, %s92
      %p98 = scmp.eq.s32.totalorder %s11, 0
      %p99 = por %p97, %p98
      %p100 = scmp.ne.s32.totalorder %s89, %s92
      %p101 = scmp.eq.s32.totalorder %s16, 1
      %p102 = por %p100, %p101
      %p103 = scmp.ne.s32.totalorder %s92, %s93
      %p104 = scmp.eq.s32.totalorder %s16, 0
      %p105 = por %p103, %p104
      %p106 = scmp.ne.s32.totalorder %s92, %s93
      %p107 = scmp.eq.s32.totalorder %s17, 1
      %p108 = por %p106, %p107
      %p110 = scmp.ne.s32.totalorder %s93, %s109
      %p111 = scmp.eq.s32.totalorder %s17, 0
      %p112 = por %p110, %p111
      %p113 = scmp.le.s32.totalorder 1, %s11
      %p114 = scmp.lt.s32.totalorder %s11, 3
      %p115 = pnand %p113, %p114
      %p116 = pneg %p115
      // Predicated region
      $region9: #{static_unconditional_gan_forward.10} parent=5 // pred_check
        _
      $region10: #{static_unconditional_gan_forward.10} parent=5 // pred_check_branch
        %118 = sbr.rel (%p115) target = $region12
      $region11: #{static_unconditional_gan_forward.10} parent=5 // pred_region
        %s119 = ssub.s32 %s11, 1
        // Predicated region
        $region13: #{static_unconditional_gan_forward.10} parent=11 // pred_check
          %p120 = pneg %p58
        $region14: #{static_unconditional_gan_forward.10} parent=11 // pred_check_branch
          %122 = sbr.rel (%p120) target = $region16
        $region15: #{static_unconditional_gan_forward.10} parent=11 // pred_region
          %s124 = ssub.s32 16, 16
          %125 = vsyncadd [#allocation3], %s124
          %s127 = sshll.u32 [#allocation2], 4
          %s128 = int_to_ptr.vmem [resolvable:$true] %s127
          %130 = dma.hbm_to_vmem [thread:$0]  %s1, 16, %s128, [#allocation3]
        $region16: #{static_unconditional_gan_forward.10} parent=11 // pred_fallthru
          _
        // Predicated region
        $region17: #{static_unconditional_gan_forward.10} parent=11 // pred_check
          %p131 = pneg %p79
        $region18: #{static_unconditional_gan_forward.10} parent=11 // pred_check_branch
          %133 = sbr.rel (%p131) target = $region20
        $region19: #{static_unconditional_gan_forward.10} parent=11 // pred_region
          %s135 = ssub.s32 16, 16
          %136 = vsyncadd [#allocation5], %s135
          %s138 = sshll.u32 [#allocation4], 4
          %s139 = int_to_ptr.vmem [resolvable:$true] %s138
          %141 = dma.hbm_to_vmem [thread:$0]  %s2, 16, %s139, [#allocation5]
        $region20: #{static_unconditional_gan_forward.10} parent=11 // pred_fallthru
          _
      $region12: #{static_unconditional_gan_forward.10} parent=5 // pred_fallthru
        _
      %p142 = scmp.lt.s32.totalorder %s11, 2
      // Predicated region
      $region21: #{static_unconditional_gan_forward.10} parent=5 // pred_check
        %p143 = pneg %p142
      $region22: #{static_unconditional_gan_forward.10} parent=5 // pred_check_branch
        %145 = sbr.rel (%p143) target = $region24
      $region23: #{static_unconditional_gan_forward.10} parent=5 // pred_region
        // Predicated region
        $region25: #{static_unconditional_gan_forward.10} parent=23 // pred_check
          %p146 = pneg %p31
        $region26: #{static_unconditional_gan_forward.10} parent=23 // pred_check_branch
          %148 = sbr.rel (%p146) target = $region28
        $region27: #{static_unconditional_gan_forward.10} parent=23 // pred_region
          %s149 = smul.u32 4, %s11
          %p150 = scmp.lt.s32.totalorder %s149, 7
          %s151 = scalar_select %p150, %s149, 7
          %s152 = smul.addr %s151, 8
          %s153 = scalar_lea.vmem %s0, %s152
          %s154 = smul.u32 4, %s11
        $region28: #{static_unconditional_gan_forward.10} parent=23 // pred_fallthru
          _
      $region24: #{static_unconditional_gan_forward.10} parent=5 // pred_fallthru
        _
      %p155 = scmp.le.s32.totalorder 1, %s11
      %p156 = scmp.lt.s32.totalorder %s11, 3
      %p157 = pnand %p155, %p156
      %p158 = pneg %p157
      // Predicated region
      $region29: #{static_unconditional_gan_forward.10} parent=5 // pred_check
        _
      $region30: #{static_unconditional_gan_forward.10} parent=5 // pred_check_branch
        %160 = sbr.rel (%p157) target = $region32
      $region31: #{static_unconditional_gan_forward.10} parent=5 // pred_region
        %s161 = ssub.s32 %s11, 1
        // Predicated region
        $region33: #{static_unconditional_gan_forward.10} parent=31 // pred_check
          %p162 = pneg %p58
        $region34: #{static_unconditional_gan_forward.10} parent=31 // pred_check_branch
          %164 = sbr.rel (%p162) target = $region36
        $region35: #{static_unconditional_gan_forward.10} parent=31 // pred_region
          %165 = dma.done [#allocation3], 16
        $region36: #{static_unconditional_gan_forward.10} parent=31 // pred_fallthru
          _
        // Predicated region
        $region37: #{static_unconditional_gan_forward.10} parent=31 // pred_check
          %p166 = pneg %p79
        $region38: #{static_unconditional_gan_forward.10} parent=31 // pred_check_branch
          %168 = sbr.rel (%p166) target = $region40
        $region39: #{static_unconditional_gan_forward.10} parent=31 // pred_region
          %169 = dma.done [#allocation5], 16
        $region40: #{static_unconditional_gan_forward.10} parent=31 // pred_fallthru
          _
        %s170 = smul.u32 4, %s16
        %p171 = scmp.lt.s32.totalorder %s170, 7
        %s172 = scalar_select %p171, %s170, 7
        %s173 = smul.addr %s172, 8
        %s174 = scalar_lea.vmem %s0, %s173
        %p175 = pneg %p37
        %p176 = pneg %p34
        %p177 = pneg %p58
        %p178 = pneg %p55
        %p179 = pneg %p79
        %p180 = pneg %p76
        %p181 = pneg %p105
        %p182 = pneg %p102
        %s183 = smul.u32 4, %s16
        %p184 = scmp.lt.s32.totalorder %s183, 7
        %s185 = scalar_select %p184, %s183, 7
        %s186 = smul.addr %s185, 8
        %s187 = scalar_lea.vmem %s3, %s186
        %s188 = smul.u32 4, %s16
        %p189 = scmp.lt.s32.totalorder %s188, 7
        %s190 = scalar_select %p189, %s188, 7
        %s191 = smul.addr %s190, 8
        %s192 = scalar_lea.vmem %s0, %s191
        %s193 = smul.u32 4, %s16
        %s194 = smul.u32 4, %s16
        %p195 = scmp.lt.s32.totalorder %s194, 7
        %s196 = scalar_select %p195, %s194, 7
        %s197 = smul.addr %s196, 8
        %s198 = scalar_lea.vmem %s3, %s197
        %s199 = smul.u32 4, %s16
        %v200 = vld [vmem:[%s192] sm:$0xff]
        %v201 = vld [vmem:[%s192 + $0x8] sm:$0xff]
        %v202 = vld [vmem:[%s192 + $0x10] sm:$0xff]
        %v203 = vld [vmem:[%s192 + $0x18] sm:$0xff]
        %vm204 = vcmask 261120
        %v205 = vsel %vm204, %v200, 0.0
        %v206 = vsel %vm204, %v201, 0.0
        %v207 = vadd.f32 %v205, %v206
        %v208 = vsel %vm204, %v202, 0.0
        %v209 = vadd.f32 %v207, %v208
        %v210 = vsel %vm204, %v203, 0.0
        %v211 = vadd.f32 %v209, %v210
        %v212 = vrot.slane %v211, 4
        %v213 = vadd.f32 %v211, %v212
        %v214 = vrot.slane %v213, 2
        %v215 = vadd.f32 %v213, %v214
        %v216 = vrot.slane %v215, 1
        %v217 = vadd.f32 %v215, %v216
        %v218 = vrcp.pop 32.0
        %v219 = vmul.f32 %v217, %v218
        %v220 = vsub.f32 %v200, %v219
        %v221 = vsub.f32 %v201, %v219
        %v222 = vsub.f32 %v202, %v219
        %v223 = vsub.f32 %v203, %v219
        %v224 = vmul.f32 %v220, %v220
        %v225 = vmul.f32 %v221, %v221
        %v226 = vmul.f32 %v222, %v222
        %v227 = vmul.f32 %v223, %v223
        %v228 = vsel %vm204, %v224, 0.0
        %v229 = vsel %vm204, %v225, 0.0
        %v230 = vadd.f32 %v228, %v229
        %v231 = vsel %vm204, %v226, 0.0
        %v232 = vadd.f32 %v230, %v231
        %v233 = vsel %vm204, %v227, 0.0
        %v234 = vadd.f32 %v232, %v233
        %v235 = vrot.slane %v234, 4
        %v236 = vadd.f32 %v234, %v235
        %v237 = vrot.slane %v236, 2
        %v238 = vadd.f32 %v236, %v237
        %v239 = vrot.slane %v238, 1
        %v240 = vadd.f32 %v238, %v239
        %v241 = vmul.f32 %v240, %v218
        %v242 = vadd.f32 %v241, 1e-05
        %v243 = vrsqrt.pop %v242
        %v244 = vmul.f32 %v220, %v243
        %v245 = vmul.f32 %v221, %v243
        %v246 = vmul.f32 %v222, %v243
        %v247 = vmul.f32 %v223, %v243
        %v248 = vld [vmem:[#allocation2] sm:$0x1]
        %v250 = vlaneseq
        %v251 = vshrl.u32 %v250, 7
        %v252 = vsub.s32 0, %v251
        %v253 = vrot.slane %v248, %v252
        %v255 = vmul.f32 %v244, %v253
        %v256 = vmul.f32 %v245, %v253
        %v257 = vmul.f32 %v246, %v253
        %v258 = vmul.f32 %v247, %v253
        %v259 = vld [vmem:[#allocation4] sm:$0x1]
        %v261 = vlaneseq
        %v262 = vshrl.u32 %v261, 7
        %v263 = vsub.s32 0, %v262
        %v264 = vrot.slane %v259, %v263
        %v266 = vadd.f32 %v255, %v264
        %v267 = vadd.f32 %v256, %v264
        %v268 = vadd.f32 %v257, %v264
        %v269 = vadd.f32 %v258, %v264
        %v270 = vmax.f32 %v266, 0.0
        %v271 = vmax.f32 %v267, 0.0
        %v272 = vmax.f32 %v268, 0.0
        %v273 = vmax.f32 %v269, 0.0
        %274 = vst.msk [vmem:[%s198] sm:$0xff] %vm204, %v270
        %275 = vst.msk [vmem:[%s198 + $0x8] sm:$0xff] %vm204, %v271
        %276 = vst.msk [vmem:[%s198 + $0x10] sm:$0xff] %vm204, %v272
        %277 = vst.msk [vmem:[%s198 + $0x18] sm:$0xff] %vm204, %v273
        %s278 = smul.u32 4, %s16
        %p279 = scmp.lt.s32.totalorder %s278, 7
        %s280 = scalar_select %p279, %s278, 7
        %s281 = smul.addr %s280, 8
        %s282 = scalar_lea.vmem %s3, %s281
        // Predicated region
        $region41: #{static_unconditional_gan_forward.10} parent=31 // pred_check
          %p283 = pneg %p102
        $region42: #{static_unconditional_gan_forward.10} parent=31 // pred_check_branch
          %285 = sbr.rel (%p283) target = $region44
        $region43: #{static_unconditional_gan_forward.10} parent=31 // pred_region
          %s286 = smul.u32 4, %s16
        $region44: #{static_unconditional_gan_forward.10} parent=31 // pred_fallthru
          _
      $region32: #{static_unconditional_gan_forward.10} parent=5 // pred_fallthru
        _
      %p287 = scmp.le.s32.totalorder 2, %s11
      // Predicated region
      $region45: #{static_unconditional_gan_forward.10} parent=5 // pred_check
        %p288 = pneg %p287
      $region46: #{static_unconditional_gan_forward.10} parent=5 // pred_check_branch
        %290 = sbr.rel (%p288) target = $region48
      $region47: #{static_unconditional_gan_forward.10} parent=5 // pred_region
        %s291 = ssub.s32 %s11, 2
        // Predicated region
        $region49: #{static_unconditional_gan_forward.10} parent=47 // pred_check
          %p292 = pneg %p108
        $region50: #{static_unconditional_gan_forward.10} parent=47 // pred_check_branch
          %294 = sbr.rel (%p292) target = $region52
        $region51: #{static_unconditional_gan_forward.10} parent=47 // pred_region
          %s295 = smul.u32 4, %s17
          %p296 = scmp.lt.s32.totalorder %s295, 7
          %s297 = scalar_select %p296, %s295, 7
          %s298 = smul.addr %s297, 8
          %s299 = scalar_lea.vmem %s3, %s298
        $region52: #{static_unconditional_gan_forward.10} parent=47 // pred_fallthru
          _
      $region48: #{static_unconditional_gan_forward.10} parent=5 // pred_fallthru
        _
    $region6: #{static_unconditional_gan_forward.10} parent=1 // loop_footer
      %s15 = sadd.s32 1, %s11
    $region7: #{static_unconditional_gan_forward.10} parent=1 // loop_footer_branch
      %10 = sbr.rel target = $region3
    $region8: #{static_unconditional_gan_forward.10} parent=1 // loop_exit
      _
    %300 = vsyncpa [#allocation3], 1
    %s301 = scalar_lea.sflag [#allocation3], 1
    %302 = vsyncpa %s301, 1
    %303 = vsyncpa [#allocation5], 1

// kernel: static_unconditional_gan_forward.11
$region0: #{static_unconditional_gan_forward.11}
  #allocation0 [shape = 'u32[]', space=smem, size = 0x4, offset = 0x4, fixed_abs, tag = 'smem constant byte address 0x4 - core index']
  #allocation1 [shape = 'u32[144,128]{1,0:T(1,128)}', space=vmem, size = 0x12000, scoped, tag = 'internal scratch']
  %s0 = inlined_call_operand.vmem [shape: bf16[256,512], index: 0, kind: input, shape index: {}]
  %s1 = inlined_call_operand.vmem [shape: bf16[512,128], index: 1, kind: input, shape index: {}]
  %s2 = inlined_call_operand.vmem [shape: f32[1,128], index: 2, kind: input, shape index: {}]
  %s3 = inlined_call_operand.vmem [shape: f32[1,128], index: 3, kind: input, shape index: {}]
  %s4 = inlined_call_operand.vmem [shape: f32[1,128], index: 4, kind: input, shape index: {}]
  %s5 = inlined_call_operand.vmem [shape: f32[256,128], index: 5, kind: output, shape index: {}]
  %s6 = sld [smem:[#allocation0]]
  $region53: #{static_unconditional_gan_forward.11} parent=0
    _
  %s8 = ssub.s32 1, %s6
  %s9 = scalar_select 0, %s8, %s6
  loop: start=0, step=1, limit=4
  $region2: #{static_unconditional_gan_forward.11} parent=0 // loop_pre_header
    _
  $region3: #{static_unconditional_gan_forward.11} parent=0 // loop_header
    %s11 = sphi 0, %s15
    %p12 = scmp.ge.s32.totalorder %s11, 4
    %s21 = sphi 0, %s23
    %s24 = sphi 0, %s21
    %s25 = sphi 0, %s24
    %s41 = sphi 0, %s25
    %s45 = sphi 0, %s45
    %s47 = sphi 0, %s45
    %s48 = sphi 0, %s47
    %s62 = sphi 0, %s48
    %s66 = sphi 0, %s66
    %s68 = sphi 0, %s66
    %s69 = sphi 0, %s68
    %s83 = sphi 0, %s69
    %s87 = sphi 0, %s87
    %s89 = sphi 0, %s87
    %s90 = sphi 0, %s89
    %s104 = sphi 0, %s90
    %s108 = sphi 0, %s108
    %s110 = sphi 0, %s108
    %s111 = sphi 0, %s110
    %s125 = sphi 0, %s111
    %s131 = sphi 0, %s133
    %s134 = sphi 0, %s131
    %s135 = sphi 0, %s134
    %s151 = sphi 0, %s135
  $region4: #{static_unconditional_gan_forward.11} parent=0 // loop_header_branch
    %14 = sbr.rel (%p12) target = $region8
  $region5: #{static_unconditional_gan_forward.11} parent=0 // loop_body
    %s16 = ssub.s32 %s11, 1
    %s17 = ssub.s32 %s11, 2
    %s18 = sadd.s32 %s11, 1
    %s19 = ssub.s32 %s11, %s18
    %p20 = scmp.eq.s32.totalorder %s19, 0
    %s22 = sadd.s32 %s21, 1
    %s23 = scalar_select %p20, %s21, %s22
    %p26 = pneg %p20
    %p27 = scmp.eq.s32.totalorder %s11, 1
    %p28 = por %p26, %p27
    %p29 = scmp.ne.s32.totalorder %s21, %s24
    %p30 = scmp.eq.s32.totalorder %s11, 0
    %p31 = por %p29, %p30
    %p32 = scmp.ne.s32.totalorder %s21, %s24
    %p33 = scmp.eq.s32.totalorder %s16, 1
    %p34 = por %p32, %p33
    %p35 = scmp.ne.s32.totalorder %s24, %s25
    %p36 = scmp.eq.s32.totalorder %s16, 0
    %p37 = por %p35, %p36
    %p38 = scmp.ne.s32.totalorder %s24, %s25
    %p39 = scmp.eq.s32.totalorder %s17, 1
    %p40 = por %p38, %p39
    %p42 = scmp.ne.s32.totalorder %s25, %s41
    %p43 = scmp.eq.s32.totalorder %s17, 0
    %p44 = por %p42, %p43
    %s46 = sadd.s32 %s45, 1
    %p49 = scmp.eq.s32.totalorder %s11, 1
    %p50 = scmp.ne.s32.totalorder %s45, %s47
    %p51 = scmp.eq.s32.totalorder %s11, 0
    %p52 = por %p50, %p51
    %p53 = scmp.ne.s32.totalorder %s45, %s47
    %p54 = scmp.eq.s32.totalorder %s16, 1
    %p55 = por %p53, %p54
    %p56 = scmp.ne.s32.totalorder %s47, %s48
    %p57 = scmp.eq.s32.totalorder %s16, 0
    %p58 = por %p56, %p57
    %p59 = scmp.ne.s32.totalorder %s47, %s48
    %p60 = scmp.eq.s32.totalorder %s17, 1
    %p61 = por %p59, %p60
    %p63 = scmp.ne.s32.totalorder %s48, %s62
    %p64 = scmp.eq.s32.totalorder %s17, 0
    %p65 = por %p63, %p64
    %s67 = sadd.s32 %s66, 1
    %p70 = scmp.eq.s32.totalorder %s11, 1
    %p71 = scmp.ne.s32.totalorder %s66, %s68
    %p72 = scmp.eq.s32.totalorder %s11, 0
    %p73 = por %p71, %p72
    %p74 = scmp.ne.s32.totalorder %s66, %s68
    %p75 = scmp.eq.s32.totalorder %s16, 1
    %p76 = por %p74, %p75
    %p77 = scmp.ne.s32.totalorder %s68, %s69
    %p78 = scmp.eq.s32.totalorder %s16, 0
    %p79 = por %p77, %p78
    %p80 = scmp.ne.s32.totalorder %s68, %s69
    %p81 = scmp.eq.s32.totalorder %s17, 1
    %p82 = por %p80, %p81
    %p84 = scmp.ne.s32.totalorder %s69, %s83
    %p85 = scmp.eq.s32.totalorder %s17, 0
    %p86 = por %p84, %p85
    %s88 = sadd.s32 %s87, 1
    %p91 = scmp.eq.s32.totalorder %s11, 1
    %p92 = scmp.ne.s32.totalorder %s87, %s89
    %p93 = scmp.eq.s32.totalorder %s11, 0
    %p94 = por %p92, %p93
    %p95 = scmp.ne.s32.totalorder %s87, %s89
    %p96 = scmp.eq.s32.totalorder %s16, 1
    %p97 = por %p95, %p96
    %p98 = scmp.ne.s32.totalorder %s89, %s90
    %p99 = scmp.eq.s32.totalorder %s16, 0
    %p100 = por %p98, %p99
    %p101 = scmp.ne.s32.totalorder %s89, %s90
    %p102 = scmp.eq.s32.totalorder %s17, 1
    %p103 = por %p101, %p102
    %p105 = scmp.ne.s32.totalorder %s90, %s104
    %p106 = scmp.eq.s32.totalorder %s17, 0
    %p107 = por %p105, %p106
    %s109 = sadd.s32 %s108, 1
    %p112 = scmp.eq.s32.totalorder %s11, 1
    %p113 = scmp.ne.s32.totalorder %s108, %s110
    %p114 = scmp.eq.s32.totalorder %s11, 0
    %p115 = por %p113, %p114
    %p116 = scmp.ne.s32.totalorder %s108, %s110
    %p117 = scmp.eq.s32.totalorder %s16, 1
    %p118 = por %p116, %p117
    %p119 = scmp.ne.s32.totalorder %s110, %s111
    %p120 = scmp.eq.s32.totalorder %s16, 0
    %p121 = por %p119, %p120
    %p122 = scmp.ne.s32.totalorder %s110, %s111
    %p123 = scmp.eq.s32.totalorder %s17, 1
    %p124 = por %p122, %p123
    %p126 = scmp.ne.s32.totalorder %s111, %s125
    %p127 = scmp.eq.s32.totalorder %s17, 0
    %p128 = por %p126, %p127
    %s129 = ssub.s32 %s11, %s18
    %p130 = scmp.eq.s32.totalorder %s129, 0
    %s132 = sadd.s32 %s131, 1
    %s133 = scalar_select %p130, %s131, %s132
    %p136 = pneg %p130
    %p137 = scmp.eq.s32.totalorder %s11, 1
    %p138 = por %p136, %p137
    %p139 = scmp.ne.s32.totalorder %s131, %s134
    %p140 = scmp.eq.s32.totalorder %s11, 0
    %p141 = por %p139, %p140
    %p142 = scmp.ne.s32.totalorder %s131, %s134
    %p143 = scmp.eq.s32.totalorder %s16, 1
    %p144 = por %p142, %p143
    %p145 = scmp.ne.s32.totalorder %s134, %s135
    %p146 = scmp.eq.s32.totalorder %s16, 0
    %p147 = por %p145, %p146
    %p148 = scmp.ne.s32.totalorder %s134, %s135
    %p149 = scmp.eq.s32.totalorder %s17, 1
    %p150 = por %p148, %p149
    %p152 = scmp.ne.s32.totalorder %s135, %s151
    %p153 = scmp.eq.s32.totalorder %s17, 0
    %p154 = por %p152, %p153
    %p155 = scmp.le.s32.totalorder 1, %s11
    %p156 = scmp.lt.s32.totalorder %s11, 3
    %p157 = pnand %p155, %p156
    %p158 = pneg %p157
    // Predicated region
    $region9: #{static_unconditional_gan_forward.11} parent=5 // pred_check
      _
    $region10: #{static_unconditional_gan_forward.11} parent=5 // pred_check_branch
      %160 = sbr.rel (%p157) target = $region12
    $region11: #{static_unconditional_gan_forward.11} parent=5 // pred_region
      %s161 = ssub.s32 %s11, 1
      // Predicated region
      $region13: #{static_unconditional_gan_forward.11} parent=11 // pred_check
        %p162 = pneg %p58
      $region14: #{static_unconditional_gan_forward.11} parent=11 // pred_check_branch
        %164 = sbr.rel (%p162) target = $region16
      $region15: #{static_unconditional_gan_forward.11} parent=11 // pred_region
        _
      $region16: #{static_unconditional_gan_forward.11} parent=11 // pred_fallthru
        _
      // Predicated region
      $region17: #{static_unconditional_gan_forward.11} parent=11 // pred_check
        %p165 = pneg %p79
      $region18: #{static_unconditional_gan_forward.11} parent=11 // pred_check_branch
        %167 = sbr.rel (%p165) target = $region20
      $region19: #{static_unconditional_gan_forward.11} parent=11 // pred_region
        _
      $region20: #{static_unconditional_gan_forward.11} parent=11 // pred_fallthru
        _
      // Predicated region
      $region21: #{static_unconditional_gan_forward.11} parent=11 // pred_check
        %p168 = pneg %p100
      $region22: #{static_unconditional_gan_forward.11} parent=11 // pred_check_branch
        %170 = sbr.rel (%p168) target = $region24
      $region23: #{static_unconditional_gan_forward.11} parent=11 // pred_region
        _
      $region24: #{static_unconditional_gan_forward.11} parent=11 // pred_fallthru
        _
      // Predicated region
      $region25: #{static_unconditional_gan_forward.11} parent=11 // pred_check
        %p171 = pneg %p121
      $region26: #{static_unconditional_gan_forward.11} parent=11 // pred_check_branch
        %173 = sbr.rel (%p171) target = $region28
      $region27: #{static_unconditional_gan_forward.11} parent=11 // pred_region
        _
      $region28: #{static_unconditional_gan_forward.11} parent=11 // pred_fallthru
        _
    $region12: #{static_unconditional_gan_forward.11} parent=5 // pred_fallthru
      _
    %p174 = scmp.lt.s32.totalorder %s11, 2
    // Predicated region
    $region29: #{static_unconditional_gan_forward.11} parent=5 // pred_check
      %p175 = pneg %p174
    $region30: #{static_unconditional_gan_forward.11} parent=5 // pred_check_branch
      %177 = sbr.rel (%p175) target = $region32
    $region31: #{static_unconditional_gan_forward.11} parent=5 // pred_region
      // Predicated region
      $region33: #{static_unconditional_gan_forward.11} parent=31 // pred_check
        %p178 = pneg %p31
      $region34: #{static_unconditional_gan_forward.11} parent=31 // pred_check_branch
        %180 = sbr.rel (%p178) target = $region36
      $region35: #{static_unconditional_gan_forward.11} parent=31 // pred_region
        %s181 = smul.u32 16, %s11
        %p182 = scmp.lt.s32.totalorder %s181, 31
        %s183 = scalar_select %p182, %s181, 31
        %s184 = smul.addr %s183, 4
        %s185 = smul.addr %s184, 4
        %s186 = scalar_lea.vmem %s0, %s185
        %s187 = smul.u32 16, %s11
      $region36: #{static_unconditional_gan_forward.11} parent=31 // pred_fallthru
        _
    $region32: #{static_unconditional_gan_forward.11} parent=5 // pred_fallthru
      _
    %p188 = scmp.le.s32.totalorder 1, %s11
    %p189 = scmp.lt.s32.totalorder %s11, 3
    %p190 = pnand %p188, %p189
    %p191 = pneg %p190
    // Predicated region
    $region37: #{static_unconditional_gan_forward.11} parent=5 // pred_check
      _
    $region38: #{static_unconditional_gan_forward.11} parent=5 // pred_check_branch
      %193 = sbr.rel (%p190) target = $region40
    $region39: #{static_unconditional_gan_forward.11} parent=5 // pred_region
      %s194 = ssub.s32 %s11, 1
      %s195 = smul.u32 16, %s16
      %p196 = scmp.lt.s32.totalorder %s195, 31
      %s197 = scalar_select %p196, %s195, 31
      %s198 = smul.addr %s197, 4
      %s199 = smul.addr %s198, 4
      %s200 = scalar_lea.vmem %s0, %s199
      %p201 = pneg %p37
      %p202 = pneg %p34
      %p203 = pneg %p58
      %p204 = pneg %p55
      %p205 = pneg %p79
      %p206 = pneg %p76
      %p207 = pneg %p100
      %p208 = pneg %p97
      %p209 = pneg %p121
      %p210 = pneg %p118
      %p211 = pneg %p147
      %p212 = pneg %p144
      %s213 = smul.u32 16, %s16
      %p214 = scmp.lt.s32.totalorder %s213, 31
      %s215 = scalar_select %p214, %s213, 31
      %s216 = smul.addr %s215, 8
      %s217 = scalar_lea.vmem %s5, %s216
      %s218 = smul.u32 16, %s16
      %p219 = scmp.lt.s32.totalorder %s218, 31
      %s220 = scalar_select %p219, %s218, 31
      %s221 = smul.addr %s220, 4
      %s222 = smul.addr %s221, 4
      %s223 = scalar_lea.vmem %s0, %s222
      %s224 = smul.u32 16, %s16
      %s225 = smul.u32 16, %s16
      %p226 = scmp.lt.s32.totalorder %s225, 31
      %s227 = scalar_select %p226, %s225, 31
      %s228 = smul.addr %s227, 8
      %s229 = scalar_lea.vmem %s5, %s228
      %s230 = smul.u32 16, %s16
      %v232 = vld [vmem:[%s223] sm:$0xff]
      %v233 = vld [vmem:[%s223 + $0x8] sm:$0xff]
      %v234 = vld [vmem:[%s223 + $0x10] sm:$0xff]
      %v235 = vld [vmem:[%s223 + $0x18] sm:$0xff]
      %v236 = vld [vmem:[%s223 + $0x20] sm:$0xff]
      %v237 = vld [vmem:[%s223 + $0x28] sm:$0xff]
      %v238 = vld [vmem:[%s223 + $0x30] sm:$0xff]
      %v239 = vld [vmem:[%s223 + $0x38] sm:$0xff]
      %v240 = vld [vmem:[%s223 + $0x40] sm:$0xff]
      %v241 = vld [vmem:[%s223 + $0x48] sm:$0xff]
      %v242 = vld [vmem:[%s223 + $0x50] sm:$0xff]
      %v243 = vld [vmem:[%s223 + $0x58] sm:$0xff]
      %v244 = vld [vmem:[%s223 + $0x60] sm:$0xff]
      %v245 = vld [vmem:[%s223 + $0x68] sm:$0xff]
      %v246 = vld [vmem:[%s223 + $0x70] sm:$0xff]
      %v247 = vld [vmem:[%s223 + $0x78] sm:$0xff]
      %v248 = vld [vmem:[%s223 + $0x80] sm:$0xff]
      %v249 = vld [vmem:[%s223 + $0x88] sm:$0xff]
      %v250 = vld [vmem:[%s223 + $0x90] sm:$0xff]
      %v251 = vld [vmem:[%s223 + $0x98] sm:$0xff]
      %v252 = vld [vmem:[%s223 + $0xa0] sm:$0xff]
      %v253 = vld [vmem:[%s223 + $0xa8] sm:$0xff]
      %v254 = vld [vmem:[%s223 + $0xb0] sm:$0xff]
      %v255 = vld [vmem:[%s223 + $0xb8] sm:$0xff]
      %v256 = vld [vmem:[%s223 + $0xc0] sm:$0xff]
      %v257 = vld [vmem:[%s223 + $0xc8] sm:$0xff]
      %v258 = vld [vmem:[%s223 + $0xd0] sm:$0xff]
      %v259 = vld [vmem:[%s223 + $0xd8] sm:$0xff]
      %v260 = vld [vmem:[%s223 + $0xe0] sm:$0xff]
      %v261 = vld [vmem:[%s223 + $0xe8] sm:$0xff]
      %v262 = vld [vmem:[%s223 + $0xf0] sm:$0xff]
      %v263 = vld [vmem:[%s223 + $0xf8] sm:$0xff]
      %v264 = vld [vmem:[%s1] sm:$0xf]
      %v265 = vld [vmem:[%s1 + $0x4] sm:$0xf]
      %v266 = vld [vmem:[%s1 + $0x8] sm:$0xf]
      %v267 = vld [vmem:[%s1 + $0xc] sm:$0xf]
      %v268 = vld [vmem:[%s1 + $0x10] sm:$0xf]
      %v269 = vld [vmem:[%s1 + $0x14] sm:$0xf]
      %v270 = vld [vmem:[%s1 + $0x18] sm:$0xf]
      %v271 = vld [vmem:[%s1 + $0x1c] sm:$0xf]
      %v272 = vld [vmem:[%s1 + $0x20] sm:$0xf]
      %v273 = vld [vmem:[%s1 + $0x24] sm:$0xf]
      %v274 = vld [vmem:[%s1 + $0x28] sm:$0xf]
      %v275 = vld [vmem:[%s1 + $0x2c] sm:$0xf]
      %v276 = vld [vmem:[%s1 + $0x30] sm:$0xf]
      %v277 = vld [vmem:[%s1 + $0x34] sm:$0xf]
      %v278 = vld [vmem:[%s1 + $0x38] sm:$0xf]
      %v279 = vld [vmem:[%s1 + $0x3c] sm:$0xf]
      %v280 = vld [vmem:[%s1 + $0x40] sm:$0xf]
      %v281 = vld [vmem:[%s1 + $0x44] sm:$0xf]
      %v282 = vld [vmem:[%s1 + $0x48] sm:$0xf]
      %v283 = vld [vmem:[%s1 + $0x4c] sm:$0xf]
      %v284 = vld [vmem:[%s1 + $0x50] sm:$0xf]
      %v285 = vld [vmem:[%s1 + $0x54] sm:$0xf]
      %v286 = vld [vmem:[%s1 + $0x58] sm:$0xf]
      %v287 = vld [vmem:[%s1 + $0x5c] sm:$0xf]
      %v288 = vld [vmem:[%s1 + $0x60] sm:$0xf]
      %v289 = vld [vmem:[%s1 + $0x64] sm:$0xf]
      %v290 = vld [vmem:[%s1 + $0x68] sm:$0xf]
      %v291 = vld [vmem:[%s1 + $0x6c] sm:$0xf]
      %v292 = vld [vmem:[%s1 + $0x70] sm:$0xf]
      %v293 = vld [vmem:[%s1 + $0x74] sm:$0xf]
      %v294 = vld [vmem:[%s1 + $0x78] sm:$0xf]
      %v295 = vld [vmem:[%s1 + $0x7c] sm:$0xf]
      %v296 = vld [vmem:[%s1 + $0x80] sm:$0xf]
      %v297 = vld [vmem:[%s1 + $0x84] sm:$0xf]
      %v298 = vld [vmem:[%s1 + $0x88] sm:$0xf]
      %v299 = vld [vmem:[%s1 + $0x8c] sm:$0xf]
      %v300 = vld [vmem:[%s1 + $0x90] sm:$0xf]
      %v301 = vld [vmem:[%s1 + $0x94] sm:$0xf]
      %v302 = vld [vmem:[%s1 + $0x98] sm:$0xf]
      %v303 = vld [vmem:[%s1 + $0x9c] sm:$0xf]
      %v304 = vld [vmem:[%s1 + $0xa0] sm:$0xf]
      %v305 = vld [vmem:[%s1 + $0xa4] sm:$0xf]
      %v306 = vld [vmem:[%s1 + $0xa8] sm:$0xf]
      %v307 = vld [vmem:[%s1 + $0xac] sm:$0xf]
      %v308 = vld [vmem:[%s1 + $0xb0] sm:$0xf]
      %v309 = vld [vmem:[%s1 + $0xb4] sm:$0xf]
      %v310 = vld [vmem:[%s1 + $0xb8] sm:$0xf]
      %v311 = vld [vmem:[%s1 + $0xbc] sm:$0xf]
      %v312 = vld [vmem:[%s1 + $0xc0] sm:$0xf]
      %v313 = vld [vmem:[%s1 + $0xc4] sm:$0xf]
      %v314 = vld [vmem:[%s1 + $0xc8] sm:$0xf]
      %v315 = vld [vmem:[%s1 + $0xcc] sm:$0xf]
      %v316 = vld [vmem:[%s1 + $0xd0] sm:$0xf]
      %v317 = vld [vmem:[%s1 + $0xd4] sm:$0xf]
      %v318 = vld [vmem:[%s1 + $0xd8] sm:$0xf]
      %v319 = vld [vmem:[%s1 + $0xdc] sm:$0xf]
      %v320 = vld [vmem:[%s1 + $0xe0] sm:$0xf]
      %v321 = vld [vmem:[%s1 + $0xe4] sm:$0xf]
      %v322 = vld [vmem:[%s1 + $0xe8] sm:$0xf]
      %v323 = vld [vmem:[%s1 + $0xec] sm:$0xf]
      %v324 = vld [vmem:[%s1 + $0xf0] sm:$0xf]
      %v325 = vld [vmem:[%s1 + $0xf4] sm:$0xf]
      %v326 = vld [vmem:[%s1 + $0xf8] sm:$0xf]
      %v327 = vld [vmem:[%s1 + $0xfc] sm:$0xf]
      %v328 = vld [vmem:[%s2] sm:$0x1]
      %v330 = vlaneseq
      %v331 = vshrl.u32 %v330, 7
      %v332 = vsub.s32 0, %v331
      %v333 = vrot.slane %v328, %v332
      %v367 = vunpack.c.l.b16 %v232
      %v368 = vunpack.c.h.b16 %v232
      %v369 = vunpack.c.l.b16 %v233
      %v370 = vunpack.c.h.b16 %v233
      %v371 = vunpack.c.l.b16 %v234
      %v372 = vunpack.c.h.b16 %v234
      %v373 = vunpack.c.l.b16 %v235
      %v374 = vunpack.c.h.b16 %v235
      %v375 = vunpack.c.l.b16 %v236
      %v376 = vunpack.c.h.b16 %v236
      %v377 = vunpack.c.l.b16 %v237
      %v378 = vunpack.c.h.b16 %v237
      %v379 = vunpack.c.l.b16 %v238
      %v380 = vunpack.c.h.b16 %v238
      %v381 = vunpack.c.l.b16 %v239
      %v382 = vunpack.c.h.b16 %v239
      %v383 = vunpack.c.l.b16 %v240
      %v384 = vunpack.c.h.b16 %v240
      %v385 = vunpack.c.l.b16 %v241
      %v386 = vunpack.c.h.b16 %v241
      %v387 = vunpack.c.l.b16 %v242
      %v388 = vunpack.c.h.b16 %v242
      %v389 = vunpack.c.l.b16 %v243
      %v390 = vunpack.c.h.b16 %v243
      %v391 = vunpack.c.l.b16 %v244
      %v392 = vunpack.c.h.b16 %v244
      %v393 = vunpack.c.l.b16 %v245
      %v394 = vunpack.c.h.b16 %v245
      %v395 = vunpack.c.l.b16 %v246
      %v396 = vunpack.c.h.b16 %v246
      %v397 = vunpack.c.l.b16 %v247
      %v398 = vunpack.c.h.b16 %v247
      %v399 = vunpack.c.l.b16 %v248
      %v400 = vunpack.c.h.b16 %v248
      %v401 = vunpack.c.l.b16 %v249
      %v402 = vunpack.c.h.b16 %v249
      %v403 = vunpack.c.l.b16 %v250
      %v404 = vunpack.c.h.b16 %v250
      %v405 = vunpack.c.l.b16 %v251
      %v406 = vunpack.c.h.b16 %v251
      %v407 = vunpack.c.l.b16 %v252
      %v408 = vunpack.c.h.b16 %v252
      %v409 = vunpack.c.l.b16 %v253
      %v410 = vunpack.c.h.b16 %v253
      %v411 = vunpack.c.l.b16 %v254
      %v412 = vunpack.c.h.b16 %v254
      %v413 = vunpack.c.l.b16 %v255
      %v414 = vunpack.c.h.b16 %v255
      %v415 = vunpack.c.l.b16 %v256
      %v416 = vunpack.c.h.b16 %v256
      %v417 = vunpack.c.l.b16 %v257
      %v418 = vunpack.c.h.b16 %v257
      %v419 = vunpack.c.l.b16 %v258
      %v420 = vunpack.c.h.b16 %v258
      %v421 = vunpack.c.l.b16 %v259
      %v422 = vunpack.c.h.b16 %v259
      %v423 = vunpack.c.l.b16 %v260
      %v424 = vunpack.c.h.b16 %v260
      %v425 = vunpack.c.l.b16 %v261
      %v426 = vunpack.c.h.b16 %v261
      %v427 = vunpack.c.l.b16 %v262
      %v428 = vunpack.c.h.b16 %v262
      %v429 = vunpack.c.l.b16 %v263
      %v430 = vunpack.c.h.b16 %v263
      %v431 = vpack.c.b16 %v371, %v367
      %v432 = vpack.c.b16 %v372, %v368
      %v433 = vpack.c.b16 %v373, %v369
      %v434 = vpack.c.b16 %v374, %v370
      %v435 = vpack.c.b16 %v379, %v375
      %v436 = vpack.c.b16 %v380, %v376
      %v437 = vpack.c.b16 %v381, %v377
      %v438 = vpack.c.b16 %v382, %v378
      %v439 = vpack.c.b16 %v387, %v383
      %v440 = vpack.c.b16 %v388, %v384
      %v441 = vpack.c.b16 %v389, %v385
      %v442 = vpack.c.b16 %v390, %v386
      %v443 = vpack.c.b16 %v395, %v391
      %v444 = vpack.c.b16 %v396, %v392
      %v445 = vpack.c.b16 %v397, %v393
      %v446 = vpack.c.b16 %v398, %v394
      %v447 = vpack.c.b16 %v403, %v399
      %v448 = vpack.c.b16 %v404, %v400
      %v449 = vpack.c.b16 %v405, %v401
      %v450 = vpack.c.b16 %v406, %v402
      %v451 = vpack.c.b16 %v411, %v407
      %v452 = vpack.c.b16 %v412, %v408
      %v453 = vpack.c.b16 %v413, %v409
      %v454 = vpack.c.b16 %v414, %v410
      %v455 = vpack.c.b16 %v419, %v415
      %v456 = vpack.c.b16 %v420, %v416
      %v457 = vpack.c.b16 %v421, %v417
      %v458 = vpack.c.b16 %v422, %v418
      %v459 = vpack.c.b16 %v427, %v423
      %v460 = vpack.c.b16 %v428, %v424
      %v461 = vpack.c.b16 %v429, %v425
      %v462 = vpack.c.b16 %v430, %v426
      %v559 = vunpack.c.l.b16 %v264
      %v560 = vunpack.c.l.b16 %v265
      %v561 = vunpack.c.l.b16 %v266
      %v562 = vunpack.c.l.b16 %v267
      %v563 = vunpack.c.l.b16 %v268
      %v564 = vunpack.c.l.b16 %v269
      %v565 = vunpack.c.l.b16 %v270
      %v566 = vunpack.c.l.b16 %v271
      %v567 = vunpack.c.l.b16 %v272
      %v568 = vunpack.c.l.b16 %v273
      %v569 = vunpack.c.l.b16 %v274
      %v570 = vunpack.c.l.b16 %v275
      %v571 = vunpack.c.l.b16 %v276
      %v572 = vunpack.c.l.b16 %v277
      %v573 = vunpack.c.l.b16 %v278
      %v574 = vunpack.c.l.b16 %v279
      %v575 = vunpack.c.l.b16 %v280
      %v576 = vunpack.c.l.b16 %v281
      %v577 = vunpack.c.l.b16 %v282
      %v578 = vunpack.c.l.b16 %v283
      %v579 = vunpack.c.l.b16 %v284
      %v580 = vunpack.c.l.b16 %v285
      %v581 = vunpack.c.l.b16 %v286
      %v582 = vunpack.c.l.b16 %v287
      %v583 = vunpack.c.l.b16 %v288
      %v584 = vunpack.c.l.b16 %v289
      %v585 = vunpack.c.l.b16 %v290
      %v586 = vunpack.c.l.b16 %v291
      %v587 = vunpack.c.l.b16 %v292
      %v588 = vunpack.c.l.b16 %v293
      %v589 = vunpack.c.l.b16 %v294
      %v590 = vunpack.c.l.b16 %v295
      %v591 = vunpack.c.l.b16 %v296
      %v592 = vunpack.c.l.b16 %v297
      %v593 = vunpack.c.l.b16 %v298
      %v594 = vunpack.c.l.b16 %v299
      %v595 = vunpack.c.l.b16 %v300
      %v596 = vunpack.c.l.b16 %v301
      %v597 = vunpack.c.l.b16 %v302
      %v598 = vunpack.c.l.b16 %v303
      %v599 = vunpack.c.l.b16 %v304
      %v600 = vunpack.c.l.b16 %v305
      %v601 = vunpack.c.l.b16 %v306
      %v602 = vunpack.c.l.b16 %v307
      %v603 = vunpack.c.l.b16 %v308
      %v604 = vunpack.c.l.b16 %v309
      %v605 = vunpack.c.l.b16 %v310
      %v606 = vunpack.c.l.b16 %v311
      %v607 = vunpack.c.l.b16 %v312
      %v608 = vunpack.c.l.b16 %v313
      %v609 = vunpack.c.l.b16 %v314
      %v610 = vunpack.c.l.b16 %v315
      %v611 = vunpack.c.l.b16 %v316
      %v612 = vunpack.c.l.b16 %v317
      %v613 = vunpack.c.l.b16 %v318
      %v614 = vunpack.c.l.b16 %v319
      %v615 = vunpack.c.l.b16 %v320
      %v616 = vunpack.c.l.b16 %v321
      %v617 = vunpack.c.l.b16 %v322
      %v618 = vunpack.c.l.b16 %v323
      %v619 = vunpack.c.l.b16 %v324
      %v620 = vunpack.c.l.b16 %v325
      %v621 = vunpack.c.l.b16 %v326
      %v622 = vunpack.c.l.b16 %v327
      %v623 = vpack.c.b16 %v560, %v559
      %v624 = vpack.c.b16 %v562, %v561
      %v625 = vpack.c.b16 %v564, %v563
      %v626 = vpack.c.b16 %v566, %v565
      %v627 = vpack.c.b16 %v568, %v567
      %v628 = vpack.c.b16 %v570, %v569
      %v629 = vpack.c.b16 %v572, %v571
      %v630 = vpack.c.b16 %v574, %v573
      %v631 = vpack.c.b16 %v576, %v575
      %v632 = vpack.c.b16 %v578, %v577
      %v633 = vpack.c.b16 %v580, %v579
      %v634 = vpack.c.b16 %v582, %v581
      %v635 = vpack.c.b16 %v584, %v583
      %v636 = vpack.c.b16 %v586, %v585
      %v637 = vpack.c.b16 %v588, %v587
      %v638 = vpack.c.b16 %v590, %v589
      %v639 = vpack.c.b16 %v592, %v591
      %v640 = vpack.c.b16 %v594, %v593
      %v641 = vpack.c.b16 %v596, %v595
      %v642 = vpack.c.b16 %v598, %v597
      %v643 = vpack.c.b16 %v600, %v599
      %v644 = vpack.c.b16 %v602, %v601
      %v645 = vpack.c.b16 %v604, %v603
      %v646 = vpack.c.b16 %v606, %v605
      %v647 = vpack.c.b16 %v608, %v607
      %v648 = vpack.c.b16 %v610, %v609
      %v649 = vpack.c.b16 %v612, %v611
      %v650 = vpack.c.b16 %v614, %v613
      %v651 = vpack.c.b16 %v616, %v615
      %v652 = vpack.c.b16 %v618, %v617
      %v653 = vpack.c.b16 %v620, %v619
      %v654 = vpack.c.b16 %v622, %v621
      %687 = vmatprep.subr.bf16.mxu0 0
      %688 = vmatpush1.bf16.msra.mxu0 %v623
      %689 = vmatprep.subr.bf16.mxu0 0
      %690 = vmatpush1.bf16.msra.mxu0 %v624
      %691 = vmatprep.subr.bf16.mxu0 0
      %692 = vmatpush1.bf16.msra.mxu0 %v625
      %693 = vmatprep.subr.bf16.mxu0 0
      %694 = vmatpush1.bf16.msra.mxu0 %v626
      %695 = vmatprep.subr.bf16.mxu0 0
      %696 = vmatpush1.bf16.msra.mxu0 %v627
      %697 = vmatprep.subr.bf16.mxu0 0
      %698 = vmatpush1.bf16.msra.mxu0 %v628
      %699 = vmatprep.subr.bf16.mxu0 0
      %700 = vmatpush1.bf16.msra.mxu0 %v629
      %701 = vmatprep.subr.bf16.mxu0 0
      %702 = vmatpush1.bf16.msra.mxu0 %v630
      %703 = vmatprep.subr.bf16.mxu0 0
      %704 = vmatpush1.bf16.msra.mxu0 %v631
      %705 = vmatprep.subr.bf16.mxu0 0
      %706 = vmatpush1.bf16.msra.mxu0 %v632
      %707 = vmatprep.subr.bf16.mxu0 0
      %708 = vmatpush1.bf16.msra.mxu0 %v633
      %709 = vmatprep.subr.bf16.mxu0 0
      %710 = vmatpush1.bf16.msra.mxu0 %v634
      %711 = vmatprep.subr.bf16.mxu0 0
      %712 = vmatpush1.bf16.msra.mxu0 %v635
      %713 = vmatprep.subr.bf16.mxu0 0
      %714 = vmatpush1.bf16.msra.mxu0 %v636
      %715 = vmatprep.subr.bf16.mxu0 0
      %716 = vmatpush1.bf16.msra.mxu0 %v637
      %717 = vmatprep.subr.bf16.mxu0 0
      %718 = vmatpush1.bf16.msra.mxu0 %v638
      %719 = vmatprep.mubr.bf16.mxu0 %v432
      %720 = vmatmul.mubr.bf16.gmra.mrb[0].mxu0 %v431
      %v721 = vpop.f32.mrb[0].mxu0
      %v722 = vadd.f32 %v333, %v721
      %v723 = vpop.f32.mrb[0].mxu0
      %v724 = vpop.f32.mrb[0].mxu0
      %v725 = vadd.f32 %v333, %v724
      %v726 = vpop.f32.mrb[0].mxu0
      %727 = vmatprep.mubr.bf16.mxu0 %v436
      %728 = vmatmul.mubr.bf16.gmra.mrb[0].mxu0 %v435
      %v729 = vpop.f32.mrb[0].mxu0
      %v730 = vadd.f32 %v333, %v729
      %v731 = vpop.f32.mrb[0].mxu0
      %v732 = vpop.f32.mrb[0].mxu0
      %v733 = vadd.f32 %v333, %v732
      %v734 = vpop.f32.mrb[0].mxu0
      %735 = vmatprep.mubr.bf16.mxu0 %v440
      %736 = vmatmul.mubr.bf16.gmra.mrb[0].mxu0 %v439
      %v737 = vpop.f32.mrb[0].mxu0
      %v738 = vadd.f32 %v333, %v737
      %v739 = vpop.f32.mrb[0].mxu0
      %v740 = vpop.f32.mrb[0].mxu0
      %v741 = vadd.f32 %v333, %v740
      %v742 = vpop.f32.mrb[0].mxu0
      %743 = vmatprep.mubr.bf16.mxu0 %v444
      %744 = vmatmul.mubr.bf16.gmra.mrb[0].mxu0 %v443
      %v745 = vpop.f32.mrb[0].mxu0
      %v746 = vadd.f32 %v333, %v745
      %v747 = vpop.f32.mrb[0].mxu0
      %v748 = vpop.f32.mrb[0].mxu0
      %v749 = vadd.f32 %v333, %v748
      %v750 = vpop.f32.mrb[0].mxu0
      %751 = vmatprep.mubr.bf16.mxu0 %v448
      %752 = vmatmul.mubr.bf16.gmra.mrb[0].mxu0 %v447
      %v753 = vpop.f32.mrb[0].mxu0
      %v754 = vadd.f32 %v333, %v753
      %v755 = vpop.f32.mrb[0].mxu0
      %v756 = vpop.f32.mrb[0].mxu0
      %v757 = vadd.f32 %v333, %v756
      %v758 = vpop.f32.mrb[0].mxu0
      %759 = vmatprep.mubr.bf16.mxu0 %v452
      %760 = vmatmul.mubr.bf16.gmra.mrb[0].mxu0 %v451
      %v761 = vpop.f32.mrb[0].mxu0
      %v762 = vadd.f32 %v333, %v761
      %v763 = vpop.f32.mrb[0].mxu0
      %v764 = vpop.f32.mrb[0].mxu0
      %v765 = vadd.f32 %v333, %v764
      %v766 = vpop.f32.mrb[0].mxu0
      %767 = vmatprep.mubr.bf16.mxu0 %v456
      %768 = vmatmul.mubr.bf16.gmra.mrb[0].mxu0 %v455
      %v769 = vpop.f32.mrb[0].mxu0
      %v770 = vadd.f32 %v333, %v769
      %v771 = vpop.f32.mrb[0].mxu0
      %v772 = vpop.f32.mrb[0].mxu0
      %v773 = vadd.f32 %v333, %v772
      %v774 = vpop.f32.mrb[0].mxu0
      %775 = vmatprep.mubr.bf16.mxu0 %v460
      %776 = vmatmul.mubr.bf16.gmra.mrb[0].mxu0 %v459
      %v777 = vpop.f32.mrb[0].mxu0
      %v778 = vadd.f32 %v333, %v777
      %v779 = vpop.f32.mrb[0].mxu0
      %v780 = vpop.f32.mrb[0].mxu0
      %v781 = vadd.f32 %v333, %v780
      %v782 = vpop.f32.mrb[0].mxu0
      %783 = vdwg.mxu0
      %784 = vmatprep.subr.bf16.mxu0 0
      %785 = vmatpush1.bf16.msra.mxu0 %v639
      %786 = vmatprep.subr.bf16.mxu0 0
      %787 = vmatpush1.bf16.msra.mxu0 %v640
      %788 = vmatprep.subr.bf16.mxu0 0
      %789 = vmatpush1.bf16.msra.mxu0 %v641
      %790 = vmatprep.subr.bf16.mxu0 0
      %791 = vmatpush1.bf16.msra.mxu0 %v642
      %792 = vmatprep.subr.bf16.mxu0 0
      %793 = vmatpush1.bf16.msra.mxu0 %v643
      %794 = vmatprep.subr.bf16.mxu0 0
      %795 = vmatpush1.bf16.msra.mxu0 %v644
      %796 = vmatprep.subr.bf16.mxu0 0
      %797 = vmatpush1.bf16.msra.mxu0 %v645
      %798 = vmatprep.subr.bf16.mxu0 0
      %799 = vmatpush1.bf16.msra.mxu0 %v646
      %800 = vmatprep.subr.bf16.mxu0 0
      %801 = vmatpush1.bf16.msra.mxu0 %v647
      %802 = vmatprep.subr.bf16.mxu0 0
      %803 = vmatpush1.bf16.msra.mxu0 %v648
      %804 = vmatprep.subr.bf16.mxu0 0
      %805 = vmatpush1.bf16.msra.mxu0 %v649
      %806 = vmatprep.subr.bf16.mxu0 0
      %807 = vmatpush1.bf16.msra.mxu0 %v650
      %808 = vmatprep.subr.bf16.mxu0 0
      %809 = vmatpush1.bf16.msra.mxu0 %v651
      %810 = vmatprep.subr.bf16.mxu0 0
      %811 = vmatpush1.bf16.msra.mxu0 %v652
      %812 = vmatprep.subr.bf16.mxu0 0
      %813 = vmatpush1.bf16.msra.mxu0 %v653
      %814 = vmatprep.subr.bf16.mxu0 0
      %815 = vmatpush1.bf16.msra.mxu0 %v654
      %816 = vmatprep.mubr.bf16.mxu0 %v434
      %817 = vmatmul.mubr.bf16.gmra.mrb[0].mxu0 %v433
      %v818 = vpop.f32.mrb[0].mxu0
      %v819 = vadd.f32 %v722, %v818
      %v820 = vpop.f32.mrb[0].mxu0
      %v821 = vpop.f32.mrb[0].mxu0
      %v822 = vadd.f32 %v725, %v821
      %v823 = vpop.f32.mrb[0].mxu0
      %824 = vmatprep.mubr.bf16.mxu0 %v438
      %825 = vmatmul.mubr.bf16.gmra.mrb[0].mxu0 %v437
      %v826 = vpop.f32.mrb[0].mxu0
      %v827 = vadd.f32 %v730, %v826
      %v828 = vpop.f32.mrb[0].mxu0
      %v829 = vpop.f32.mrb[0].mxu0
      %v830 = vadd.f32 %v733, %v829
      %v831 = vpop.f32.mrb[0].mxu0
      %832 = vmatprep.mubr.bf16.mxu0 %v442
      %833 = vmatmul.mubr.bf16.gmra.mrb[0].mxu0 %v441
      %v834 = vpop.f32.mrb[0].mxu0
      %v835 = vadd.f32 %v738, %v834
      %v836 = vpop.f32.mrb[0].mxu0
      %v837 = vpop.f32.mrb[0].mxu0
      %v838 = vadd.f32 %v741, %v837
      %v839 = vpop.f32.mrb[0].mxu0
      %840 = vmatprep.mubr.bf16.mxu0 %v446
      %841 = vmatmul.mubr.bf16.gmra.mrb[0].mxu0 %v445
      %v842 = vpop.f32.mrb[0].mxu0
      %v843 = vadd.f32 %v746, %v842
      %v844 = vpop.f32.mrb[0].mxu0
      %v845 = vpop.f32.mrb[0].mxu0
      %v846 = vadd.f32 %v749, %v845
      %v847 = vpop.f32.mrb[0].mxu0
      %848 = vmatprep.mubr.bf16.mxu0 %v450
      %849 = vmatmul.mubr.bf16.gmra.mrb[0].mxu0 %v449
      %v850 = vpop.f32.mrb[0].mxu0
      %v851 = vadd.f32 %v754, %v850
      %v852 = vpop.f32.mrb[0].mxu0
      %v853 = vpop.f32.mrb[0].mxu0
      %v854 = vadd.f32 %v757, %v853
      %v855 = vpop.f32.mrb[0].mxu0
      %856 = vmatprep.mubr.bf16.mxu0 %v454
      %857 = vmatmul.mubr.bf16.gmra.mrb[0].mxu0 %v453
      %v858 = vpop.f32.mrb[0].mxu0
      %v859 = vadd.f32 %v762, %v858
      %v860 = vpop.f32.mrb[0].mxu0
      %v861 = vpop.f32.mrb[0].mxu0
      %v862 = vadd.f32 %v765, %v861
      %v863 = vpop.f32.mrb[0].mxu0
      %864 = vmatprep.mubr.bf16.mxu0 %v458
      %865 = vmatmul.mubr.bf16.gmra.mrb[0].mxu0 %v457
      %v866 = vpop.f32.mrb[0].mxu0
      %v867 = vadd.f32 %v770, %v866
      %v868 = vpop.f32.mrb[0].mxu0
      %v869 = vpop.f32.mrb[0].mxu0
      %v870 = vadd.f32 %v773, %v869
      %v871 = vpop.f32.mrb[0].mxu0
      %872 = vmatprep.mubr.bf16.mxu0 %v462
      %873 = vmatmul.mubr.bf16.gmra.mrb[0].mxu0 %v461
      %v874 = vpop.f32.mrb[0].mxu0
      %v875 = vadd.f32 %v778, %v874
      %v876 = vpop.f32.mrb[0].mxu0
      %v877 = vpop.f32.mrb[0].mxu0
      %v878 = vadd.f32 %v781, %v877
      %v879 = vpop.f32.mrb[0].mxu0
      %880 = vdwg.mxu0
      %v881 = vadd.f32 %v819, %v822
      %v882 = vadd.f32 %v881, %v827
      %v883 = vadd.f32 %v882, %v830
      %v884 = vadd.f32 %v883, %v835
      %v885 = vadd.f32 %v884, %v838
      %v886 = vadd.f32 %v885, %v843
      %v887 = vadd.f32 %v886, %v846
      %v888 = vadd.f32 %v887, %v851
      %v889 = vadd.f32 %v888, %v854
      %v890 = vadd.f32 %v889, %v859
      %v891 = vadd.f32 %v890, %v862
      %v892 = vadd.f32 %v891, %v867
      %v893 = vadd.f32 %v892, %v870
      %v894 = vadd.f32 %v893, %v875
      %v895 = vadd.f32 %v894, %v878
      %v896 = vrot.slane %v895, 4
      %v897 = vadd.f32 %v895, %v896
      %v898 = vrot.slane %v897, 2
      %v899 = vadd.f32 %v897, %v898
      %v900 = vrot.slane %v899, 1
      %v901 = vadd.f32 %v899, %v900
      %v902 = vrcp.pop 128.0
      %v903 = vmul.f32 %v901, %v902
      %v904 = vsub.f32 %v819, %v903
      %v905 = vsub.f32 %v822, %v903
      %v906 = vsub.f32 %v827, %v903
      %v907 = vsub.f32 %v830, %v903
      %v908 = vsub.f32 %v835, %v903
      %v909 = vsub.f32 %v838, %v903
      %v910 = vsub.f32 %v843, %v903
      %v911 = vsub.f32 %v846, %v903
      %v912 = vsub.f32 %v851, %v903
      %v913 = vsub.f32 %v854, %v903
      %v914 = vsub.f32 %v859, %v903
      %v915 = vsub.f32 %v862, %v903
      %v916 = vsub.f32 %v867, %v903
      %v917 = vsub.f32 %v870, %v903
      %v918 = vsub.f32 %v875, %v903
      %v919 = vsub.f32 %v878, %v903
      %v920 = vmul.f32 %v904, %v904
      %v921 = vmul.f32 %v905, %v905
      %v922 = vmul.f32 %v906, %v906
      %v923 = vmul.f32 %v907, %v907
      %v924 = vmul.f32 %v908, %v908
      %v925 = vmul.f32 %v909, %v909
      %v926 = vmul.f32 %v910, %v910
      %v927 = vmul.f32 %v911, %v911
      %v928 = vmul.f32 %v912, %v912
      %v929 = vmul.f32 %v913, %v913
      %v930 = vmul.f32 %v914, %v914
      %v931 = vmul.f32 %v915, %v915
      %v932 = vmul.f32 %v916, %v916
      %v933 = vmul.f32 %v917, %v917
      %v934 = vmul.f32 %v918, %v918
      %v935 = vmul.f32 %v919, %v919
      %v936 = vadd.f32 %v920, %v921
      %v937 = vadd.f32 %v936, %v922
      %v938 = vadd.f32 %v937, %v923
      %v939 = vadd.f32 %v938, %v924
      %v940 = vadd.f32 %v939, %v925
      %v941 = vadd.f32 %v940, %v926
      %v942 = vadd.f32 %v941, %v927
      %v943 = vadd.f32 %v942, %v928
      %v944 = vadd.f32 %v943, %v929
      %v945 = vadd.f32 %v944, %v930
      %v946 = vadd.f32 %v945, %v931
      %v947 = vadd.f32 %v946, %v932
      %v948 = vadd.f32 %v947, %v933
      %v949 = vadd.f32 %v948, %v934
      %v950 = vadd.f32 %v949, %v935
      %v951 = vrot.slane %v950, 4
      %v952 = vadd.f32 %v950, %v951
      %v953 = vrot.slane %v952, 2
      %v954 = vadd.f32 %v952, %v953
      %v955 = vrot.slane %v954, 1
      %v956 = vadd.f32 %v954, %v955
      %v957 = vmul.f32 %v956, %v902
      %v958 = vadd.f32 %v957, 1e-05
      %v959 = vrsqrt.pop %v958
      %v960 = vmul.f32 %v904, %v959
      %v961 = vmul.f32 %v905, %v959
      %v962 = vmul.f32 %v906, %v959
      %v963 = vmul.f32 %v907, %v959
      %v964 = vmul.f32 %v908, %v959
      %v965 = vmul.f32 %v909, %v959
      %v966 = vmul.f32 %v910, %v959
      %v967 = vmul.f32 %v911, %v959
      %v968 = vmul.f32 %v912, %v959
      %v969 = vmul.f32 %v913, %v959
      %v970 = vmul.f32 %v914, %v959
      %v971 = vmul.f32 %v915, %v959
      %v972 = vmul.f32 %v916, %v959
      %v973 = vmul.f32 %v917, %v959
      %v974 = vmul.f32 %v918, %v959
      %v975 = vmul.f32 %v919, %v959
      %v976 = vld [vmem:[%s3] sm:$0x1]
      %v978 = vlaneseq
      %v979 = vshrl.u32 %v978, 7
      %v980 = vsub.s32 0, %v979
      %v981 = vrot.slane %v976, %v980
      %v983 = vmul.f32 %v960, %v981
      %v984 = vmul.f32 %v961, %v981
      %v985 = vmul.f32 %v962, %v981
      %v986 = vmul.f32 %v963, %v981
      %v987 = vmul.f32 %v964, %v981
      %v988 = vmul.f32 %v965, %v981
      %v989 = vmul.f32 %v966, %v981
      %v990 = vmul.f32 %v967, %v981
      %v991 = vmul.f32 %v968, %v981
      %v992 = vmul.f32 %v969, %v981
      %v993 = vmul.f32 %v970, %v981
      %v994 = vmul.f32 %v971, %v981
      %v995 = vmul.f32 %v972, %v981
      %v996 = vmul.f32 %v973, %v981
      %v997 = vmul.f32 %v974, %v981
      %v998 = vmul.f32 %v975, %v981
      %v999 = vld [vmem:[%s4] sm:$0x1]
      %v1001 = vlaneseq
      %v1002 = vshrl.u32 %v1001, 7
      %v1003 = vsub.s32 0, %v1002
      %v1004 = vrot.slane %v999, %v1003
      %v1006 = vadd.f32 %v983, %v1004
      %v1007 = vadd.f32 %v984, %v1004
      %v1008 = vadd.f32 %v985, %v1004
      %v1009 = vadd.f32 %v986, %v1004
      %v1010 = vadd.f32 %v987, %v1004
      %v1011 = vadd.f32 %v988, %v1004
      %v1012 = vadd.f32 %v989, %v1004
      %v1013 = vadd.f32 %v990, %v1004
      %v1014 = vadd.f32 %v991, %v1004
      %v1015 = vadd.f32 %v992, %v1004
      %v1016 = vadd.f32 %v993, %v1004
      %v1017 = vadd.f32 %v994, %v1004
      %v1018 = vadd.f32 %v995, %v1004
      %v1019 = vadd.f32 %v996, %v1004
      %v1020 = vadd.f32 %v997, %v1004
      %v1021 = vadd.f32 %v998, %v1004
      %v1022 = vmax.f32 %v1006, 0.0
      %v1023 = vmax.f32 %v1007, 0.0
      %v1024 = vmax.f32 %v1008, 0.0
      %v1025 = vmax.f32 %v1009, 0.0
      %v1026 = vmax.f32 %v1010, 0.0
      %v1027 = vmax.f32 %v1011, 0.0
      %v1028 = vmax.f32 %v1012, 0.0
      %v1029 = vmax.f32 %v1013, 0.0
      %v1030 = vmax.f32 %v1014, 0.0
      %v1031 = vmax.f32 %v1015, 0.0
      %v1032 = vmax.f32 %v1016, 0.0
      %v1033 = vmax.f32 %v1017, 0.0
      %v1034 = vmax.f32 %v1018, 0.0
      %v1035 = vmax.f32 %v1019, 0.0
      %v1036 = vmax.f32 %v1020, 0.0
      %v1037 = vmax.f32 %v1021, 0.0
      %1038 = vst [vmem:[%s229] sm:$0xff] %v1022
      %1039 = vst [vmem:[%s229 + $0x8] sm:$0xff] %v1023
      %1040 = vst [vmem:[%s229 + $0x10] sm:$0xff] %v1024
      %1041 = vst [vmem:[%s229 + $0x18] sm:$0xff] %v1025
      %1042 = vst [vmem:[%s229 + $0x20] sm:$0xff] %v1026
      %1043 = vst [vmem:[%s229 + $0x28] sm:$0xff] %v1027
      %1044 = vst [vmem:[%s229 + $0x30] sm:$0xff] %v1028
      %1045 = vst [vmem:[%s229 + $0x38] sm:$0xff] %v1029
      %1046 = vst [vmem:[%s229 + $0x40] sm:$0xff] %v1030
      %1047 = vst [vmem:[%s229 + $0x48] sm:$0xff] %v1031
      %1048 = vst [vmem:[%s229 + $0x50] sm:$0xff] %v1032
      %1049 = vst [vmem:[%s229 + $0x58] sm:$0xff] %v1033
      %1050 = vst [vmem:[%s229 + $0x60] sm:$0xff] %v1034
      %1051 = vst [vmem:[%s229 + $0x68] sm:$0xff] %v1035
      %1052 = vst [vmem:[%s229 + $0x70] sm:$0xff] %v1036
      %1053 = vst [vmem:[%s229 + $0x78] sm:$0xff] %v1037
      %s1054 = smul.u32 16, %s16
      %p1055 = scmp.lt.s32.totalorder %s1054, 31
      %s1056 = scalar_select %p1055, %s1054, 31
      %s1057 = smul.addr %s1056, 8
      %s1058 = scalar_lea.vmem %s5, %s1057
      // Predicated region
      $region41: #{static_unconditional_gan_forward.11} parent=39 // pred_check
        %p1059 = pneg %p144
      $region42: #{static_unconditional_gan_forward.11} parent=39 // pred_check_branch
        %1061 = sbr.rel (%p1059) target = $region44
      $region43: #{static_unconditional_gan_forward.11} parent=39 // pred_region
        %s1062 = smul.u32 16, %s16
      $region44: #{static_unconditional_gan_forward.11} parent=39 // pred_fallthru
        _
    $region40: #{static_unconditional_gan_forward.11} parent=5 // pred_fallthru
      _
    %p1063 = scmp.le.s32.totalorder 2, %s11
    // Predicated region
    $region45: #{static_unconditional_gan_forward.11} parent=5 // pred_check
      %p1064 = pneg %p1063
    $region46: #{static_unconditional_gan_forward.11} parent=5 // pred_check_branch
      %1066 = sbr.rel (%p1064) target = $region48
    $region47: #{static_unconditional_gan_forward.11} parent=5 // pred_region
      %s1067 = ssub.s32 %s11, 2
      // Predicated region
      $region49: #{static_unconditional_gan_forward.11} parent=47 // pred_check
        %p1068 = pneg %p150
      $region50: #{static_unconditional_gan_forward.11} parent=47 // pred_check_branch
        %1070 = sbr.rel (%p1068) target = $region52
      $region51: #{static_unconditional_gan_forward.11} parent=47 // pred_region
        %s1071 = smul.u32 16, %s17
        %p1072 = scmp.lt.s32.totalorder %s1071, 31
        %s1073 = scalar_select %p1072, %s1071, 31
        %s1074 = smul.addr %s1073, 8
        %s1075 = scalar_lea.vmem %s5, %s1074
      $region52: #{static_unconditional_gan_forward.11} parent=47 // pred_fallthru
        _
    $region48: #{static_unconditional_gan_forward.11} parent=5 // pred_fallthru
      _
  $region6: #{static_unconditional_gan_forward.11} parent=0 // loop_footer
    %s15 = sadd.s32 1, %s11
  $region7: #{static_unconditional_gan_forward.11} parent=0 // loop_footer_branch
    %10 = sbr.rel target = $region3
  $region8: #{static_unconditional_gan_forward.11} parent=0 // loop_exit
    _

// kernel: static_unconditional_gan_forward.12
$region0: #{static_unconditional_gan_forward.12}
  #allocation0 [shape = 'u32[]', space=smem, size = 0x4, offset = 0x4, fixed_abs, tag = 'smem constant byte address 0x4 - core index']
  #allocation1 [shape = 'u32[144,128]{1,0:T(1,128)}', space=vmem, size = 0x12000, scoped, tag = 'internal scratch']
  %s0 = inlined_call_operand.vmem [shape: bf16[1024,256], index: 0, kind: input, shape index: {}]
  %s1 = inlined_call_operand.vmem [shape: bf16[256,128], index: 1, kind: input, shape index: {}]
  %s2 = inlined_call_operand.vmem [shape: f32[1,128], index: 2, kind: input, shape index: {}]
  %s3 = inlined_call_operand.vmem [shape: f32[1024,128], index: 3, kind: output, shape index: {}]
  %s4 = sld [smem:[#allocation0]]
  $region45: #{static_unconditional_gan_forward.12} parent=0
    _
  %s6 = ssub.s32 1, %s4
  %s7 = scalar_select 0, %s6, %s4
  loop: start=0, step=1, limit=4
  $region2: #{static_unconditional_gan_forward.12} parent=0 // loop_pre_header
    _
  $region3: #{static_unconditional_gan_forward.12} parent=0 // loop_header
    %s9 = sphi 0, %s13
    %p10 = scmp.ge.s32.totalorder %s9, 4
    %s19 = sphi 0, %s21
    %s22 = sphi 0, %s19
    %s23 = sphi 0, %s22
    %s39 = sphi 0, %s23
    %s43 = sphi 0, %s43
    %s45 = sphi 0, %s43
    %s46 = sphi 0, %s45
    %s60 = sphi 0, %s46
    %s64 = sphi 0, %s64
    %s66 = sphi 0, %s64
    %s67 = sphi 0, %s66
    %s81 = sphi 0, %s67
    %s87 = sphi 0, %s89
    %s90 = sphi 0, %s87
    %s91 = sphi 0, %s90
    %s107 = sphi 0, %s91
  $region4: #{static_unconditional_gan_forward.12} parent=0 // loop_header_branch
    %12 = sbr.rel (%p10) target = $region8
  $region5: #{static_unconditional_gan_forward.12} parent=0 // loop_body
    %s14 = ssub.s32 %s9, 1
    %s15 = ssub.s32 %s9, 2
    %s16 = sadd.s32 %s9, 1
    %s17 = ssub.s32 %s9, %s16
    %p18 = scmp.eq.s32.totalorder %s17, 0
    %s20 = sadd.s32 %s19, 1
    %s21 = scalar_select %p18, %s19, %s20
    %p24 = pneg %p18
    %p25 = scmp.eq.s32.totalorder %s9, 1
    %p26 = por %p24, %p25
    %p27 = scmp.ne.s32.totalorder %s19, %s22
    %p28 = scmp.eq.s32.totalorder %s9, 0
    %p29 = por %p27, %p28
    %p30 = scmp.ne.s32.totalorder %s19, %s22
    %p31 = scmp.eq.s32.totalorder %s14, 1
    %p32 = por %p30, %p31
    %p33 = scmp.ne.s32.totalorder %s22, %s23
    %p34 = scmp.eq.s32.totalorder %s14, 0
    %p35 = por %p33, %p34
    %p36 = scmp.ne.s32.totalorder %s22, %s23
    %p37 = scmp.eq.s32.totalorder %s15, 1
    %p38 = por %p36, %p37
    %p40 = scmp.ne.s32.totalorder %s23, %s39
    %p41 = scmp.eq.s32.totalorder %s15, 0
    %p42 = por %p40, %p41
    %s44 = sadd.s32 %s43, 1
    %p47 = scmp.eq.s32.totalorder %s9, 1
    %p48 = scmp.ne.s32.totalorder %s43, %s45
    %p49 = scmp.eq.s32.totalorder %s9, 0
    %p50 = por %p48, %p49
    %p51 = scmp.ne.s32.totalorder %s43, %s45
    %p52 = scmp.eq.s32.totalorder %s14, 1
    %p53 = por %p51, %p52
    %p54 = scmp.ne.s32.totalorder %s45, %s46
    %p55 = scmp.eq.s32.totalorder %s14, 0
    %p56 = por %p54, %p55
    %p57 = scmp.ne.s32.totalorder %s45, %s46
    %p58 = scmp.eq.s32.totalorder %s15, 1
    %p59 = por %p57, %p58
    %p61 = scmp.ne.s32.totalorder %s46, %s60
    %p62 = scmp.eq.s32.totalorder %s15, 0
    %p63 = por %p61, %p62
    %s65 = sadd.s32 %s64, 1
    %p68 = scmp.eq.s32.totalorder %s9, 1
    %p69 = scmp.ne.s32.totalorder %s64, %s66
    %p70 = scmp.eq.s32.totalorder %s9, 0
    %p71 = por %p69, %p70
    %p72 = scmp.ne.s32.totalorder %s64, %s66
    %p73 = scmp.eq.s32.totalorder %s14, 1
    %p74 = por %p72, %p73
    %p75 = scmp.ne.s32.totalorder %s66, %s67
    %p76 = scmp.eq.s32.totalorder %s14, 0
    %p77 = por %p75, %p76
    %p78 = scmp.ne.s32.totalorder %s66, %s67
    %p79 = scmp.eq.s32.totalorder %s15, 1
    %p80 = por %p78, %p79
    %p82 = scmp.ne.s32.totalorder %s67, %s81
    %p83 = scmp.eq.s32.totalorder %s15, 0
    %p84 = por %p82, %p83
    %s85 = ssub.s32 %s9, %s16
    %p86 = scmp.eq.s32.totalorder %s85, 0
    %s88 = sadd.s32 %s87, 1
    %s89 = scalar_select %p86, %s87, %s88
    %p92 = pneg %p86
    %p93 = scmp.eq.s32.totalorder %s9, 1
    %p94 = por %p92, %p93
    %p95 = scmp.ne.s32.totalorder %s87, %s90
    %p96 = scmp.eq.s32.totalorder %s9, 0
    %p97 = por %p95, %p96
    %p98 = scmp.ne.s32.totalorder %s87, %s90
    %p99 = scmp.eq.s32.totalorder %s14, 1
    %p100 = por %p98, %p99
    %p101 = scmp.ne.s32.totalorder %s90, %s91
    %p102 = scmp.eq.s32.totalorder %s14, 0
    %p103 = por %p101, %p102
    %p104 = scmp.ne.s32.totalorder %s90, %s91
    %p105 = scmp.eq.s32.totalorder %s15, 1
    %p106 = por %p104, %p105
    %p108 = scmp.ne.s32.totalorder %s91, %s107
    %p109 = scmp.eq.s32.totalorder %s15, 0
    %p110 = por %p108, %p109
    %p111 = scmp.le.s32.totalorder 1, %s9
    %p112 = scmp.lt.s32.totalorder %s9, 3
    %p113 = pnand %p111, %p112
    %p114 = pneg %p113
    // Predicated region
    $region9: #{static_unconditional_gan_forward.12} parent=5 // pred_check
      _
    $region10: #{static_unconditional_gan_forward.12} parent=5 // pred_check_branch
      %116 = sbr.rel (%p113) target = $region12
    $region11: #{static_unconditional_gan_forward.12} parent=5 // pred_region
      %s117 = ssub.s32 %s9, 1
      // Predicated region
      $region13: #{static_unconditional_gan_forward.12} parent=11 // pred_check
        %p118 = pneg %p56
      $region14: #{static_unconditional_gan_forward.12} parent=11 // pred_check_branch
        %120 = sbr.rel (%p118) target = $region16
      $region15: #{static_unconditional_gan_forward.12} parent=11 // pred_region
        _
      $region16: #{static_unconditional_gan_forward.12} parent=11 // pred_fallthru
        _
      // Predicated region
      $region17: #{static_unconditional_gan_forward.12} parent=11 // pred_check
        %p121 = pneg %p77
      $region18: #{static_unconditional_gan_forward.12} parent=11 // pred_check_branch
        %123 = sbr.rel (%p121) target = $region20
      $region19: #{static_unconditional_gan_forward.12} parent=11 // pred_region
        _
      $region20: #{static_unconditional_gan_forward.12} parent=11 // pred_fallthru
        _
    $region12: #{static_unconditional_gan_forward.12} parent=5 // pred_fallthru
      _
    %p124 = scmp.lt.s32.totalorder %s9, 2
    // Predicated region
    $region21: #{static_unconditional_gan_forward.12} parent=5 // pred_check
      %p125 = pneg %p124
    $region22: #{static_unconditional_gan_forward.12} parent=5 // pred_check_branch
      %127 = sbr.rel (%p125) target = $region24
    $region23: #{static_unconditional_gan_forward.12} parent=5 // pred_region
      // Predicated region
      $region25: #{static_unconditional_gan_forward.12} parent=23 // pred_check
        %p128 = pneg %p29
      $region26: #{static_unconditional_gan_forward.12} parent=23 // pred_check_branch
        %130 = sbr.rel (%p128) target = $region28
      $region27: #{static_unconditional_gan_forward.12} parent=23 // pred_region
        %s131 = smul.u32 64, %s9
        %p132 = scmp.lt.s32.totalorder %s131, 127
        %s133 = scalar_select %p132, %s131, 127
        %s134 = smul.addr %s133, 2
        %s135 = smul.addr %s134, 4
        %s136 = scalar_lea.vmem %s0, %s135
        %s137 = smul.u32 64, %s9
      $region28: #{static_unconditional_gan_forward.12} parent=23 // pred_fallthru
        _
    $region24: #{static_unconditional_gan_forward.12} parent=5 // pred_fallthru
      _
    %p138 = scmp.le.s32.totalorder 1, %s9
    %p139 = scmp.lt.s32.totalorder %s9, 3
    %p140 = pnand %p138, %p139
    %p141 = pneg %p140
    // Predicated region
    $region29: #{static_unconditional_gan_forward.12} parent=5 // pred_check
      _
    $region30: #{static_unconditional_gan_forward.12} parent=5 // pred_check_branch
      %143 = sbr.rel (%p140) target = $region32
    $region31: #{static_unconditional_gan_forward.12} parent=5 // pred_region
      %s144 = ssub.s32 %s9, 1
      %s145 = smul.u32 64, %s14
      %p146 = scmp.lt.s32.totalorder %s145, 127
      %s147 = scalar_select %p146, %s145, 127
      %s148 = smul.addr %s147, 2
      %s149 = smul.addr %s148, 4
      %s150 = scalar_lea.vmem %s0, %s149
      %p151 = pneg %p35
      %p152 = pneg %p32
      %p153 = pneg %p56
      %p154 = pneg %p53
      %p155 = pneg %p77
      %p156 = pneg %p74
      %p157 = pneg %p103
      %p158 = pneg %p100
      %s159 = smul.u32 64, %s14
      %p160 = scmp.lt.s32.totalorder %s159, 127
      %s161 = scalar_select %p160, %s159, 127
      %s162 = smul.addr %s161, 8
      %s163 = scalar_lea.vmem %s3, %s162
      %s164 = smul.u32 64, %s14
      %p165 = scmp.lt.s32.totalorder %s164, 127
      %s166 = scalar_select %p165, %s164, 127
      %s167 = smul.addr %s166, 2
      %s168 = smul.addr %s167, 4
      %s169 = scalar_lea.vmem %s0, %s168
      %s170 = smul.u32 64, %s14
      %s171 = smul.u32 64, %s14
      %p172 = scmp.lt.s32.totalorder %s171, 127
      %s173 = scalar_select %p172, %s171, 127
      %s174 = smul.addr %s173, 8
      %s175 = scalar_lea.vmem %s3, %s174
      %s176 = smul.u32 64, %s14
      %v178 = vld [vmem:[%s169] sm:$0xff]
      %v179 = vld [vmem:[%s169 + $0x8] sm:$0xff]
      %v180 = vld [vmem:[%s169 + $0x10] sm:$0xff]
      %v181 = vld [vmem:[%s169 + $0x18] sm:$0xff]
      %v182 = vld [vmem:[%s169 + $0x20] sm:$0xff]
      %v183 = vld [vmem:[%s169 + $0x28] sm:$0xff]
      %v184 = vld [vmem:[%s169 + $0x30] sm:$0xff]
      %v185 = vld [vmem:[%s169 + $0x38] sm:$0xff]
      %v186 = vld [vmem:[%s169 + $0x40] sm:$0xff]
      %v187 = vld [vmem:[%s169 + $0x48] sm:$0xff]
      %v188 = vld [vmem:[%s169 + $0x50] sm:$0xff]
      %v189 = vld [vmem:[%s169 + $0x58] sm:$0xff]
      %v190 = vld [vmem:[%s169 + $0x60] sm:$0xff]
      %v191 = vld [vmem:[%s169 + $0x68] sm:$0xff]
      %v192 = vld [vmem:[%s169 + $0x70] sm:$0xff]
      %v193 = vld [vmem:[%s169 + $0x78] sm:$0xff]
      %v194 = vld [vmem:[%s169 + $0x80] sm:$0xff]
      %v195 = vld [vmem:[%s169 + $0x88] sm:$0xff]
      %v196 = vld [vmem:[%s169 + $0x90] sm:$0xff]
      %v197 = vld [vmem:[%s169 + $0x98] sm:$0xff]
      %v198 = vld [vmem:[%s169 + $0xa0] sm:$0xff]
      %v199 = vld [vmem:[%s169 + $0xa8] sm:$0xff]
      %v200 = vld [vmem:[%s169 + $0xb0] sm:$0xff]
      %v201 = vld [vmem:[%s169 + $0xb8] sm:$0xff]
      %v202 = vld [vmem:[%s169 + $0xc0] sm:$0xff]
      %v203 = vld [vmem:[%s169 + $0xc8] sm:$0xff]
      %v204 = vld [vmem:[%s169 + $0xd0] sm:$0xff]
      %v205 = vld [vmem:[%s169 + $0xd8] sm:$0xff]
      %v206 = vld [vmem:[%s169 + $0xe0] sm:$0xff]
      %v207 = vld [vmem:[%s169 + $0xe8] sm:$0xff]
      %v208 = vld [vmem:[%s169 + $0xf0] sm:$0xff]
      %v209 = vld [vmem:[%s169 + $0xf8] sm:$0xff]
      %v210 = vld [vmem:[%s169 + $0x100] sm:$0xff]
      %v211 = vld [vmem:[%s169 + $0x108] sm:$0xff]
      %v212 = vld [vmem:[%s169 + $0x110] sm:$0xff]
      %v213 = vld [vmem:[%s169 + $0x118] sm:$0xff]
      %v214 = vld [vmem:[%s169 + $0x120] sm:$0xff]
      %v215 = vld [vmem:[%s169 + $0x128] sm:$0xff]
      %v216 = vld [vmem:[%s169 + $0x130] sm:$0xff]
      %v217 = vld [vmem:[%s169 + $0x138] sm:$0xff]
      %v218 = vld [vmem:[%s169 + $0x140] sm:$0xff]
      %v219 = vld [vmem:[%s169 + $0x148] sm:$0xff]
      %v220 = vld [vmem:[%s169 + $0x150] sm:$0xff]
      %v221 = vld [vmem:[%s169 + $0x158] sm:$0xff]
      %v222 = vld [vmem:[%s169 + $0x160] sm:$0xff]
      %v223 = vld [vmem:[%s169 + $0x168] sm:$0xff]
      %v224 = vld [vmem:[%s169 + $0x170] sm:$0xff]
      %v225 = vld [vmem:[%s169 + $0x178] sm:$0xff]
      %v226 = vld [vmem:[%s169 + $0x180] sm:$0xff]
      %v227 = vld [vmem:[%s169 + $0x188] sm:$0xff]
      %v228 = vld [vmem:[%s169 + $0x190] sm:$0xff]
      %v229 = vld [vmem:[%s169 + $0x198] sm:$0xff]
      %v230 = vld [vmem:[%s169 + $0x1a0] sm:$0xff]
      %v231 = vld [vmem:[%s169 + $0x1a8] sm:$0xff]
      %v232 = vld [vmem:[%s169 + $0x1b0] sm:$0xff]
      %v233 = vld [vmem:[%s169 + $0x1b8] sm:$0xff]
      %v234 = vld [vmem:[%s169 + $0x1c0] sm:$0xff]
      %v235 = vld [vmem:[%s169 + $0x1c8] sm:$0xff]
      %v236 = vld [vmem:[%s169 + $0x1d0] sm:$0xff]
      %v237 = vld [vmem:[%s169 + $0x1d8] sm:$0xff]
      %v238 = vld [vmem:[%s169 + $0x1e0] sm:$0xff]
      %v239 = vld [vmem:[%s169 + $0x1e8] sm:$0xff]
      %v240 = vld [vmem:[%s169 + $0x1f0] sm:$0xff]
      %v241 = vld [vmem:[%s169 + $0x1f8] sm:$0xff]
      %v242 = vld [vmem:[%s1] sm:$0xf]
      %v243 = vld [vmem:[%s1 + $0x4] sm:$0xf]
      %v244 = vld [vmem:[%s1 + $0x8] sm:$0xf]
      %v245 = vld [vmem:[%s1 + $0xc] sm:$0xf]
      %v246 = vld [vmem:[%s1 + $0x10] sm:$0xf]
      %v247 = vld [vmem:[%s1 + $0x14] sm:$0xf]
      %v248 = vld [vmem:[%s1 + $0x18] sm:$0xf]
      %v249 = vld [vmem:[%s1 + $0x1c] sm:$0xf]
      %v250 = vld [vmem:[%s1 + $0x20] sm:$0xf]
      %v251 = vld [vmem:[%s1 + $0x24] sm:$0xf]
      %v252 = vld [vmem:[%s1 + $0x28] sm:$0xf]
      %v253 = vld [vmem:[%s1 + $0x2c] sm:$0xf]
      %v254 = vld [vmem:[%s1 + $0x30] sm:$0xf]
      %v255 = vld [vmem:[%s1 + $0x34] sm:$0xf]
      %v256 = vld [vmem:[%s1 + $0x38] sm:$0xf]
      %v257 = vld [vmem:[%s1 + $0x3c] sm:$0xf]
      %v258 = vld [vmem:[%s1 + $0x40] sm:$0xf]
      %v259 = vld [vmem:[%s1 + $0x44] sm:$0xf]
      %v260 = vld [vmem:[%s1 + $0x48] sm:$0xf]
      %v261 = vld [vmem:[%s1 + $0x4c] sm:$0xf]
      %v262 = vld [vmem:[%s1 + $0x50] sm:$0xf]
      %v263 = vld [vmem:[%s1 + $0x54] sm:$0xf]
      %v264 = vld [vmem:[%s1 + $0x58] sm:$0xf]
      %v265 = vld [vmem:[%s1 + $0x5c] sm:$0xf]
      %v266 = vld [vmem:[%s1 + $0x60] sm:$0xf]
      %v267 = vld [vmem:[%s1 + $0x64] sm:$0xf]
      %v268 = vld [vmem:[%s1 + $0x68] sm:$0xf]
      %v269 = vld [vmem:[%s1 + $0x6c] sm:$0xf]
      %v270 = vld [vmem:[%s1 + $0x70] sm:$0xf]
      %v271 = vld [vmem:[%s1 + $0x74] sm:$0xf]
      %v272 = vld [vmem:[%s1 + $0x78] sm:$0xf]
      %v273 = vld [vmem:[%s1 + $0x7c] sm:$0xf]
      %v274 = vld [vmem:[%s2] sm:$0x1]
      %v276 = vlaneseq
      %v277 = vshrl.u32 %v276, 7
      %v278 = vsub.s32 0, %v277
      %v279 = vrot.slane %v274, %v278
      %v345 = vunpack.c.l.b16 %v178
      %v346 = vunpack.c.h.b16 %v178
      %v347 = vunpack.c.l.b16 %v179
      %v348 = vunpack.c.h.b16 %v179
      %v349 = vunpack.c.l.b16 %v180
      %v350 = vunpack.c.h.b16 %v180
      %v351 = vunpack.c.l.b16 %v181
      %v352 = vunpack.c.h.b16 %v181
      %v353 = vunpack.c.l.b16 %v182
      %v354 = vunpack.c.h.b16 %v182
      %v355 = vunpack.c.l.b16 %v183
      %v356 = vunpack.c.h.b16 %v183
      %v357 = vunpack.c.l.b16 %v184
      %v358 = vunpack.c.h.b16 %v184
      %v359 = vunpack.c.l.b16 %v185
      %v360 = vunpack.c.h.b16 %v185
      %v361 = vunpack.c.l.b16 %v186
      %v362 = vunpack.c.h.b16 %v186
      %v363 = vunpack.c.l.b16 %v187
      %v364 = vunpack.c.h.b16 %v187
      %v365 = vunpack.c.l.b16 %v188
      %v366 = vunpack.c.h.b16 %v188
      %v367 = vunpack.c.l.b16 %v189
      %v368 = vunpack.c.h.b16 %v189
      %v369 = vunpack.c.l.b16 %v190
      %v370 = vunpack.c.h.b16 %v190
      %v371 = vunpack.c.l.b16 %v191
      %v372 = vunpack.c.h.b16 %v191
      %v373 = vunpack.c.l.b16 %v192
      %v374 = vunpack.c.h.b16 %v192
      %v375 = vunpack.c.l.b16 %v193
      %v376 = vunpack.c.h.b16 %v193
      %v377 = vunpack.c.l.b16 %v194
      %v378 = vunpack.c.h.b16 %v194
      %v379 = vunpack.c.l.b16 %v195
      %v380 = vunpack.c.h.b16 %v195
      %v381 = vunpack.c.l.b16 %v196
      %v382 = vunpack.c.h.b16 %v196
      %v383 = vunpack.c.l.b16 %v197
      %v384 = vunpack.c.h.b16 %v197
      %v385 = vunpack.c.l.b16 %v198
      %v386 = vunpack.c.h.b16 %v198
      %v387 = vunpack.c.l.b16 %v199
      %v388 = vunpack.c.h.b16 %v199
      %v389 = vunpack.c.l.b16 %v200
      %v390 = vunpack.c.h.b16 %v200
      %v391 = vunpack.c.l.b16 %v201
      %v392 = vunpack.c.h.b16 %v201
      %v393 = vunpack.c.l.b16 %v202
      %v394 = vunpack.c.h.b16 %v202
      %v395 = vunpack.c.l.b16 %v203
      %v396 = vunpack.c.h.b16 %v203
      %v397 = vunpack.c.l.b16 %v204
      %v398 = vunpack.c.h.b16 %v204
      %v399 = vunpack.c.l.b16 %v205
      %v400 = vunpack.c.h.b16 %v205
      %v401 = vunpack.c.l.b16 %v206
      %v402 = vunpack.c.h.b16 %v206
      %v403 = vunpack.c.l.b16 %v207
      %v404 = vunpack.c.h.b16 %v207
      %v405 = vunpack.c.l.b16 %v208
      %v406 = vunpack.c.h.b16 %v208
      %v407 = vunpack.c.l.b16 %v209
      %v408 = vunpack.c.h.b16 %v209
      %v409 = vunpack.c.l.b16 %v210
      %v410 = vunpack.c.h.b16 %v210
      %v411 = vunpack.c.l.b16 %v211
      %v412 = vunpack.c.h.b16 %v211
      %v413 = vunpack.c.l.b16 %v212
      %v414 = vunpack.c.h.b16 %v212
      %v415 = vunpack.c.l.b16 %v213
      %v416 = vunpack.c.h.b16 %v213
      %v417 = vunpack.c.l.b16 %v214
      %v418 = vunpack.c.h.b16 %v214
      %v419 = vunpack.c.l.b16 %v215
      %v420 = vunpack.c.h.b16 %v215
      %v421 = vunpack.c.l.b16 %v216
      %v422 = vunpack.c.h.b16 %v216
      %v423 = vunpack.c.l.b16 %v217
      %v424 = vunpack.c.h.b16 %v217
      %v425 = vunpack.c.l.b16 %v218
      %v426 = vunpack.c.h.b16 %v218
      %v427 = vunpack.c.l.b16 %v219
      %v428 = vunpack.c.h.b16 %v219
      %v429 = vunpack.c.l.b16 %v220
      %v430 = vunpack.c.h.b16 %v220
      %v431 = vunpack.c.l.b16 %v221
      %v432 = vunpack.c.h.b16 %v221
      %v433 = vunpack.c.l.b16 %v222
      %v434 = vunpack.c.h.b16 %v222
      %v435 = vunpack.c.l.b16 %v223
      %v436 = vunpack.c.h.b16 %v223
      %v437 = vunpack.c.l.b16 %v224
      %v438 = vunpack.c.h.b16 %v224
      %v439 = vunpack.c.l.b16 %v225
      %v440 = vunpack.c.h.b16 %v225
      %v441 = vunpack.c.l.b16 %v226
      %v442 = vunpack.c.h.b16 %v226
      %v443 = vunpack.c.l.b16 %v227
      %v444 = vunpack.c.h.b16 %v227
      %v445 = vunpack.c.l.b16 %v228
      %v446 = vunpack.c.h.b16 %v228
      %v447 = vunpack.c.l.b16 %v229
      %v448 = vunpack.c.h.b16 %v229
      %v449 = vunpack.c.l.b16 %v230
      %v450 = vunpack.c.h.b16 %v230
      %v451 = vunpack.c.l.b16 %v231
      %v452 = vunpack.c.h.b16 %v231
      %v453 = vunpack.c.l.b16 %v232
      %v454 = vunpack.c.h.b16 %v232
      %v455 = vunpack.c.l.b16 %v233
      %v456 = vunpack.c.h.b16 %v233
      %v457 = vunpack.c.l.b16 %v234
      %v458 = vunpack.c.h.b16 %v234
      %v459 = vunpack.c.l.b16 %v235
      %v460 = vunpack.c.h.b16 %v235
      %v461 = vunpack.c.l.b16 %v236
      %v462 = vunpack.c.h.b16 %v236
      %v463 = vunpack.c.l.b16 %v237
      %v464 = vunpack.c.h.b16 %v237
      %v465 = vunpack.c.l.b16 %v238
      %v466 = vunpack.c.h.b16 %v238
      %v467 = vunpack.c.l.b16 %v239
      %v468 = vunpack.c.h.b16 %v239
      %v469 = vunpack.c.l.b16 %v240
      %v470 = vunpack.c.h.b16 %v240
      %v471 = vunpack.c.l.b16 %v241
      %v472 = vunpack.c.h.b16 %v241
      %v473 = vpack.c.b16 %v347, %v345
      %v474 = vpack.c.b16 %v348, %v346
      %v475 = vpack.c.b16 %v351, %v349
      %v476 = vpack.c.b16 %v352, %v350
      %v477 = vpack.c.b16 %v355, %v353
      %v478 = vpack.c.b16 %v356, %v354
      %v479 = vpack.c.b16 %v359, %v357
      %v480 = vpack.c.b16 %v360, %v358
      %v481 = vpack.c.b16 %v363, %v361
      %v482 = vpack.c.b16 %v364, %v362
      %v483 = vpack.c.b16 %v367, %v365
      %v484 = vpack.c.b16 %v368, %v366
      %v485 = vpack.c.b16 %v371, %v369
      %v486 = vpack.c.b16 %v372, %v370
      %v487 = vpack.c.b16 %v375, %v373
      %v488 = vpack.c.b16 %v376, %v374
      %v489 = vpack.c.b16 %v379, %v377
      %v490 = vpack.c.b16 %v380, %v378
      %v491 = vpack.c.b16 %v383, %v381
      %v492 = vpack.c.b16 %v384, %v382
      %v493 = vpack.c.b16 %v387, %v385
      %v494 = vpack.c.b16 %v388, %v386
      %v495 = vpack.c.b16 %v391, %v389
      %v496 = vpack.c.b16 %v392, %v390
      %v497 = vpack.c.b16 %v395, %v393
      %v498 = vpack.c.b16 %v396, %v394
      %v499 = vpack.c.b16 %v399, %v397
      %v500 = vpack.c.b16 %v400, %v398
      %v501 = vpack.c.b16 %v403, %v401
      %v502 = vpack.c.b16 %v404, %v402
      %v503 = vpack.c.b16 %v407, %v405
      %v504 = vpack.c.b16 %v408, %v406
      %v505 = vpack.c.b16 %v411, %v409
      %v506 = vpack.c.b16 %v412, %v410
      %v507 = vpack.c.b16 %v415, %v413
      %v508 = vpack.c.b16 %v416, %v414
      %v509 = vpack.c.b16 %v419, %v417
      %v510 = vpack.c.b16 %v420, %v418
      %v511 = vpack.c.b16 %v423, %v421
      %v512 = vpack.c.b16 %v424, %v422
      %v513 = vpack.c.b16 %v427, %v425
      %v514 = vpack.c.b16 %v428, %v426
      %v515 = vpack.c.b16 %v431, %v429
      %v516 = vpack.c.b16 %v432, %v430
      %v517 = vpack.c.b16 %v435, %v433
      %v518 = vpack.c.b16 %v436, %v434
      %v519 = vpack.c.b16 %v439, %v437
      %v520 = vpack.c.b16 %v440, %v438
      %v521 = vpack.c.b16 %v443, %v441
      %v522 = vpack.c.b16 %v444, %v442
      %v523 = vpack.c.b16 %v447, %v445
      %v524 = vpack.c.b16 %v448, %v446
      %v525 = vpack.c.b16 %v451, %v449
      %v526 = vpack.c.b16 %v452, %v450
      %v527 = vpack.c.b16 %v455, %v453
      %v528 = vpack.c.b16 %v456, %v454
      %v529 = vpack.c.b16 %v459, %v457
      %v530 = vpack.c.b16 %v460, %v458
      %v531 = vpack.c.b16 %v463, %v461
      %v532 = vpack.c.b16 %v464, %v462
      %v533 = vpack.c.b16 %v467, %v465
      %v534 = vpack.c.b16 %v468, %v466
      %v535 = vpack.c.b16 %v471, %v469
      %v536 = vpack.c.b16 %v472, %v470
      %v633 = vunpack.c.l.b16 %v242
      %v634 = vunpack.c.l.b16 %v243
      %v635 = vunpack.c.l.b16 %v244
      %v636 = vunpack.c.l.b16 %v245
      %v637 = vunpack.c.l.b16 %v246
      %v638 = vunpack.c.l.b16 %v247
      %v639 = vunpack.c.l.b16 %v248
      %v640 = vunpack.c.l.b16 %v249
      %v641 = vunpack.c.l.b16 %v250
      %v642 = vunpack.c.l.b16 %v251
      %v643 = vunpack.c.l.b16 %v252
      %v644 = vunpack.c.l.b16 %v253
      %v645 = vunpack.c.l.b16 %v254
      %v646 = vunpack.c.l.b16 %v255
      %v647 = vunpack.c.l.b16 %v256
      %v648 = vunpack.c.l.b16 %v257
      %v649 = vunpack.c.l.b16 %v258
      %v650 = vunpack.c.l.b16 %v259
      %v651 = vunpack.c.l.b16 %v260
      %v652 = vunpack.c.l.b16 %v261
      %v653 = vunpack.c.l.b16 %v262
      %v654 = vunpack.c.l.b16 %v263
      %v655 = vunpack.c.l.b16 %v264
      %v656 = vunpack.c.l.b16 %v265
      %v657 = vunpack.c.l.b16 %v266
      %v658 = vunpack.c.l.b16 %v267
      %v659 = vunpack.c.l.b16 %v268
      %v660 = vunpack.c.l.b16 %v269
      %v661 = vunpack.c.l.b16 %v270
      %v662 = vunpack.c.l.b16 %v271
      %v663 = vunpack.c.l.b16 %v272
      %v664 = vunpack.c.l.b16 %v273
      %v665 = vpack.c.b16 %v634, %v633
      %v666 = vpack.c.b16 %v636, %v635
      %v667 = vpack.c.b16 %v638, %v637
      %v668 = vpack.c.b16 %v640, %v639
      %v669 = vpack.c.b16 %v642, %v641
      %v670 = vpack.c.b16 %v644, %v643
      %v671 = vpack.c.b16 %v646, %v645
      %v672 = vpack.c.b16 %v648, %v647
      %v673 = vpack.c.b16 %v650, %v649
      %v674 = vpack.c.b16 %v652, %v651
      %v675 = vpack.c.b16 %v654, %v653
      %v676 = vpack.c.b16 %v656, %v655
      %v677 = vpack.c.b16 %v658, %v657
      %v678 = vpack.c.b16 %v660, %v659
      %v679 = vpack.c.b16 %v662, %v661
      %v680 = vpack.c.b16 %v664, %v663
      %697 = vmatprep.subr.bf16.mxu0 0
      %698 = vmatpush1.bf16.msra.mxu0 %v665
      %699 = vmatprep.subr.bf16.mxu0 0
      %700 = vmatpush1.bf16.msra.mxu0 %v666
      %701 = vmatprep.subr.bf16.mxu0 0
      %702 = vmatpush1.bf16.msra.mxu0 %v667
      %703 = vmatprep.subr.bf16.mxu0 0
      %704 = vmatpush1.bf16.msra.mxu0 %v668
      %705 = vmatprep.subr.bf16.mxu0 0
      %706 = vmatpush1.bf16.msra.mxu0 %v669
      %707 = vmatprep.subr.bf16.mxu0 0
      %708 = vmatpush1.bf16.msra.mxu0 %v670
      %709 = vmatprep.subr.bf16.mxu0 0
      %710 = vmatpush1.bf16.msra.mxu0 %v671
      %711 = vmatprep.subr.bf16.mxu0 0
      %712 = vmatpush1.bf16.msra.mxu0 %v672
      %713 = vmatprep.subr.bf16.mxu0 0
      %714 = vmatpush1.bf16.msra.mxu0 %v673
      %715 = vmatprep.subr.bf16.mxu0 0
      %716 = vmatpush1.bf16.msra.mxu0 %v674
      %717 = vmatprep.subr.bf16.mxu0 0
      %718 = vmatpush1.bf16.msra.mxu0 %v675
      %719 = vmatprep.subr.bf16.mxu0 0
      %720 = vmatpush1.bf16.msra.mxu0 %v676
      %721 = vmatprep.subr.bf16.mxu0 0
      %722 = vmatpush1.bf16.msra.mxu0 %v677
      %723 = vmatprep.subr.bf16.mxu0 0
      %724 = vmatpush1.bf16.msra.mxu0 %v678
      %725 = vmatprep.subr.bf16.mxu0 0
      %726 = vmatpush1.bf16.msra.mxu0 %v679
      %727 = vmatprep.subr.bf16.mxu0 0
      %728 = vmatpush1.bf16.msra.mxu0 %v680
      %729 = vmatprep.mubr.bf16.mxu0 %v474
      %730 = vmatmul.mubr.bf16.gmra.mrb[0].mxu0 %v473
      %v731 = vpop.f32.mrb[0].mxu0
      %v732 = vadd.f32 %v279, %v731
      %v733 = vpop.f32.mrb[0].mxu0
      %v734 = vpop.f32.mrb[0].mxu0
      %v735 = vadd.f32 %v279, %v734
      %v736 = vpop.f32.mrb[0].mxu0
      %737 = vmatprep.mubr.bf16.mxu0 %v476
      %738 = vmatmul.mubr.bf16.gmra.mrb[0].mxu0 %v475
      %v739 = vpop.f32.mrb[0].mxu0
      %v740 = vadd.f32 %v279, %v739
      %v741 = vpop.f32.mrb[0].mxu0
      %v742 = vpop.f32.mrb[0].mxu0
      %v743 = vadd.f32 %v279, %v742
      %v744 = vpop.f32.mrb[0].mxu0
      %745 = vmatprep.mubr.bf16.mxu0 %v478
      %746 = vmatmul.mubr.bf16.gmra.mrb[0].mxu0 %v477
      %v747 = vpop.f32.mrb[0].mxu0
      %v748 = vadd.f32 %v279, %v747
      %v749 = vpop.f32.mrb[0].mxu0
      %v750 = vpop.f32.mrb[0].mxu0
      %v751 = vadd.f32 %v279, %v750
      %v752 = vpop.f32.mrb[0].mxu0
      %753 = vmatprep.mubr.bf16.mxu0 %v480
      %754 = vmatmul.mubr.bf16.gmra.mrb[0].mxu0 %v479
      %v755 = vpop.f32.mrb[0].mxu0
      %v756 = vadd.f32 %v279, %v755
      %v757 = vpop.f32.mrb[0].mxu0
      %v758 = vpop.f32.mrb[0].mxu0
      %v759 = vadd.f32 %v279, %v758
      %v760 = vpop.f32.mrb[0].mxu0
      %761 = vmatprep.mubr.bf16.mxu0 %v482
      %762 = vmatmul.mubr.bf16.gmra.mrb[0].mxu0 %v481
      %v763 = vpop.f32.mrb[0].mxu0
      %v764 = vadd.f32 %v279, %v763
      %v765 = vpop.f32.mrb[0].mxu0
      %v766 = vpop.f32.mrb[0].mxu0
      %v767 = vadd.f32 %v279, %v766
      %v768 = vpop.f32.mrb[0].mxu0
      %769 = vmatprep.mubr.bf16.mxu0 %v484
      %770 = vmatmul.mubr.bf16.gmra.mrb[0].mxu0 %v483
      %v771 = vpop.f32.mrb[0].mxu0
      %v772 = vadd.f32 %v279, %v771
      %v773 = vpop.f32.mrb[0].mxu0
      %v774 = vpop.f32.mrb[0].mxu0
      %v775 = vadd.f32 %v279, %v774
      %v776 = vpop.f32.mrb[0].mxu0
      %777 = vmatprep.mubr.bf16.mxu0 %v486
      %778 = vmatmul.mubr.bf16.gmra.mrb[0].mxu0 %v485
      %v779 = vpop.f32.mrb[0].mxu0
      %v780 = vadd.f32 %v279, %v779
      %v781 = vpop.f32.mrb[0].mxu0
      %v782 = vpop.f32.mrb[0].mxu0
      %v783 = vadd.f32 %v279, %v782
      %v784 = vpop.f32.mrb[0].mxu0
      %785 = vmatprep.mubr.bf16.mxu0 %v488
      %786 = vmatmul.mubr.bf16.gmra.mrb[0].mxu0 %v487
      %v787 = vpop.f32.mrb[0].mxu0
      %v788 = vadd.f32 %v279, %v787
      %v789 = vpop.f32.mrb[0].mxu0
      %v790 = vpop.f32.mrb[0].mxu0
      %v791 = vadd.f32 %v279, %v790
      %v792 = vpop.f32.mrb[0].mxu0
      %793 = vmatprep.mubr.bf16.mxu0 %v490
      %794 = vmatmul.mubr.bf16.gmra.mrb[0].mxu0 %v489
      %v795 = vpop.f32.mrb[0].mxu0
      %v796 = vadd.f32 %v279, %v795
      %v797 = vpop.f32.mrb[0].mxu0
      %v798 = vpop.f32.mrb[0].mxu0
      %v799 = vadd.f32 %v279, %v798
      %v800 = vpop.f32.mrb[0].mxu0
      %801 = vmatprep.mubr.bf16.mxu0 %v492
      %802 = vmatmul.mubr.bf16.gmra.mrb[0].mxu0 %v491
      %v803 = vpop.f32.mrb[0].mxu0
      %v804 = vadd.f32 %v279, %v803
      %v805 = vpop.f32.mrb[0].mxu0
      %v806 = vpop.f32.mrb[0].mxu0
      %v807 = vadd.f32 %v279, %v806
      %v808 = vpop.f32.mrb[0].mxu0
      %809 = vmatprep.mubr.bf16.mxu0 %v494
      %810 = vmatmul.mubr.bf16.gmra.mrb[0].mxu0 %v493
      %v811 = vpop.f32.mrb[0].mxu0
      %v812 = vadd.f32 %v279, %v811
      %v813 = vpop.f32.mrb[0].mxu0
      %v814 = vpop.f32.mrb[0].mxu0
      %v815 = vadd.f32 %v279, %v814
      %v816 = vpop.f32.mrb[0].mxu0
      %817 = vmatprep.mubr.bf16.mxu0 %v496
      %818 = vmatmul.mubr.bf16.gmra.mrb[0].mxu0 %v495
      %v819 = vpop.f32.mrb[0].mxu0
      %v820 = vadd.f32 %v279, %v819
      %v821 = vpop.f32.mrb[0].mxu0
      %v822 = vpop.f32.mrb[0].mxu0
      %v823 = vadd.f32 %v279, %v822
      %v824 = vpop.f32.mrb[0].mxu0
      %825 = vmatprep.mubr.bf16.mxu0 %v498
      %826 = vmatmul.mubr.bf16.gmra.mrb[0].mxu0 %v497
      %v827 = vpop.f32.mrb[0].mxu0
      %v828 = vadd.f32 %v279, %v827
      %v829 = vpop.f32.mrb[0].mxu0
      %v830 = vpop.f32.mrb[0].mxu0
      %v831 = vadd.f32 %v279, %v830
      %v832 = vpop.f32.mrb[0].mxu0
      %833 = vmatprep.mubr.bf16.mxu0 %v500
      %834 = vmatmul.mubr.bf16.gmra.mrb[0].mxu0 %v499
      %v835 = vpop.f32.mrb[0].mxu0
      %v836 = vadd.f32 %v279, %v835
      %v837 = vpop.f32.mrb[0].mxu0
      %v838 = vpop.f32.mrb[0].mxu0
      %v839 = vadd.f32 %v279, %v838
      %v840 = vpop.f32.mrb[0].mxu0
      %841 = vmatprep.mubr.bf16.mxu0 %v502
      %842 = vmatmul.mubr.bf16.gmra.mrb[0].mxu0 %v501
      %v843 = vpop.f32.mrb[0].mxu0
      %v844 = vadd.f32 %v279, %v843
      %v845 = vpop.f32.mrb[0].mxu0
      %v846 = vpop.f32.mrb[0].mxu0
      %v847 = vadd.f32 %v279, %v846
      %v848 = vpop.f32.mrb[0].mxu0
      %849 = vmatprep.mubr.bf16.mxu0 %v504
      %850 = vmatmul.mubr.bf16.gmra.mrb[0].mxu0 %v503
      %v851 = vpop.f32.mrb[0].mxu0
      %v852 = vadd.f32 %v279, %v851
      %v853 = vpop.f32.mrb[0].mxu0
      %v854 = vpop.f32.mrb[0].mxu0
      %v855 = vadd.f32 %v279, %v854
      %v856 = vpop.f32.mrb[0].mxu0
      %857 = vmatprep.mubr.bf16.mxu0 %v506
      %858 = vmatmul.mubr.bf16.gmra.mrb[0].mxu0 %v505
      %v859 = vpop.f32.mrb[0].mxu0
      %v860 = vadd.f32 %v279, %v859
      %v861 = vpop.f32.mrb[0].mxu0
      %v862 = vpop.f32.mrb[0].mxu0
      %v863 = vadd.f32 %v279, %v862
      %v864 = vpop.f32.mrb[0].mxu0
      %865 = vmatprep.mubr.bf16.mxu0 %v508
      %866 = vmatmul.mubr.bf16.gmra.mrb[0].mxu0 %v507
      %v867 = vpop.f32.mrb[0].mxu0
      %v868 = vadd.f32 %v279, %v867
      %v869 = vpop.f32.mrb[0].mxu0
      %v870 = vpop.f32.mrb[0].mxu0
      %v871 = vadd.f32 %v279, %v870
      %v872 = vpop.f32.mrb[0].mxu0
      %873 = vmatprep.mubr.bf16.mxu0 %v510
      %874 = vmatmul.mubr.bf16.gmra.mrb[0].mxu0 %v509
      %v875 = vpop.f32.mrb[0].mxu0
      %v876 = vadd.f32 %v279, %v875
      %v877 = vpop.f32.mrb[0].mxu0
      %v878 = vpop.f32.mrb[0].mxu0
      %v879 = vadd.f32 %v279, %v878
      %v880 = vpop.f32.mrb[0].mxu0
      %881 = vmatprep.mubr.bf16.mxu0 %v512
      %882 = vmatmul.mubr.bf16.gmra.mrb[0].mxu0 %v511
      %v883 = vpop.f32.mrb[0].mxu0
      %v884 = vadd.f32 %v279, %v883
      %v885 = vpop.f32.mrb[0].mxu0
      %v886 = vpop.f32.mrb[0].mxu0
      %v887 = vadd.f32 %v279, %v886
      %v888 = vpop.f32.mrb[0].mxu0
      %889 = vmatprep.mubr.bf16.mxu0 %v514
      %890 = vmatmul.mubr.bf16.gmra.mrb[0].mxu0 %v513
      %v891 = vpop.f32.mrb[0].mxu0
      %v892 = vadd.f32 %v279, %v891
      %v893 = vpop.f32.mrb[0].mxu0
      %v894 = vpop.f32.mrb[0].mxu0
      %v895 = vadd.f32 %v279, %v894
      %v896 = vpop.f32.mrb[0].mxu0
      %897 = vmatprep.mubr.bf16.mxu0 %v516
      %898 = vmatmul.mubr.bf16.gmra.mrb[0].mxu0 %v515
      %v899 = vpop.f32.mrb[0].mxu0
      %v900 = vadd.f32 %v279, %v899
      %v901 = vpop.f32.mrb[0].mxu0
      %v902 = vpop.f32.mrb[0].mxu0
      %v903 = vadd.f32 %v279, %v902
      %v904 = vpop.f32.mrb[0].mxu0
      %905 = vmatprep.mubr.bf16.mxu0 %v518
      %906 = vmatmul.mubr.bf16.gmra.mrb[0].mxu0 %v517
      %v907 = vpop.f32.mrb[0].mxu0
      %v908 = vadd.f32 %v279, %v907
      %v909 = vpop.f32.mrb[0].mxu0
      %v910 = vpop.f32.mrb[0].mxu0
      %v911 = vadd.f32 %v279, %v910
      %v912 = vpop.f32.mrb[0].mxu0
      %913 = vmatprep.mubr.bf16.mxu0 %v520
      %914 = vmatmul.mubr.bf16.gmra.mrb[0].mxu0 %v519
      %v915 = vpop.f32.mrb[0].mxu0
      %v916 = vadd.f32 %v279, %v915
      %v917 = vpop.f32.mrb[0].mxu0
      %v918 = vpop.f32.mrb[0].mxu0
      %v919 = vadd.f32 %v279, %v918
      %v920 = vpop.f32.mrb[0].mxu0
      %921 = vmatprep.mubr.bf16.mxu0 %v522
      %922 = vmatmul.mubr.bf16.gmra.mrb[0].mxu0 %v521
      %v923 = vpop.f32.mrb[0].mxu0
      %v924 = vadd.f32 %v279, %v923
      %v925 = vpop.f32.mrb[0].mxu0
      %v926 = vpop.f32.mrb[0].mxu0
      %v927 = vadd.f32 %v279, %v926
      %v928 = vpop.f32.mrb[0].mxu0
      %929 = vmatprep.mubr.bf16.mxu0 %v524
      %930 = vmatmul.mubr.bf16.gmra.mrb[0].mxu0 %v523
      %v931 = vpop.f32.mrb[0].mxu0
      %v932 = vadd.f32 %v279, %v931
      %v933 = vpop.f32.mrb[0].mxu0
      %v934 = vpop.f32.mrb[0].mxu0
      %v935 = vadd.f32 %v279, %v934
      %v936 = vpop.f32.mrb[0].mxu0
      %937 = vmatprep.mubr.bf16.mxu0 %v526
      %938 = vmatmul.mubr.bf16.gmra.mrb[0].mxu0 %v525
      %v939 = vpop.f32.mrb[0].mxu0
      %v940 = vadd.f32 %v279, %v939
      %v941 = vpop.f32.mrb[0].mxu0
      %v942 = vpop.f32.mrb[0].mxu0
      %v943 = vadd.f32 %v279, %v942
      %v944 = vpop.f32.mrb[0].mxu0
      %945 = vmatprep.mubr.bf16.mxu0 %v528
      %946 = vmatmul.mubr.bf16.gmra.mrb[0].mxu0 %v527
      %v947 = vpop.f32.mrb[0].mxu0
      %v948 = vadd.f32 %v279, %v947
      %v949 = vpop.f32.mrb[0].mxu0
      %v950 = vpop.f32.mrb[0].mxu0
      %v951 = vadd.f32 %v279, %v950
      %v952 = vpop.f32.mrb[0].mxu0
      %953 = vmatprep.mubr.bf16.mxu0 %v530
      %954 = vmatmul.mubr.bf16.gmra.mrb[0].mxu0 %v529
      %v955 = vpop.f32.mrb[0].mxu0
      %v956 = vadd.f32 %v279, %v955
      %v957 = vpop.f32.mrb[0].mxu0
      %v958 = vpop.f32.mrb[0].mxu0
      %v959 = vadd.f32 %v279, %v958
      %v960 = vpop.f32.mrb[0].mxu0
      %961 = vmatprep.mubr.bf16.mxu0 %v532
      %962 = vmatmul.mubr.bf16.gmra.mrb[0].mxu0 %v531
      %v963 = vpop.f32.mrb[0].mxu0
      %v964 = vadd.f32 %v279, %v963
      %v965 = vpop.f32.mrb[0].mxu0
      %v966 = vpop.f32.mrb[0].mxu0
      %v967 = vadd.f32 %v279, %v966
      %v968 = vpop.f32.mrb[0].mxu0
      %969 = vmatprep.mubr.bf16.mxu0 %v534
      %970 = vmatmul.mubr.bf16.gmra.mrb[0].mxu0 %v533
      %v971 = vpop.f32.mrb[0].mxu0
      %v972 = vadd.f32 %v279, %v971
      %v973 = vpop.f32.mrb[0].mxu0
      %v974 = vpop.f32.mrb[0].mxu0
      %v975 = vadd.f32 %v279, %v974
      %v976 = vpop.f32.mrb[0].mxu0
      %977 = vmatprep.mubr.bf16.mxu0 %v536
      %978 = vmatmul.mubr.bf16.gmra.mrb[0].mxu0 %v535
      %v979 = vpop.f32.mrb[0].mxu0
      %v980 = vadd.f32 %v279, %v979
      %v981 = vpop.f32.mrb[0].mxu0
      %v982 = vpop.f32.mrb[0].mxu0
      %v983 = vadd.f32 %v279, %v982
      %v984 = vpop.f32.mrb[0].mxu0
      %985 = vdwg.mxu0
      %v986 = vtanh.pop %v732
      %v987 = vtanh.pop %v735
      %v988 = vtanh.pop %v740
      %v989 = vtanh.pop %v743
      %v990 = vtanh.pop %v748
      %v991 = vtanh.pop %v751
      %v992 = vtanh.pop %v756
      %v993 = vtanh.pop %v759
      %v994 = vtanh.pop %v764
      %v995 = vtanh.pop %v767
      %v996 = vtanh.pop %v772
      %v997 = vtanh.pop %v775
      %v998 = vtanh.pop %v780
      %v999 = vtanh.pop %v783
      %v1000 = vtanh.pop %v788
      %v1001 = vtanh.pop %v791
      %v1002 = vtanh.pop %v796
      %v1003 = vtanh.pop %v799
      %v1004 = vtanh.pop %v804
      %v1005 = vtanh.pop %v807
      %v1006 = vtanh.pop %v812
      %v1007 = vtanh.pop %v815
      %v1008 = vtanh.pop %v820
      %v1009 = vtanh.pop %v823
      %v1010 = vtanh.pop %v828
      %v1011 = vtanh.pop %v831
      %v1012 = vtanh.pop %v836
      %v1013 = vtanh.pop %v839
      %v1014 = vtanh.pop %v844
      %v1015 = vtanh.pop %v847
      %v1016 = vtanh.pop %v852
      %v1017 = vtanh.pop %v855
      %v1018 = vtanh.pop %v860
      %v1019 = vtanh.pop %v863
      %v1020 = vtanh.pop %v868
      %v1021 = vtanh.pop %v871
      %v1022 = vtanh.pop %v876
      %v1023 = vtanh.pop %v879
      %v1024 = vtanh.pop %v884
      %v1025 = vtanh.pop %v887
      %v1026 = vtanh.pop %v892
      %v1027 = vtanh.pop %v895
      %v1028 = vtanh.pop %v900
      %v1029 = vtanh.pop %v903
      %v1030 = vtanh.pop %v908
      %v1031 = vtanh.pop %v911
      %v1032 = vtanh.pop %v916
      %v1033 = vtanh.pop %v919
      %v1034 = vtanh.pop %v924
      %v1035 = vtanh.pop %v927
      %v1036 = vtanh.pop %v932
      %v1037 = vtanh.pop %v935
      %v1038 = vtanh.pop %v940
      %v1039 = vtanh.pop %v943
      %v1040 = vtanh.pop %v948
      %v1041 = vtanh.pop %v951
      %v1042 = vtanh.pop %v956
      %v1043 = vtanh.pop %v959
      %v1044 = vtanh.pop %v964
      %v1045 = vtanh.pop %v967
      %v1046 = vtanh.pop %v972
      %v1047 = vtanh.pop %v975
      %v1048 = vtanh.pop %v980
      %v1049 = vtanh.pop %v983
      %1050 = vst [vmem:[%s175] sm:$0xff] %v986
      %1051 = vst [vmem:[%s175 + $0x8] sm:$0xff] %v987
      %1052 = vst [vmem:[%s175 + $0x10] sm:$0xff] %v988
      %1053 = vst [vmem:[%s175 + $0x18] sm:$0xff] %v989
      %1054 = vst [vmem:[%s175 + $0x20] sm:$0xff] %v990
      %1055 = vst [vmem:[%s175 + $0x28] sm:$0xff] %v991
      %1056 = vst [vmem:[%s175 + $0x30] sm:$0xff] %v992
      %1057 = vst [vmem:[%s175 + $0x38] sm:$0xff] %v993
      %1058 = vst [vmem:[%s175 + $0x40] sm:$0xff] %v994
      %1059 = vst [vmem:[%s175 + $0x48] sm:$0xff] %v995
      %1060 = vst [vmem:[%s175 + $0x50] sm:$0xff] %v996
      %1061 = vst [vmem:[%s175 + $0x58] sm:$0xff] %v997
      %1062 = vst [vmem:[%s175 + $0x60] sm:$0xff] %v998
      %1063 = vst [vmem:[%s175 + $0x68] sm:$0xff] %v999
      %1064 = vst [vmem:[%s175 + $0x70] sm:$0xff] %v1000
      %1065 = vst [vmem:[%s175 + $0x78] sm:$0xff] %v1001
      %1066 = vst [vmem:[%s175 + $0x80] sm:$0xff] %v1002
      %1067 = vst [vmem:[%s175 + $0x88] sm:$0xff] %v1003
      %1068 = vst [vmem:[%s175 + $0x90] sm:$0xff] %v1004
      %1069 = vst [vmem:[%s175 + $0x98] sm:$0xff] %v1005
      %1070 = vst [vmem:[%s175 + $0xa0] sm:$0xff] %v1006
      %1071 = vst [vmem:[%s175 + $0xa8] sm:$0xff] %v1007
      %1072 = vst [vmem:[%s175 + $0xb0] sm:$0xff] %v1008
      %1073 = vst [vmem:[%s175 + $0xb8] sm:$0xff] %v1009
      %1074 = vst [vmem:[%s175 + $0xc0] sm:$0xff] %v1010
      %1075 = vst [vmem:[%s175 + $0xc8] sm:$0xff] %v1011
      %1076 = vst [vmem:[%s175 + $0xd0] sm:$0xff] %v1012
      %1077 = vst [vmem:[%s175 + $0xd8] sm:$0xff] %v1013
      %1078 = vst [vmem:[%s175 + $0xe0] sm:$0xff] %v1014
      %1079 = vst [vmem:[%s175 + $0xe8] sm:$0xff] %v1015
      %1080 = vst [vmem:[%s175 + $0xf0] sm:$0xff] %v1016
      %1081 = vst [vmem:[%s175 + $0xf8] sm:$0xff] %v1017
      %1082 = vst [vmem:[%s175 + $0x100] sm:$0xff] %v1018
      %1083 = vst [vmem:[%s175 + $0x108] sm:$0xff] %v1019
      %1084 = vst [vmem:[%s175 + $0x110] sm:$0xff] %v1020
      %1085 = vst [vmem:[%s175 + $0x118] sm:$0xff] %v1021
      %1086 = vst [vmem:[%s175 + $0x120] sm:$0xff] %v1022
      %1087 = vst [vmem:[%s175 + $0x128] sm:$0xff] %v1023
      %1088 = vst [vmem:[%s175 + $0x130] sm:$0xff] %v1024
      %1089 = vst [vmem:[%s175 + $0x138] sm:$0xff] %v1025
      %1090 = vst [vmem:[%s175 + $0x140] sm:$0xff] %v1026
      %1091 = vst [vmem:[%s175 + $0x148] sm:$0xff] %v1027
      %1092 = vst [vmem:[%s175 + $0x150] sm:$0xff] %v1028
      %1093 = vst [vmem:[%s175 + $0x158] sm:$0xff] %v1029
      %1094 = vst [vmem:[%s175 + $0x160] sm:$0xff] %v1030
      %1095 = vst [vmem:[%s175 + $0x168] sm:$0xff] %v1031
      %1096 = vst [vmem:[%s175 + $0x170] sm:$0xff] %v1032
      %1097 = vst [vmem:[%s175 + $0x178] sm:$0xff] %v1033
      %1098 = vst [vmem:[%s175 + $0x180] sm:$0xff] %v1034
      %1099 = vst [vmem:[%s175 + $0x188] sm:$0xff] %v1035
      %1100 = vst [vmem:[%s175 + $0x190] sm:$0xff] %v1036
      %1101 = vst [vmem:[%s175 + $0x198] sm:$0xff] %v1037
      %1102 = vst [vmem:[%s175 + $0x1a0] sm:$0xff] %v1038
      %1103 = vst [vmem:[%s175 + $0x1a8] sm:$0xff] %v1039
      %1104 = vst [vmem:[%s175 + $0x1b0] sm:$0xff] %v1040
      %1105 = vst [vmem:[%s175 + $0x1b8] sm:$0xff] %v1041
      %1106 = vst [vmem:[%s175 + $0x1c0] sm:$0xff] %v1042
      %1107 = vst [vmem:[%s175 + $0x1c8] sm:$0xff] %v1043
      %1108 = vst [vmem:[%s175 + $0x1d0] sm:$0xff] %v1044
      %1109 = vst [vmem:[%s175 + $0x1d8] sm:$0xff] %v1045
      %1110 = vst [vmem:[%s175 + $0x1e0] sm:$0xff] %v1046
      %1111 = vst [vmem:[%s175 + $0x1e8] sm:$0xff] %v1047
      %1112 = vst [vmem:[%s175 + $0x1f0] sm:$0xff] %v1048
      %1113 = vst [vmem:[%s175 + $0x1f8] sm:$0xff] %v1049
      %s1114 = smul.u32 64, %s14
      %p1115 = scmp.lt.s32.totalorder %s1114, 127
      %s1116 = scalar_select %p1115, %s1114, 127
      %s1117 = smul.addr %s1116, 8
      %s1118 = scalar_lea.vmem %s3, %s1117
      // Predicated region
      $region33: #{static_unconditional_gan_forward.12} parent=31 // pred_check
        %p1119 = pneg %p100
      $region34: #{static_unconditional_gan_forward.12} parent=31 // pred_check_branch
        %1121 = sbr.rel (%p1119) target = $region36
      $region35: #{static_unconditional_gan_forward.12} parent=31 // pred_region
        %s1122 = smul.u32 64, %s14
      $region36: #{static_unconditional_gan_forward.12} parent=31 // pred_fallthru
        _
    $region32: #{static_unconditional_gan_forward.12} parent=5 // pred_fallthru
      _
    %p1123 = scmp.le.s32.totalorder 2, %s9
    // Predicated region
    $region37: #{static_unconditional_gan_forward.12} parent=5 // pred_check
      %p1124 = pneg %p1123
    $region38: #{static_unconditional_gan_forward.12} parent=5 // pred_check_branch
      %1126 = sbr.rel (%p1124) target = $region40
    $region39: #{static_unconditional_gan_forward.12} parent=5 // pred_region
      %s1127 = ssub.s32 %s9, 2
      // Predicated region
      $region41: #{static_unconditional_gan_forward.12} parent=39 // pred_check
        %p1128 = pneg %p106
      $region42: #{static_unconditional_gan_forward.12} parent=39 // pred_check_branch
        %1130 = sbr.rel (%p1128) target = $region44
      $region43: #{static_unconditional_gan_forward.12} parent=39 // pred_region
        %s1131 = smul.u32 64, %s15
        %p1132 = scmp.lt.s32.totalorder %s1131, 127
        %s1133 = scalar_select %p1132, %s1131, 127
        %s1134 = smul.addr %s1133, 8
        %s1135 = scalar_lea.vmem %s3, %s1134
      $region44: #{static_unconditional_gan_forward.12} parent=39 // pred_fallthru
        _
    $region40: #{static_unconditional_gan_forward.12} parent=5 // pred_fallthru
      _
  $region6: #{static_unconditional_gan_forward.12} parent=0 // loop_footer
    %s13 = sadd.s32 1, %s9
  $region7: #{static_unconditional_gan_forward.12} parent=0 // loop_footer_branch
    %8 = sbr.rel target = $region3
  $region8: #{static_unconditional_gan_forward.12} parent=0 // loop_exit
    _

// kernel: static_unconditional_gan_forward.13
$region0: #{static_unconditional_gan_forward.13}
  #allocation0 [shape = 'u32[]', space=smem, size = 0x4, offset = 0x4, fixed_abs, tag = 'smem constant byte address 0x4 - core index']
  #allocation1 [shape = 'u32[144,128]{1,0:T(1,128)}', space=vmem, size = 0x12000, scoped, tag = 'internal scratch']
  %s0 = inlined_call_operand.vmem [shape: bf16[384,48], index: 0, kind: input, shape index: {}]
  %s1 = inlined_call_operand.vmem [shape: bf16[48,128], index: 1, kind: input, shape index: {}]
  %s2 = inlined_call_operand.vmem [shape: f32[1,128], index: 2, kind: input, shape index: {}]
  %s3 = inlined_call_operand.vmem [shape: f32[384,128], index: 3, kind: output, shape index: {}]
  %s4 = sld [smem:[#allocation0]]
  $region45: #{static_unconditional_gan_forward.13} parent=0
    _
  %s6 = ssub.s32 1, %s4
  %s7 = scalar_select 0, %s6, %s4
  loop: start=0, step=1, limit=5
  $region2: #{static_unconditional_gan_forward.13} parent=0 // loop_pre_header
    _
  $region3: #{static_unconditional_gan_forward.13} parent=0 // loop_header
    %s9 = sphi 0, %s13
    %p10 = scmp.ge.s32.totalorder %s9, 5
    %s19 = sphi 0, %s21
    %s22 = sphi 0, %s19
    %s23 = sphi 0, %s22
    %s39 = sphi 0, %s23
    %s43 = sphi 0, %s43
    %s45 = sphi 0, %s43
    %s46 = sphi 0, %s45
    %s60 = sphi 0, %s46
    %s64 = sphi 0, %s64
    %s66 = sphi 0, %s64
    %s67 = sphi 0, %s66
    %s81 = sphi 0, %s67
    %s87 = sphi 0, %s89
    %s90 = sphi 0, %s87
    %s91 = sphi 0, %s90
    %s107 = sphi 0, %s91
  $region4: #{static_unconditional_gan_forward.13} parent=0 // loop_header_branch
    %12 = sbr.rel (%p10) target = $region8
  $region5: #{static_unconditional_gan_forward.13} parent=0 // loop_body
    %s14 = ssub.s32 %s9, 1
    %s15 = ssub.s32 %s9, 2
    %s16 = sadd.s32 %s9, 1
    %s17 = ssub.s32 %s9, %s16
    %p18 = scmp.eq.s32.totalorder %s17, 0
    %s20 = sadd.s32 %s19, 1
    %s21 = scalar_select %p18, %s19, %s20
    %p24 = pneg %p18
    %p25 = scmp.eq.s32.totalorder %s9, 2
    %p26 = por %p24, %p25
    %p27 = scmp.ne.s32.totalorder %s19, %s22
    %p28 = scmp.eq.s32.totalorder %s9, 0
    %p29 = por %p27, %p28
    %p30 = scmp.ne.s32.totalorder %s19, %s22
    %p31 = scmp.eq.s32.totalorder %s14, 2
    %p32 = por %p30, %p31
    %p33 = scmp.ne.s32.totalorder %s22, %s23
    %p34 = scmp.eq.s32.totalorder %s14, 0
    %p35 = por %p33, %p34
    %p36 = scmp.ne.s32.totalorder %s22, %s23
    %p37 = scmp.eq.s32.totalorder %s15, 2
    %p38 = por %p36, %p37
    %p40 = scmp.ne.s32.totalorder %s23, %s39
    %p41 = scmp.eq.s32.totalorder %s15, 0
    %p42 = por %p40, %p41
    %s44 = sadd.s32 %s43, 1
    %p47 = scmp.eq.s32.totalorder %s9, 2
    %p48 = scmp.ne.s32.totalorder %s43, %s45
    %p49 = scmp.eq.s32.totalorder %s9, 0
    %p50 = por %p48, %p49
    %p51 = scmp.ne.s32.totalorder %s43, %s45
    %p52 = scmp.eq.s32.totalorder %s14, 2
    %p53 = por %p51, %p52
    %p54 = scmp.ne.s32.totalorder %s45, %s46
    %p55 = scmp.eq.s32.totalorder %s14, 0
    %p56 = por %p54, %p55
    %p57 = scmp.ne.s32.totalorder %s45, %s46
    %p58 = scmp.eq.s32.totalorder %s15, 2
    %p59 = por %p57, %p58
    %p61 = scmp.ne.s32.totalorder %s46, %s60
    %p62 = scmp.eq.s32.totalorder %s15, 0
    %p63 = por %p61, %p62
    %s65 = sadd.s32 %s64, 1
    %p68 = scmp.eq.s32.totalorder %s9, 2
    %p69 = scmp.ne.s32.totalorder %s64, %s66
    %p70 = scmp.eq.s32.totalorder %s9, 0
    %p71 = por %p69, %p70
    %p72 = scmp.ne.s32.totalorder %s64, %s66
    %p73 = scmp.eq.s32.totalorder %s14, 2
    %p74 = por %p72, %p73
    %p75 = scmp.ne.s32.totalorder %s66, %s67
    %p76 = scmp.eq.s32.totalorder %s14, 0
    %p77 = por %p75, %p76
    %p78 = scmp.ne.s32.totalorder %s66, %s67
    %p79 = scmp.eq.s32.totalorder %s15, 2
    %p80 = por %p78, %p79
    %p82 = scmp.ne.s32.totalorder %s67, %s81
    %p83 = scmp.eq.s32.totalorder %s15, 0
    %p84 = por %p82, %p83
    %s85 = ssub.s32 %s9, %s16
    %p86 = scmp.eq.s32.totalorder %s85, 0
    %s88 = sadd.s32 %s87, 1
    %s89 = scalar_select %p86, %s87, %s88
    %p92 = pneg %p86
    %p93 = scmp.eq.s32.totalorder %s9, 2
    %p94 = por %p92, %p93
    %p95 = scmp.ne.s32.totalorder %s87, %s90
    %p96 = scmp.eq.s32.totalorder %s9, 0
    %p97 = por %p95, %p96
    %p98 = scmp.ne.s32.totalorder %s87, %s90
    %p99 = scmp.eq.s32.totalorder %s14, 2
    %p100 = por %p98, %p99
    %p101 = scmp.ne.s32.totalorder %s90, %s91
    %p102 = scmp.eq.s32.totalorder %s14, 0
    %p103 = por %p101, %p102
    %p104 = scmp.ne.s32.totalorder %s90, %s91
    %p105 = scmp.eq.s32.totalorder %s15, 2
    %p106 = por %p104, %p105
    %p108 = scmp.ne.s32.totalorder %s91, %s107
    %p109 = scmp.eq.s32.totalorder %s15, 0
    %p110 = por %p108, %p109
    %p111 = scmp.le.s32.totalorder 1, %s9
    %p112 = scmp.lt.s32.totalorder %s9, 4
    %p113 = pnand %p111, %p112
    %p114 = pneg %p113
    // Predicated region
    $region9: #{static_unconditional_gan_forward.13} parent=5 // pred_check
      _
    $region10: #{static_unconditional_gan_forward.13} parent=5 // pred_check_branch
      %116 = sbr.rel (%p113) target = $region12
    $region11: #{static_unconditional_gan_forward.13} parent=5 // pred_region
      %s117 = ssub.s32 %s9, 1
      // Predicated region
      $region13: #{static_unconditional_gan_forward.13} parent=11 // pred_check
        %p118 = pneg %p56
      $region14: #{static_unconditional_gan_forward.13} parent=11 // pred_check_branch
        %120 = sbr.rel (%p118) target = $region16
      $region15: #{static_unconditional_gan_forward.13} parent=11 // pred_region
        _
      $region16: #{static_unconditional_gan_forward.13} parent=11 // pred_fallthru
        _
      // Predicated region
      $region17: #{static_unconditional_gan_forward.13} parent=11 // pred_check
        %p121 = pneg %p77
      $region18: #{static_unconditional_gan_forward.13} parent=11 // pred_check_branch
        %123 = sbr.rel (%p121) target = $region20
      $region19: #{static_unconditional_gan_forward.13} parent=11 // pred_region
        _
      $region20: #{static_unconditional_gan_forward.13} parent=11 // pred_fallthru
        _
    $region12: #{static_unconditional_gan_forward.13} parent=5 // pred_fallthru
      _
    %p124 = scmp.lt.s32.totalorder %s9, 3
    // Predicated region
    $region21: #{static_unconditional_gan_forward.13} parent=5 // pred_check
      %p125 = pneg %p124
    $region22: #{static_unconditional_gan_forward.13} parent=5 // pred_check_branch
      %127 = sbr.rel (%p125) target = $region24
    $region23: #{static_unconditional_gan_forward.13} parent=5 // pred_region
      // Predicated region
      $region25: #{static_unconditional_gan_forward.13} parent=23 // pred_check
        %p128 = pneg %p29
      $region26: #{static_unconditional_gan_forward.13} parent=23 // pred_check_branch
        %130 = sbr.rel (%p128) target = $region28
      $region27: #{static_unconditional_gan_forward.13} parent=23 // pred_region
        %s131 = smul.u32 16, %s9
        %p132 = scmp.lt.s32.totalorder %s131, 47
        %s133 = scalar_select %p132, %s131, 47
        %s134 = smul.addr %s133, 4
        %s135 = scalar_lea.vmem %s0, %s134
        %s136 = smul.u32 16, %s9
      $region28: #{static_unconditional_gan_forward.13} parent=23 // pred_fallthru
        _
    $region24: #{static_unconditional_gan_forward.13} parent=5 // pred_fallthru
      _
    %p137 = scmp.le.s32.totalorder 1, %s9
    %p138 = scmp.lt.s32.totalorder %s9, 4
    %p139 = pnand %p137, %p138
    %p140 = pneg %p139
    // Predicated region
    $region29: #{static_unconditional_gan_forward.13} parent=5 // pred_check
      _
    $region30: #{static_unconditional_gan_forward.13} parent=5 // pred_check_branch
      %142 = sbr.rel (%p139) target = $region32
    $region31: #{static_unconditional_gan_forward.13} parent=5 // pred_region
      %s143 = ssub.s32 %s9, 1
      %s144 = smul.u32 16, %s14
      %p145 = scmp.lt.s32.totalorder %s144, 47
      %s146 = scalar_select %p145, %s144, 47
      %s147 = smul.addr %s146, 4
      %s148 = scalar_lea.vmem %s0, %s147
      %p149 = pneg %p35
      %p150 = pneg %p32
      %p151 = pneg %p56
      %p152 = pneg %p53
      %p153 = pneg %p77
      %p154 = pneg %p74
      %p155 = pneg %p103
      %p156 = pneg %p100
      %s157 = smul.u32 16, %s14
      %p158 = scmp.lt.s32.totalorder %s157, 47
      %s159 = scalar_select %p158, %s157, 47
      %s160 = smul.addr %s159, 8
      %s161 = scalar_lea.vmem %s3, %s160
      %s162 = smul.u32 16, %s14
      %p163 = scmp.lt.s32.totalorder %s162, 47
      %s164 = scalar_select %p163, %s162, 47
      %s165 = smul.addr %s164, 4
      %s166 = scalar_lea.vmem %s0, %s165
      %s167 = smul.u32 16, %s14
      %s168 = smul.u32 16, %s14
      %p169 = scmp.lt.s32.totalorder %s168, 47
      %s170 = scalar_select %p169, %s168, 47
      %s171 = smul.addr %s170, 8
      %s172 = scalar_lea.vmem %s3, %s171
      %s173 = smul.u32 16, %s14
      %v175 = vld [vmem:[%s166] sm:$0xf]
      %v176 = vld [vmem:[%s166 + $0x4] sm:$0xf]
      %v177 = vld [vmem:[%s166 + $0x8] sm:$0xf]
      %v178 = vld [vmem:[%s166 + $0xc] sm:$0xf]
      %v179 = vld [vmem:[%s166 + $0x10] sm:$0xf]
      %v180 = vld [vmem:[%s166 + $0x14] sm:$0xf]
      %v181 = vld [vmem:[%s166 + $0x18] sm:$0xf]
      %v182 = vld [vmem:[%s166 + $0x1c] sm:$0xf]
      %v183 = vld [vmem:[%s166 + $0x20] sm:$0xf]
      %v184 = vld [vmem:[%s166 + $0x24] sm:$0xf]
      %v185 = vld [vmem:[%s166 + $0x28] sm:$0xf]
      %v186 = vld [vmem:[%s166 + $0x2c] sm:$0xf]
      %v187 = vld [vmem:[%s166 + $0x30] sm:$0xf]
      %v188 = vld [vmem:[%s166 + $0x34] sm:$0xf]
      %v189 = vld [vmem:[%s166 + $0x38] sm:$0xf]
      %v190 = vld [vmem:[%s166 + $0x3c] sm:$0xf]
      %v191 = vld [vmem:[%s1] sm:$0xf]
      %v192 = vld [vmem:[%s1 + $0x4] sm:$0xf]
      %v193 = vld [vmem:[%s1 + $0x8] sm:$0xf]
      %v194 = vld [vmem:[%s1 + $0xc] sm:$0xf]
      %v195 = vld [vmem:[%s1 + $0x10] sm:$0xf]
      %v196 = vld [vmem:[%s1 + $0x14] sm:$0xf]
      %v197 = vld [vmem:[%s2] sm:$0x1]
      %v199 = vlaneseq
      %v200 = vshrl.u32 %v199, 7
      %v201 = vsub.s32 0, %v200
      %v202 = vrot.slane %v197, %v201
      %v220 = vunpack.c.l.b16 %v175
      %v221 = vunpack.c.l.b16 %v176
      %v222 = vunpack.c.l.b16 %v177
      %v223 = vunpack.c.l.b16 %v178
      %v224 = vunpack.c.l.b16 %v179
      %v225 = vunpack.c.l.b16 %v180
      %v226 = vunpack.c.l.b16 %v181
      %v227 = vunpack.c.l.b16 %v182
      %v228 = vunpack.c.l.b16 %v183
      %v229 = vunpack.c.l.b16 %v184
      %v230 = vunpack.c.l.b16 %v185
      %v231 = vunpack.c.l.b16 %v186
      %v232 = vunpack.c.l.b16 %v187
      %v233 = vunpack.c.l.b16 %v188
      %v234 = vunpack.c.l.b16 %v189
      %v235 = vunpack.c.l.b16 %v190
      %v236 = vpack.c.b16 %v221, %v220
      %v237 = vpack.c.b16 %v223, %v222
      %v238 = vpack.c.b16 %v225, %v224
      %v239 = vpack.c.b16 %v227, %v226
      %v240 = vpack.c.b16 %v229, %v228
      %v241 = vpack.c.b16 %v231, %v230
      %v242 = vpack.c.b16 %v233, %v232
      %v243 = vpack.c.b16 %v235, %v234
      %v250 = vunpack.c.l.b16 %v191
      %v251 = vunpack.c.l.b16 %v192
      %v252 = vunpack.c.l.b16 %v193
      %v253 = vunpack.c.l.b16 %v194
      %v254 = vunpack.c.l.b16 %v195
      %v255 = vunpack.c.l.b16 %v196
      %v256 = vpack.c.b16 %v251, %v250
      %v257 = vpack.c.b16 %v253, %v252
      %v258 = vpack.c.b16 %v255, %v254
      %vm262 = vcmask 392192
      %v264 = vsel %vm262, %v236, 0
      %v267 = vsel %vm262, %v237, 0
      %v270 = vsel %vm262, %v238, 0
      %v273 = vsel %vm262, %v239, 0
      %v276 = vsel %vm262, %v240, 0
      %v279 = vsel %vm262, %v241, 0
      %v282 = vsel %vm262, %v242, 0
      %v285 = vsel %vm262, %v243, 0
      %287 = vmatprep.subr.bf16.mxu0 0
      %288 = vmatpush1.bf16.msra.mxu0 %v256
      %289 = vmatprep.subr.bf16.mxu0 0
      %290 = vmatpush1.bf16.msra.mxu0 %v257
      %291 = vmatprep.subr.bf16.mxu0 0
      %292 = vmatpush1.bf16.msra.mxu0 %v258
      %293 = vmatprep.subr.bf16.mxu0 0
      %294 = vmatpush1.bf16.msra.mxu0 0
      %295 = vmatprep.subr.bf16.mxu0 0
      %296 = vmatpush1.bf16.msra.mxu0 0
      %297 = vmatprep.subr.bf16.mxu0 0
      %298 = vmatpush1.bf16.msra.mxu0 0
      %299 = vmatprep.subr.bf16.mxu0 0
      %300 = vmatpush1.bf16.msra.mxu0 0
      %301 = vmatprep.subr.bf16.mxu0 0
      %302 = vmatpush1.bf16.msra.mxu0 0
      %303 = vmatprep.subr.bf16.mxu0 0
      %304 = vmatpush1.bf16.msra.mxu0 0
      %305 = vmatprep.subr.bf16.mxu0 0
      %306 = vmatpush1.bf16.msra.mxu0 0
      %307 = vmatprep.subr.bf16.mxu0 0
      %308 = vmatpush1.bf16.msra.mxu0 0
      %309 = vmatprep.subr.bf16.mxu0 0
      %310 = vmatpush1.bf16.msra.mxu0 0
      %311 = vmatprep.subr.bf16.mxu0 0
      %312 = vmatpush1.bf16.msra.mxu0 0
      %313 = vmatprep.subr.bf16.mxu0 0
      %314 = vmatpush1.bf16.msra.mxu0 0
      %315 = vmatprep.subr.bf16.mxu0 0
      %316 = vmatpush1.bf16.msra.mxu0 0
      %317 = vmatprep.subr.bf16.mxu0 0
      %318 = vmatpush1.bf16.msra.mxu0 0
      %319 = vmatprep.mubr.bf16.mxu0 0
      %320 = vmatmul.mubr.bf16.gmra.mrb[0].mxu0 %v264
      %v321 = vpop.f32.mrb[0].mxu0
      %v322 = vadd.f32 %v202, %v321
      %v323 = vpop.f32.mrb[0].mxu0
      %v324 = vpop.f32.mrb[0].mxu0
      %v325 = vadd.f32 %v202, %v324
      %v326 = vpop.f32.mrb[0].mxu0
      %327 = vmatprep.mubr.bf16.mxu0 0
      %328 = vmatmul.mubr.bf16.gmra.mrb[0].mxu0 %v267
      %v329 = vpop.f32.mrb[0].mxu0
      %v330 = vadd.f32 %v202, %v329
      %v331 = vpop.f32.mrb[0].mxu0
      %v332 = vpop.f32.mrb[0].mxu0
      %v333 = vadd.f32 %v202, %v332
      %v334 = vpop.f32.mrb[0].mxu0
      %335 = vmatprep.mubr.bf16.mxu0 0
      %336 = vmatmul.mubr.bf16.gmra.mrb[0].mxu0 %v270
      %v337 = vpop.f32.mrb[0].mxu0
      %v338 = vadd.f32 %v202, %v337
      %v339 = vpop.f32.mrb[0].mxu0
      %v340 = vpop.f32.mrb[0].mxu0
      %v341 = vadd.f32 %v202, %v340
      %v342 = vpop.f32.mrb[0].mxu0
      %343 = vmatprep.mubr.bf16.mxu0 0
      %344 = vmatmul.mubr.bf16.gmra.mrb[0].mxu0 %v273
      %v345 = vpop.f32.mrb[0].mxu0
      %v346 = vadd.f32 %v202, %v345
      %v347 = vpop.f32.mrb[0].mxu0
      %v348 = vpop.f32.mrb[0].mxu0
      %v349 = vadd.f32 %v202, %v348
      %v350 = vpop.f32.mrb[0].mxu0
      %351 = vmatprep.mubr.bf16.mxu0 0
      %352 = vmatmul.mubr.bf16.gmra.mrb[0].mxu0 %v276
      %v353 = vpop.f32.mrb[0].mxu0
      %v354 = vadd.f32 %v202, %v353
      %v355 = vpop.f32.mrb[0].mxu0
      %v356 = vpop.f32.mrb[0].mxu0
      %v357 = vadd.f32 %v202, %v356
      %v358 = vpop.f32.mrb[0].mxu0
      %359 = vmatprep.mubr.bf16.mxu0 0
      %360 = vmatmul.mubr.bf16.gmra.mrb[0].mxu0 %v279
      %v361 = vpop.f32.mrb[0].mxu0
      %v362 = vadd.f32 %v202, %v361
      %v363 = vpop.f32.mrb[0].mxu0
      %v364 = vpop.f32.mrb[0].mxu0
      %v365 = vadd.f32 %v202, %v364
      %v366 = vpop.f32.mrb[0].mxu0
      %367 = vmatprep.mubr.bf16.mxu0 0
      %368 = vmatmul.mubr.bf16.gmra.mrb[0].mxu0 %v282
      %v369 = vpop.f32.mrb[0].mxu0
      %v370 = vadd.f32 %v202, %v369
      %v371 = vpop.f32.mrb[0].mxu0
      %v372 = vpop.f32.mrb[0].mxu0
      %v373 = vadd.f32 %v202, %v372
      %v374 = vpop.f32.mrb[0].mxu0
      %375 = vmatprep.mubr.bf16.mxu0 0
      %376 = vmatmul.mubr.bf16.gmra.mrb[0].mxu0 %v285
      %v377 = vpop.f32.mrb[0].mxu0
      %v378 = vadd.f32 %v202, %v377
      %v379 = vpop.f32.mrb[0].mxu0
      %v380 = vpop.f32.mrb[0].mxu0
      %v381 = vadd.f32 %v202, %v380
      %v382 = vpop.f32.mrb[0].mxu0
      %383 = vdwg.mxu0
      %vm384 = vcmp.ge.f32.partialorder %v322, 0.0
      %vm385 = vcmp.ge.f32.partialorder %v325, 0.0
      %vm386 = vcmp.ge.f32.partialorder %v330, 0.0
      %vm387 = vcmp.ge.f32.partialorder %v333, 0.0
      %vm388 = vcmp.ge.f32.partialorder %v338, 0.0
      %vm389 = vcmp.ge.f32.partialorder %v341, 0.0
      %vm390 = vcmp.ge.f32.partialorder %v346, 0.0
      %vm391 = vcmp.ge.f32.partialorder %v349, 0.0
      %vm392 = vcmp.ge.f32.partialorder %v354, 0.0
      %vm393 = vcmp.ge.f32.partialorder %v357, 0.0
      %vm394 = vcmp.ge.f32.partialorder %v362, 0.0
      %vm395 = vcmp.ge.f32.partialorder %v365, 0.0
      %vm396 = vcmp.ge.f32.partialorder %v370, 0.0
      %vm397 = vcmp.ge.f32.partialorder %v373, 0.0
      %vm398 = vcmp.ge.f32.partialorder %v378, 0.0
      %vm399 = vcmp.ge.f32.partialorder %v381, 0.0
      %v400 = vmul.f32 %v322, 0.01
      %v401 = vmul.f32 %v325, 0.01
      %v402 = vmul.f32 %v330, 0.01
      %v403 = vmul.f32 %v333, 0.01
      %v404 = vmul.f32 %v338, 0.01
      %v405 = vmul.f32 %v341, 0.01
      %v406 = vmul.f32 %v346, 0.01
      %v407 = vmul.f32 %v349, 0.01
      %v408 = vmul.f32 %v354, 0.01
      %v409 = vmul.f32 %v357, 0.01
      %v410 = vmul.f32 %v362, 0.01
      %v411 = vmul.f32 %v365, 0.01
      %v412 = vmul.f32 %v370, 0.01
      %v413 = vmul.f32 %v373, 0.01
      %v414 = vmul.f32 %v378, 0.01
      %v415 = vmul.f32 %v381, 0.01
      %v416 = vsel %vm384, %v322, %v400
      %v417 = vsel %vm385, %v325, %v401
      %v418 = vsel %vm386, %v330, %v402
      %v419 = vsel %vm387, %v333, %v403
      %v420 = vsel %vm388, %v338, %v404
      %v421 = vsel %vm389, %v341, %v405
      %v422 = vsel %vm390, %v346, %v406
      %v423 = vsel %vm391, %v349, %v407
      %v424 = vsel %vm392, %v354, %v408
      %v425 = vsel %vm393, %v357, %v409
      %v426 = vsel %vm394, %v362, %v410
      %v427 = vsel %vm395, %v365, %v411
      %v428 = vsel %vm396, %v370, %v412
      %v429 = vsel %vm397, %v373, %v413
      %v430 = vsel %vm398, %v378, %v414
      %v431 = vsel %vm399, %v381, %v415
      %432 = vst [vmem:[%s172] sm:$0xff] %v416
      %433 = vst [vmem:[%s172 + $0x8] sm:$0xff] %v417
      %434 = vst [vmem:[%s172 + $0x10] sm:$0xff] %v418
      %435 = vst [vmem:[%s172 + $0x18] sm:$0xff] %v419
      %436 = vst [vmem:[%s172 + $0x20] sm:$0xff] %v420
      %437 = vst [vmem:[%s172 + $0x28] sm:$0xff] %v421
      %438 = vst [vmem:[%s172 + $0x30] sm:$0xff] %v422
      %439 = vst [vmem:[%s172 + $0x38] sm:$0xff] %v423
      %440 = vst [vmem:[%s172 + $0x40] sm:$0xff] %v424
      %441 = vst [vmem:[%s172 + $0x48] sm:$0xff] %v425
      %442 = vst [vmem:[%s172 + $0x50] sm:$0xff] %v426
      %443 = vst [vmem:[%s172 + $0x58] sm:$0xff] %v427
      %444 = vst [vmem:[%s172 + $0x60] sm:$0xff] %v428
      %445 = vst [vmem:[%s172 + $0x68] sm:$0xff] %v429
      %446 = vst [vmem:[%s172 + $0x70] sm:$0xff] %v430
      %447 = vst [vmem:[%s172 + $0x78] sm:$0xff] %v431
      %s448 = smul.u32 16, %s14
      %p449 = scmp.lt.s32.totalorder %s448, 47
      %s450 = scalar_select %p449, %s448, 47
      %s451 = smul.addr %s450, 8
      %s452 = scalar_lea.vmem %s3, %s451
      // Predicated region
      $region33: #{static_unconditional_gan_forward.13} parent=31 // pred_check
        %p453 = pneg %p100
      $region34: #{static_unconditional_gan_forward.13} parent=31 // pred_check_branch
        %455 = sbr.rel (%p453) target = $region36
      $region35: #{static_unconditional_gan_forward.13} parent=31 // pred_region
        %s456 = smul.u32 16, %s14
      $region36: #{static_unconditional_gan_forward.13} parent=31 // pred_fallthru
        _
    $region32: #{static_unconditional_gan_forward.13} parent=5 // pred_fallthru
      _
    %p457 = scmp.le.s32.totalorder 2, %s9
    // Predicated region
    $region37: #{static_unconditional_gan_forward.13} parent=5 // pred_check
      %p458 = pneg %p457
    $region38: #{static_unconditional_gan_forward.13} parent=5 // pred_check_branch
      %460 = sbr.rel (%p458) target = $region40
    $region39: #{static_unconditional_gan_forward.13} parent=5 // pred_region
      %s461 = ssub.s32 %s9, 2
      // Predicated region
      $region41: #{static_unconditional_gan_forward.13} parent=39 // pred_check
        %p462 = pneg %p106
      $region42: #{static_unconditional_gan_forward.13} parent=39 // pred_check_branch
        %464 = sbr.rel (%p462) target = $region44
      $region43: #{static_unconditional_gan_forward.13} parent=39 // pred_region
        %s465 = smul.u32 16, %s15
        %p466 = scmp.lt.s32.totalorder %s465, 47
        %s467 = scalar_select %p466, %s465, 47
        %s468 = smul.addr %s467, 8
        %s469 = scalar_lea.vmem %s3, %s468
      $region44: #{static_unconditional_gan_forward.13} parent=39 // pred_fallthru
        _
    $region40: #{static_unconditional_gan_forward.13} parent=5 // pred_fallthru
      _
  $region6: #{static_unconditional_gan_forward.13} parent=0 // loop_footer
    %s13 = sadd.s32 1, %s9
  $region7: #{static_unconditional_gan_forward.13} parent=0 // loop_footer_branch
    %8 = sbr.rel target = $region3
  $region8: #{static_unconditional_gan_forward.13} parent=0 // loop_exit
    _

// kernel: static_unconditional_gan_forward.14
$region0: #{static_unconditional_gan_forward.14}
  #allocation0 [shape = 'u32[]', space=smem, size = 0x4, offset = 0x4, fixed_abs, tag = 'smem constant byte address 0x4 - core index']
  #allocation1 [shape = 'u32[144,128]{1,0:T(1,128)}', space=vmem, size = 0x12000, scoped, tag = 'internal scratch']
  %s0 = inlined_call_operand.vmem [shape: bf16[96,128], index: 0, kind: input, shape index: {}]
  %s1 = inlined_call_operand.vmem [shape: bf16[128,128], index: 1, kind: input, shape index: {}]
  %s2 = inlined_call_operand.vmem [shape: f32[1,128], index: 2, kind: input, shape index: {}]
  %s3 = inlined_call_operand.vmem [shape: f32[1,128], index: 3, kind: input, shape index: {}]
  %s4 = inlined_call_operand.vmem [shape: f32[1,128], index: 4, kind: input, shape index: {}]
  %s5 = inlined_call_operand.vmem [shape: f32[96,128], index: 5, kind: output, shape index: {}]
  %s6 = sld [smem:[#allocation0]]
  $region53: #{static_unconditional_gan_forward.14} parent=0
    _
  %s8 = ssub.s32 1, %s6
  %s9 = scalar_select 0, %s8, %s6
  loop: start=0, step=1, limit=5
  $region2: #{static_unconditional_gan_forward.14} parent=0 // loop_pre_header
    _
  $region3: #{static_unconditional_gan_forward.14} parent=0 // loop_header
    %s11 = sphi 0, %s15
    %p12 = scmp.ge.s32.totalorder %s11, 5
    %s21 = sphi 0, %s23
    %s24 = sphi 0, %s21
    %s25 = sphi 0, %s24
    %s41 = sphi 0, %s25
    %s45 = sphi 0, %s45
    %s47 = sphi 0, %s45
    %s48 = sphi 0, %s47
    %s62 = sphi 0, %s48
    %s66 = sphi 0, %s66
    %s68 = sphi 0, %s66
    %s69 = sphi 0, %s68
    %s83 = sphi 0, %s69
    %s87 = sphi 0, %s87
    %s89 = sphi 0, %s87
    %s90 = sphi 0, %s89
    %s104 = sphi 0, %s90
    %s108 = sphi 0, %s108
    %s110 = sphi 0, %s108
    %s111 = sphi 0, %s110
    %s125 = sphi 0, %s111
    %s131 = sphi 0, %s133
    %s134 = sphi 0, %s131
    %s135 = sphi 0, %s134
    %s151 = sphi 0, %s135
  $region4: #{static_unconditional_gan_forward.14} parent=0 // loop_header_branch
    %14 = sbr.rel (%p12) target = $region8
  $region5: #{static_unconditional_gan_forward.14} parent=0 // loop_body
    %s16 = ssub.s32 %s11, 1
    %s17 = ssub.s32 %s11, 2
    %s18 = sadd.s32 %s11, 1
    %s19 = ssub.s32 %s11, %s18
    %p20 = scmp.eq.s32.totalorder %s19, 0
    %s22 = sadd.s32 %s21, 1
    %s23 = scalar_select %p20, %s21, %s22
    %p26 = pneg %p20
    %p27 = scmp.eq.s32.totalorder %s11, 2
    %p28 = por %p26, %p27
    %p29 = scmp.ne.s32.totalorder %s21, %s24
    %p30 = scmp.eq.s32.totalorder %s11, 0
    %p31 = por %p29, %p30
    %p32 = scmp.ne.s32.totalorder %s21, %s24
    %p33 = scmp.eq.s32.totalorder %s16, 2
    %p34 = por %p32, %p33
    %p35 = scmp.ne.s32.totalorder %s24, %s25
    %p36 = scmp.eq.s32.totalorder %s16, 0
    %p37 = por %p35, %p36
    %p38 = scmp.ne.s32.totalorder %s24, %s25
    %p39 = scmp.eq.s32.totalorder %s17, 2
    %p40 = por %p38, %p39
    %p42 = scmp.ne.s32.totalorder %s25, %s41
    %p43 = scmp.eq.s32.totalorder %s17, 0
    %p44 = por %p42, %p43
    %s46 = sadd.s32 %s45, 1
    %p49 = scmp.eq.s32.totalorder %s11, 2
    %p50 = scmp.ne.s32.totalorder %s45, %s47
    %p51 = scmp.eq.s32.totalorder %s11, 0
    %p52 = por %p50, %p51
    %p53 = scmp.ne.s32.totalorder %s45, %s47
    %p54 = scmp.eq.s32.totalorder %s16, 2
    %p55 = por %p53, %p54
    %p56 = scmp.ne.s32.totalorder %s47, %s48
    %p57 = scmp.eq.s32.totalorder %s16, 0
    %p58 = por %p56, %p57
    %p59 = scmp.ne.s32.totalorder %s47, %s48
    %p60 = scmp.eq.s32.totalorder %s17, 2
    %p61 = por %p59, %p60
    %p63 = scmp.ne.s32.totalorder %s48, %s62
    %p64 = scmp.eq.s32.totalorder %s17, 0
    %p65 = por %p63, %p64
    %s67 = sadd.s32 %s66, 1
    %p70 = scmp.eq.s32.totalorder %s11, 2
    %p71 = scmp.ne.s32.totalorder %s66, %s68
    %p72 = scmp.eq.s32.totalorder %s11, 0
    %p73 = por %p71, %p72
    %p74 = scmp.ne.s32.totalorder %s66, %s68
    %p75 = scmp.eq.s32.totalorder %s16, 2
    %p76 = por %p74, %p75
    %p77 = scmp.ne.s32.totalorder %s68, %s69
    %p78 = scmp.eq.s32.totalorder %s16, 0
    %p79 = por %p77, %p78
    %p80 = scmp.ne.s32.totalorder %s68, %s69
    %p81 = scmp.eq.s32.totalorder %s17, 2
    %p82 = por %p80, %p81
    %p84 = scmp.ne.s32.totalorder %s69, %s83
    %p85 = scmp.eq.s32.totalorder %s17, 0
    %p86 = por %p84, %p85
    %s88 = sadd.s32 %s87, 1
    %p91 = scmp.eq.s32.totalorder %s11, 2
    %p92 = scmp.ne.s32.totalorder %s87, %s89
    %p93 = scmp.eq.s32.totalorder %s11, 0
    %p94 = por %p92, %p93
    %p95 = scmp.ne.s32.totalorder %s87, %s89
    %p96 = scmp.eq.s32.totalorder %s16, 2
    %p97 = por %p95, %p96
    %p98 = scmp.ne.s32.totalorder %s89, %s90
    %p99 = scmp.eq.s32.totalorder %s16, 0
    %p100 = por %p98, %p99
    %p101 = scmp.ne.s32.totalorder %s89, %s90
    %p102 = scmp.eq.s32.totalorder %s17, 2
    %p103 = por %p101, %p102
    %p105 = scmp.ne.s32.totalorder %s90, %s104
    %p106 = scmp.eq.s32.totalorder %s17, 0
    %p107 = por %p105, %p106
    %s109 = sadd.s32 %s108, 1
    %p112 = scmp.eq.s32.totalorder %s11, 2
    %p113 = scmp.ne.s32.totalorder %s108, %s110
    %p114 = scmp.eq.s32.totalorder %s11, 0
    %p115 = por %p113, %p114
    %p116 = scmp.ne.s32.totalorder %s108, %s110
    %p117 = scmp.eq.s32.totalorder %s16, 2
    %p118 = por %p116, %p117
    %p119 = scmp.ne.s32.totalorder %s110, %s111
    %p120 = scmp.eq.s32.totalorder %s16, 0
    %p121 = por %p119, %p120
    %p122 = scmp.ne.s32.totalorder %s110, %s111
    %p123 = scmp.eq.s32.totalorder %s17, 2
    %p124 = por %p122, %p123
    %p126 = scmp.ne.s32.totalorder %s111, %s125
    %p127 = scmp.eq.s32.totalorder %s17, 0
    %p128 = por %p126, %p127
    %s129 = ssub.s32 %s11, %s18
    %p130 = scmp.eq.s32.totalorder %s129, 0
    %s132 = sadd.s32 %s131, 1
    %s133 = scalar_select %p130, %s131, %s132
    %p136 = pneg %p130
    %p137 = scmp.eq.s32.totalorder %s11, 2
    %p138 = por %p136, %p137
    %p139 = scmp.ne.s32.totalorder %s131, %s134
    %p140 = scmp.eq.s32.totalorder %s11, 0
    %p141 = por %p139, %p140
    %p142 = scmp.ne.s32.totalorder %s131, %s134
    %p143 = scmp.eq.s32.totalorder %s16, 2
    %p144 = por %p142, %p143
    %p145 = scmp.ne.s32.totalorder %s134, %s135
    %p146 = scmp.eq.s32.totalorder %s16, 0
    %p147 = por %p145, %p146
    %p148 = scmp.ne.s32.totalorder %s134, %s135
    %p149 = scmp.eq.s32.totalorder %s17, 2
    %p150 = por %p148, %p149
    %p152 = scmp.ne.s32.totalorder %s135, %s151
    %p153 = scmp.eq.s32.totalorder %s17, 0
    %p154 = por %p152, %p153
    %p155 = scmp.le.s32.totalorder 1, %s11
    %p156 = scmp.lt.s32.totalorder %s11, 4
    %p157 = pnand %p155, %p156
    %p158 = pneg %p157
    // Predicated region
    $region9: #{static_unconditional_gan_forward.14} parent=5 // pred_check
      _
    $region10: #{static_unconditional_gan_forward.14} parent=5 // pred_check_branch
      %160 = sbr.rel (%p157) target = $region12
    $region11: #{static_unconditional_gan_forward.14} parent=5 // pred_region
      %s161 = ssub.s32 %s11, 1
      // Predicated region
      $region13: #{static_unconditional_gan_forward.14} parent=11 // pred_check
        %p162 = pneg %p58
      $region14: #{static_unconditional_gan_forward.14} parent=11 // pred_check_branch
        %164 = sbr.rel (%p162) target = $region16
      $region15: #{static_unconditional_gan_forward.14} parent=11 // pred_region
        _
      $region16: #{static_unconditional_gan_forward.14} parent=11 // pred_fallthru
        _
      // Predicated region
      $region17: #{static_unconditional_gan_forward.14} parent=11 // pred_check
        %p165 = pneg %p79
      $region18: #{static_unconditional_gan_forward.14} parent=11 // pred_check_branch
        %167 = sbr.rel (%p165) target = $region20
      $region19: #{static_unconditional_gan_forward.14} parent=11 // pred_region
        _
      $region20: #{static_unconditional_gan_forward.14} parent=11 // pred_fallthru
        _
      // Predicated region
      $region21: #{static_unconditional_gan_forward.14} parent=11 // pred_check
        %p168 = pneg %p100
      $region22: #{static_unconditional_gan_forward.14} parent=11 // pred_check_branch
        %170 = sbr.rel (%p168) target = $region24
      $region23: #{static_unconditional_gan_forward.14} parent=11 // pred_region
        _
      $region24: #{static_unconditional_gan_forward.14} parent=11 // pred_fallthru
        _
      // Predicated region
      $region25: #{static_unconditional_gan_forward.14} parent=11 // pred_check
        %p171 = pneg %p121
      $region26: #{static_unconditional_gan_forward.14} parent=11 // pred_check_branch
        %173 = sbr.rel (%p171) target = $region28
      $region27: #{static_unconditional_gan_forward.14} parent=11 // pred_region
        _
      $region28: #{static_unconditional_gan_forward.14} parent=11 // pred_fallthru
        _
    $region12: #{static_unconditional_gan_forward.14} parent=5 // pred_fallthru
      _
    %p174 = scmp.lt.s32.totalorder %s11, 3
    // Predicated region
    $region29: #{static_unconditional_gan_forward.14} parent=5 // pred_check
      %p175 = pneg %p174
    $region30: #{static_unconditional_gan_forward.14} parent=5 // pred_check_branch
      %177 = sbr.rel (%p175) target = $region32
    $region31: #{static_unconditional_gan_forward.14} parent=5 // pred_region
      // Predicated region
      $region33: #{static_unconditional_gan_forward.14} parent=31 // pred_check
        %p178 = pneg %p31
      $region34: #{static_unconditional_gan_forward.14} parent=31 // pred_check_branch
        %180 = sbr.rel (%p178) target = $region36
      $region35: #{static_unconditional_gan_forward.14} parent=31 // pred_region
        %s181 = smul.u32 4, %s11
        %p182 = scmp.lt.s32.totalorder %s181, 11
        %s183 = scalar_select %p182, %s181, 11
        %s184 = smul.addr %s183, 4
        %s185 = scalar_lea.vmem %s0, %s184
        %s186 = smul.u32 4, %s11
      $region36: #{static_unconditional_gan_forward.14} parent=31 // pred_fallthru
        _
    $region32: #{static_unconditional_gan_forward.14} parent=5 // pred_fallthru
      _
    %p187 = scmp.le.s32.totalorder 1, %s11
    %p188 = scmp.lt.s32.totalorder %s11, 4
    %p189 = pnand %p187, %p188
    %p190 = pneg %p189
    // Predicated region
    $region37: #{static_unconditional_gan_forward.14} parent=5 // pred_check
      _
    $region38: #{static_unconditional_gan_forward.14} parent=5 // pred_check_branch
      %192 = sbr.rel (%p189) target = $region40
    $region39: #{static_unconditional_gan_forward.14} parent=5 // pred_region
      %s193 = ssub.s32 %s11, 1
      %s194 = smul.u32 4, %s16
      %p195 = scmp.lt.s32.totalorder %s194, 11
      %s196 = scalar_select %p195, %s194, 11
      %s197 = smul.addr %s196, 4
      %s198 = scalar_lea.vmem %s0, %s197
      %p199 = pneg %p37
      %p200 = pneg %p34
      %p201 = pneg %p58
      %p202 = pneg %p55
      %p203 = pneg %p79
      %p204 = pneg %p76
      %p205 = pneg %p100
      %p206 = pneg %p97
      %p207 = pneg %p121
      %p208 = pneg %p118
      %p209 = pneg %p147
      %p210 = pneg %p144
      %s211 = smul.u32 4, %s16
      %p212 = scmp.lt.s32.totalorder %s211, 11
      %s213 = scalar_select %p212, %s211, 11
      %s214 = smul.addr %s213, 8
      %s215 = scalar_lea.vmem %s5, %s214
      %s216 = smul.u32 4, %s16
      %p217 = scmp.lt.s32.totalorder %s216, 11
      %s218 = scalar_select %p217, %s216, 11
      %s219 = smul.addr %s218, 4
      %s220 = scalar_lea.vmem %s0, %s219
      %s221 = smul.u32 4, %s16
      %s222 = smul.u32 4, %s16
      %p223 = scmp.lt.s32.totalorder %s222, 11
      %s224 = scalar_select %p223, %s222, 11
      %s225 = smul.addr %s224, 8
      %s226 = scalar_lea.vmem %s5, %s225
      %s227 = smul.u32 4, %s16
      %v229 = vld [vmem:[%s220] sm:$0xf]
      %v230 = vld [vmem:[%s220 + $0x4] sm:$0xf]
      %v231 = vld [vmem:[%s220 + $0x8] sm:$0xf]
      %v232 = vld [vmem:[%s220 + $0xc] sm:$0xf]
      %v233 = vld [vmem:[%s1] sm:$0xf]
      %v234 = vld [vmem:[%s1 + $0x4] sm:$0xf]
      %v235 = vld [vmem:[%s1 + $0x8] sm:$0xf]
      %v236 = vld [vmem:[%s1 + $0xc] sm:$0xf]
      %v237 = vld [vmem:[%s1 + $0x10] sm:$0xf]
      %v238 = vld [vmem:[%s1 + $0x14] sm:$0xf]
      %v239 = vld [vmem:[%s1 + $0x18] sm:$0xf]
      %v240 = vld [vmem:[%s1 + $0x1c] sm:$0xf]
      %v241 = vld [vmem:[%s1 + $0x20] sm:$0xf]
      %v242 = vld [vmem:[%s1 + $0x24] sm:$0xf]
      %v243 = vld [vmem:[%s1 + $0x28] sm:$0xf]
      %v244 = vld [vmem:[%s1 + $0x2c] sm:$0xf]
      %v245 = vld [vmem:[%s1 + $0x30] sm:$0xf]
      %v246 = vld [vmem:[%s1 + $0x34] sm:$0xf]
      %v247 = vld [vmem:[%s1 + $0x38] sm:$0xf]
      %v248 = vld [vmem:[%s1 + $0x3c] sm:$0xf]
      %v249 = vld [vmem:[%s2] sm:$0x1]
      %v251 = vlaneseq
      %v252 = vshrl.u32 %v251, 7
      %v253 = vsub.s32 0, %v252
      %v254 = vrot.slane %v249, %v253
      %v260 = vunpack.c.l.b16 %v229
      %v261 = vunpack.c.l.b16 %v230
      %v262 = vunpack.c.l.b16 %v231
      %v263 = vunpack.c.l.b16 %v232
      %v264 = vpack.c.b16 %v261, %v260
      %v265 = vpack.c.b16 %v263, %v262
      %v284 = vunpack.c.l.b16 %v233
      %v285 = vunpack.c.l.b16 %v234
      %v286 = vunpack.c.l.b16 %v235
      %v287 = vunpack.c.l.b16 %v236
      %v288 = vunpack.c.l.b16 %v237
      %v289 = vunpack.c.l.b16 %v238
      %v290 = vunpack.c.l.b16 %v239
      %v291 = vunpack.c.l.b16 %v240
      %v292 = vunpack.c.l.b16 %v241
      %v293 = vunpack.c.l.b16 %v242
      %v294 = vunpack.c.l.b16 %v243
      %v295 = vunpack.c.l.b16 %v244
      %v296 = vunpack.c.l.b16 %v245
      %v297 = vunpack.c.l.b16 %v246
      %v298 = vunpack.c.l.b16 %v247
      %v299 = vunpack.c.l.b16 %v248
      %v300 = vpack.c.b16 %v285, %v284
      %v301 = vpack.c.b16 %v287, %v286
      %v302 = vpack.c.b16 %v289, %v288
      %v303 = vpack.c.b16 %v291, %v290
      %v304 = vpack.c.b16 %v293, %v292
      %v305 = vpack.c.b16 %v295, %v294
      %v306 = vpack.c.b16 %v297, %v296
      %v307 = vpack.c.b16 %v299, %v298
      %316 = vmatprep.subr.bf16.mxu0 0
      %317 = vmatpush1.bf16.msra.mxu0 %v300
      %318 = vmatprep.subr.bf16.mxu0 0
      %319 = vmatpush1.bf16.msra.mxu0 %v301
      %320 = vmatprep.subr.bf16.mxu0 0
      %321 = vmatpush1.bf16.msra.mxu0 %v302
      %322 = vmatprep.subr.bf16.mxu0 0
      %323 = vmatpush1.bf16.msra.mxu0 %v303
      %324 = vmatprep.subr.bf16.mxu0 0
      %325 = vmatpush1.bf16.msra.mxu0 %v304
      %326 = vmatprep.subr.bf16.mxu0 0
      %327 = vmatpush1.bf16.msra.mxu0 %v305
      %328 = vmatprep.subr.bf16.mxu0 0
      %329 = vmatpush1.bf16.msra.mxu0 %v306
      %330 = vmatprep.subr.bf16.mxu0 0
      %331 = vmatpush1.bf16.msra.mxu0 %v307
      %332 = vmatprep.subr.bf16.mxu0 0
      %333 = vmatpush1.bf16.msra.mxu0 0
      %334 = vmatprep.subr.bf16.mxu0 0
      %335 = vmatpush1.bf16.msra.mxu0 0
      %336 = vmatprep.subr.bf16.mxu0 0
      %337 = vmatpush1.bf16.msra.mxu0 0
      %338 = vmatprep.subr.bf16.mxu0 0
      %339 = vmatpush1.bf16.msra.mxu0 0
      %340 = vmatprep.subr.bf16.mxu0 0
      %341 = vmatpush1.bf16.msra.mxu0 0
      %342 = vmatprep.subr.bf16.mxu0 0
      %343 = vmatpush1.bf16.msra.mxu0 0
      %344 = vmatprep.subr.bf16.mxu0 0
      %345 = vmatpush1.bf16.msra.mxu0 0
      %346 = vmatprep.subr.bf16.mxu0 0
      %347 = vmatpush1.bf16.msra.mxu0 0
      %348 = vmatprep.mubr.bf16.mxu0 0
      %349 = vmatmul.mubr.bf16.gmra.mrb[0].mxu0 %v264
      %v350 = vpop.f32.mrb[0].mxu0
      %v351 = vadd.f32 %v254, %v350
      %v352 = vpop.f32.mrb[0].mxu0
      %v353 = vpop.f32.mrb[0].mxu0
      %v354 = vadd.f32 %v254, %v353
      %v355 = vpop.f32.mrb[0].mxu0
      %356 = vmatprep.mubr.bf16.mxu0 0
      %357 = vmatmul.mubr.bf16.gmra.mrb[0].mxu0 %v265
      %v358 = vpop.f32.mrb[0].mxu0
      %v359 = vadd.f32 %v254, %v358
      %v360 = vpop.f32.mrb[0].mxu0
      %v361 = vpop.f32.mrb[0].mxu0
      %v362 = vadd.f32 %v254, %v361
      %v363 = vpop.f32.mrb[0].mxu0
      %364 = vdwg.mxu0
      %v365 = vadd.f32 %v351, %v354
      %v366 = vadd.f32 %v365, %v359
      %v367 = vadd.f32 %v366, %v362
      %v368 = vrot.slane %v367, 4
      %v369 = vadd.f32 %v367, %v368
      %v370 = vrot.slane %v369, 2
      %v371 = vadd.f32 %v369, %v370
      %v372 = vrot.slane %v371, 1
      %v373 = vadd.f32 %v371, %v372
      %v374 = vrcp.pop 32.0
      %v375 = vmul.f32 %v373, %v374
      %v376 = vsub.f32 %v351, %v375
      %v377 = vsub.f32 %v354, %v375
      %v378 = vsub.f32 %v359, %v375
      %v379 = vsub.f32 %v362, %v375
      %v380 = vmul.f32 %v376, %v376
      %v381 = vmul.f32 %v377, %v377
      %v382 = vmul.f32 %v378, %v378
      %v383 = vmul.f32 %v379, %v379
      %v384 = vadd.f32 %v380, %v381
      %v385 = vadd.f32 %v384, %v382
      %v386 = vadd.f32 %v385, %v383
      %v387 = vrot.slane %v386, 4
      %v388 = vadd.f32 %v386, %v387
      %v389 = vrot.slane %v388, 2
      %v390 = vadd.f32 %v388, %v389
      %v391 = vrot.slane %v390, 1
      %v392 = vadd.f32 %v390, %v391
      %v393 = vmul.f32 %v392, %v374
      %v394 = vadd.f32 %v393, 1e-05
      %v395 = vrsqrt.pop %v394
      %v396 = vmul.f32 %v376, %v395
      %v397 = vmul.f32 %v377, %v395
      %v398 = vmul.f32 %v378, %v395
      %v399 = vmul.f32 %v379, %v395
      %v400 = vld [vmem:[%s3] sm:$0x1]
      %v402 = vlaneseq
      %v403 = vshrl.u32 %v402, 7
      %v404 = vsub.s32 0, %v403
      %v405 = vrot.slane %v400, %v404
      %v407 = vmul.f32 %v396, %v405
      %v408 = vmul.f32 %v397, %v405
      %v409 = vmul.f32 %v398, %v405
      %v410 = vmul.f32 %v399, %v405
      %v411 = vld [vmem:[%s4] sm:$0x1]
      %v413 = vlaneseq
      %v414 = vshrl.u32 %v413, 7
      %v415 = vsub.s32 0, %v414
      %v416 = vrot.slane %v411, %v415
      %v418 = vadd.f32 %v407, %v416
      %v419 = vadd.f32 %v408, %v416
      %v420 = vadd.f32 %v409, %v416
      %v421 = vadd.f32 %v410, %v416
      %vm422 = vcmp.ge.f32.partialorder %v418, 0.0
      %vm423 = vcmp.ge.f32.partialorder %v419, 0.0
      %vm424 = vcmp.ge.f32.partialorder %v420, 0.0
      %vm425 = vcmp.ge.f32.partialorder %v421, 0.0
      %v426 = vmul.f32 %v418, 0.01
      %v427 = vmul.f32 %v419, 0.01
      %v428 = vmul.f32 %v420, 0.01
      %v429 = vmul.f32 %v421, 0.01
      %v430 = vsel %vm422, %v418, %v426
      %v431 = vsel %vm423, %v419, %v427
      %v432 = vsel %vm424, %v420, %v428
      %v433 = vsel %vm425, %v421, %v429
      %434 = vst [vmem:[%s226] sm:$0xff] %v430
      %435 = vst [vmem:[%s226 + $0x8] sm:$0xff] %v431
      %436 = vst [vmem:[%s226 + $0x10] sm:$0xff] %v432
      %437 = vst [vmem:[%s226 + $0x18] sm:$0xff] %v433
      %s438 = smul.u32 4, %s16
      %p439 = scmp.lt.s32.totalorder %s438, 11
      %s440 = scalar_select %p439, %s438, 11
      %s441 = smul.addr %s440, 8
      %s442 = scalar_lea.vmem %s5, %s441
      // Predicated region
      $region41: #{static_unconditional_gan_forward.14} parent=39 // pred_check
        %p443 = pneg %p144
      $region42: #{static_unconditional_gan_forward.14} parent=39 // pred_check_branch
        %445 = sbr.rel (%p443) target = $region44
      $region43: #{static_unconditional_gan_forward.14} parent=39 // pred_region
        %s446 = smul.u32 4, %s16
      $region44: #{static_unconditional_gan_forward.14} parent=39 // pred_fallthru
        _
    $region40: #{static_unconditional_gan_forward.14} parent=5 // pred_fallthru
      _
    %p447 = scmp.le.s32.totalorder 2, %s11
    // Predicated region
    $region45: #{static_unconditional_gan_forward.14} parent=5 // pred_check
      %p448 = pneg %p447
    $region46: #{static_unconditional_gan_forward.14} parent=5 // pred_check_branch
      %450 = sbr.rel (%p448) target = $region48
    $region47: #{static_unconditional_gan_forward.14} parent=5 // pred_region
      %s451 = ssub.s32 %s11, 2
      // Predicated region
      $region49: #{static_unconditional_gan_forward.14} parent=47 // pred_check
        %p452 = pneg %p150
      $region50: #{static_unconditional_gan_forward.14} parent=47 // pred_check_branch
        %454 = sbr.rel (%p452) target = $region52
      $region51: #{static_unconditional_gan_forward.14} parent=47 // pred_region
        %s455 = smul.u32 4, %s17
        %p456 = scmp.lt.s32.totalorder %s455, 11
        %s457 = scalar_select %p456, %s455, 11
        %s458 = smul.addr %s457, 8
        %s459 = scalar_lea.vmem %s5, %s458
      $region52: #{static_unconditional_gan_forward.14} parent=47 // pred_fallthru
        _
    $region48: #{static_unconditional_gan_forward.14} parent=5 // pred_fallthru
      _
  $region6: #{static_unconditional_gan_forward.14} parent=0 // loop_footer
    %s15 = sadd.s32 1, %s11
  $region7: #{static_unconditional_gan_forward.14} parent=0 // loop_footer_branch
    %10 = sbr.rel target = $region3
  $region8: #{static_unconditional_gan_forward.14} parent=0 // loop_exit
    _

// kernel: static_unconditional_gan_forward.15
$region0: #{static_unconditional_gan_forward.15}
  #allocation0 [shape = 'u32[]', space=smem, size = 0x4, offset = 0x4, fixed_abs, tag = 'smem constant byte address 0x4 - core index']
  #allocation1 [shape = 'u32[144,128]{1,0:T(1,128)}', space=vmem, size = 0x12000, scoped, tag = 'internal scratch']
  %s0 = inlined_call_operand.vmem [shape: bf16[6,256], index: 0, kind: input, shape index: {}]
  %s1 = inlined_call_operand.vmem [shape: bf16[256,128], index: 1, kind: input, shape index: {}]
  %s2 = inlined_call_operand.vmem [shape: f32[1,128], index: 2, kind: input, shape index: {}]
  %s3 = inlined_call_operand.vmem [shape: f32[6,128], index: 3, kind: output, shape index: {}]
  %s4 = sld [smem:[#allocation0]]
  $region22: #{static_unconditional_gan_forward.15} parent=0
    _
  %s6 = ssub.s32 1, %s4
  %s7 = scalar_select 0, %s6, %s4
  // Predicated region
  $region2: #{static_unconditional_gan_forward.15} parent=0 // pred_check
    _
  $region3: #{static_unconditional_gan_forward.15} parent=0 // pred_check_branch
    %9 = sbr.rel (0) target = $region5
  $region4: #{static_unconditional_gan_forward.15} parent=0 // pred_region
    _
  $region5: #{static_unconditional_gan_forward.15} parent=0 // pred_fallthru
    _
  // Predicated region
  $region6: #{static_unconditional_gan_forward.15} parent=0 // pred_check
    _
  $region7: #{static_unconditional_gan_forward.15} parent=0 // pred_check_branch
    %11 = sbr.rel (0) target = $region9
  $region8: #{static_unconditional_gan_forward.15} parent=0 // pred_region
    _
  $region9: #{static_unconditional_gan_forward.15} parent=0 // pred_fallthru
    _
  // Predicated region
  $region10: #{static_unconditional_gan_forward.15} parent=0 // pred_check
    _
  $region11: #{static_unconditional_gan_forward.15} parent=0 // pred_check_branch
    %13 = sbr.rel (0) target = $region13
  $region12: #{static_unconditional_gan_forward.15} parent=0 // pred_region
    _
  $region13: #{static_unconditional_gan_forward.15} parent=0 // pred_fallthru
    _
  %v15 = vld [vmem:[%s0] sm:$0x77]
  %v16 = vld [vmem:[%s1] sm:$0xf]
  %v17 = vld [vmem:[%s1 + $0x4] sm:$0xf]
  %v18 = vld [vmem:[%s1 + $0x8] sm:$0xf]
  %v19 = vld [vmem:[%s1 + $0xc] sm:$0xf]
  %v20 = vld [vmem:[%s1 + $0x10] sm:$0xf]
  %v21 = vld [vmem:[%s1 + $0x14] sm:$0xf]
  %v22 = vld [vmem:[%s1 + $0x18] sm:$0xf]
  %v23 = vld [vmem:[%s1 + $0x1c] sm:$0xf]
  %v24 = vld [vmem:[%s1 + $0x20] sm:$0xf]
  %v25 = vld [vmem:[%s1 + $0x24] sm:$0xf]
  %v26 = vld [vmem:[%s1 + $0x28] sm:$0xf]
  %v27 = vld [vmem:[%s1 + $0x2c] sm:$0xf]
  %v28 = vld [vmem:[%s1 + $0x30] sm:$0xf]
  %v29 = vld [vmem:[%s1 + $0x34] sm:$0xf]
  %v30 = vld [vmem:[%s1 + $0x38] sm:$0xf]
  %v31 = vld [vmem:[%s1 + $0x3c] sm:$0xf]
  %v32 = vld [vmem:[%s1 + $0x40] sm:$0xf]
  %v33 = vld [vmem:[%s1 + $0x44] sm:$0xf]
  %v34 = vld [vmem:[%s1 + $0x48] sm:$0xf]
  %v35 = vld [vmem:[%s1 + $0x4c] sm:$0xf]
  %v36 = vld [vmem:[%s1 + $0x50] sm:$0xf]
  %v37 = vld [vmem:[%s1 + $0x54] sm:$0xf]
  %v38 = vld [vmem:[%s1 + $0x58] sm:$0xf]
  %v39 = vld [vmem:[%s1 + $0x5c] sm:$0xf]
  %v40 = vld [vmem:[%s1 + $0x60] sm:$0xf]
  %v41 = vld [vmem:[%s1 + $0x64] sm:$0xf]
  %v42 = vld [vmem:[%s1 + $0x68] sm:$0xf]
  %v43 = vld [vmem:[%s1 + $0x6c] sm:$0xf]
  %v44 = vld [vmem:[%s1 + $0x70] sm:$0xf]
  %v45 = vld [vmem:[%s1 + $0x74] sm:$0xf]
  %v46 = vld [vmem:[%s1 + $0x78] sm:$0xf]
  %v47 = vld [vmem:[%s1 + $0x7c] sm:$0xf]
  %v48 = vld [vmem:[%s2] sm:$0x1]
  %v50 = vlaneseq
  %v51 = vshrl.u32 %v50, 7
  %v52 = vsub.s32 0, %v51
  %v53 = vrot.slane %v48, %v52
  %v56 = vunpack.c.l.b16 %v15
  %v57 = vunpack.c.h.b16 %v15
  %v58 = vpack.c.b16 %v56, %v56
  %v59 = vpack.c.b16 %v57, %v57
  %v94 = vunpack.c.l.b16 %v16
  %v95 = vunpack.c.l.b16 %v17
  %v96 = vunpack.c.l.b16 %v18
  %v97 = vunpack.c.l.b16 %v19
  %v98 = vunpack.c.l.b16 %v20
  %v99 = vunpack.c.l.b16 %v21
  %v100 = vunpack.c.l.b16 %v22
  %v101 = vunpack.c.l.b16 %v23
  %v102 = vunpack.c.l.b16 %v24
  %v103 = vunpack.c.l.b16 %v25
  %v104 = vunpack.c.l.b16 %v26
  %v105 = vunpack.c.l.b16 %v27
  %v106 = vunpack.c.l.b16 %v28
  %v107 = vunpack.c.l.b16 %v29
  %v108 = vunpack.c.l.b16 %v30
  %v109 = vunpack.c.l.b16 %v31
  %v110 = vunpack.c.l.b16 %v32
  %v111 = vunpack.c.l.b16 %v33
  %v112 = vunpack.c.l.b16 %v34
  %v113 = vunpack.c.l.b16 %v35
  %v114 = vunpack.c.l.b16 %v36
  %v115 = vunpack.c.l.b16 %v37
  %v116 = vunpack.c.l.b16 %v38
  %v117 = vunpack.c.l.b16 %v39
  %v118 = vunpack.c.l.b16 %v40
  %v119 = vunpack.c.l.b16 %v41
  %v120 = vunpack.c.l.b16 %v42
  %v121 = vunpack.c.l.b16 %v43
  %v122 = vunpack.c.l.b16 %v44
  %v123 = vunpack.c.l.b16 %v45
  %v124 = vunpack.c.l.b16 %v46
  %v125 = vunpack.c.l.b16 %v47
  %v126 = vpack.c.b16 %v95, %v94
  %v127 = vpack.c.b16 %v97, %v96
  %v128 = vpack.c.b16 %v99, %v98
  %v129 = vpack.c.b16 %v101, %v100
  %v130 = vpack.c.b16 %v103, %v102
  %v131 = vpack.c.b16 %v105, %v104
  %v132 = vpack.c.b16 %v107, %v106
  %v133 = vpack.c.b16 %v109, %v108
  %v134 = vpack.c.b16 %v111, %v110
  %v135 = vpack.c.b16 %v113, %v112
  %v136 = vpack.c.b16 %v115, %v114
  %v137 = vpack.c.b16 %v117, %v116
  %v138 = vpack.c.b16 %v119, %v118
  %v139 = vpack.c.b16 %v121, %v120
  %v140 = vpack.c.b16 %v123, %v122
  %v141 = vpack.c.b16 %v125, %v124
  %158 = vmatprep.subr.bf16.mxu0 0
  %159 = vmatpush1.bf16.msra.mxu0 %v126
  %160 = vmatprep.subr.bf16.mxu0 0
  %161 = vmatpush1.bf16.msra.mxu0 %v127
  %162 = vmatprep.subr.bf16.mxu0 0
  %163 = vmatpush1.bf16.msra.mxu0 %v128
  %164 = vmatprep.subr.bf16.mxu0 0
  %165 = vmatpush1.bf16.msra.mxu0 %v129
  %166 = vmatprep.subr.bf16.mxu0 0
  %167 = vmatpush1.bf16.msra.mxu0 %v130
  %168 = vmatprep.subr.bf16.mxu0 0
  %169 = vmatpush1.bf16.msra.mxu0 %v131
  %170 = vmatprep.subr.bf16.mxu0 0
  %171 = vmatpush1.bf16.msra.mxu0 %v132
  %172 = vmatprep.subr.bf16.mxu0 0
  %173 = vmatpush1.bf16.msra.mxu0 %v133
  %174 = vmatprep.subr.bf16.mxu0 0
  %175 = vmatpush1.bf16.msra.mxu0 %v134
  %176 = vmatprep.subr.bf16.mxu0 0
  %177 = vmatpush1.bf16.msra.mxu0 %v135
  %178 = vmatprep.subr.bf16.mxu0 0
  %179 = vmatpush1.bf16.msra.mxu0 %v136
  %180 = vmatprep.subr.bf16.mxu0 0
  %181 = vmatpush1.bf16.msra.mxu0 %v137
  %182 = vmatprep.subr.bf16.mxu0 0
  %183 = vmatpush1.bf16.msra.mxu0 %v138
  %184 = vmatprep.subr.bf16.mxu0 0
  %185 = vmatpush1.bf16.msra.mxu0 %v139
  %186 = vmatprep.subr.bf16.mxu0 0
  %187 = vmatpush1.bf16.msra.mxu0 %v140
  %188 = vmatprep.subr.bf16.mxu0 0
  %189 = vmatpush1.bf16.msra.mxu0 %v141
  %190 = vmatprep.mubr.bf16.mxu0 %v59
  %191 = vmatmul.mubr.bf16.gmra.mrb[0].mxu0 %v58
  %v192 = vpop.f32.mrb[0].mxu0
  %v193 = vadd.f32 %v53, %v192
  %v194 = vpop.f32.mrb[0].mxu0
  %v195 = vpop.f32.mrb[0].mxu0
  %v196 = vpop.f32.mrb[0].mxu0
  %197 = vdwg.mxu0
  %198 = vst [vmem:[%s3] sm:$0x3f] %v193
  // Predicated region
  $region14: #{static_unconditional_gan_forward.15} parent=0 // pred_check
    _
  $region15: #{static_unconditional_gan_forward.15} parent=0 // pred_check_branch
    %200 = sbr.rel (0) target = $region17
  $region16: #{static_unconditional_gan_forward.15} parent=0 // pred_region
    _
  $region17: #{static_unconditional_gan_forward.15} parent=0 // pred_fallthru
    _
  // Predicated region
  $region18: #{static_unconditional_gan_forward.15} parent=0 // pred_check
    _
  $region19: #{static_unconditional_gan_forward.15} parent=0 // pred_check_branch
    %202 = sbr.rel (0) target = $region21
  $region20: #{static_unconditional_gan_forward.15} parent=0 // pred_region
    _
  $region21: #{static_unconditional_gan_forward.15} parent=0 // pred_fallthru
    _

</llo_original>
